<compile_context>
chip_gen: v7x
topology: tpu7x:2x2x1
jax: 0.10.0
libtpu: 0.0.40
codegen_flags: <defaults>
</compile_context>

<pallas_src>
import math

import jax
import jax.numpy as jnp
from jax.experimental import pallas as pl
from jax.experimental.pallas import tpu as pltpu

# ---- constants from the reference module ------------------------------------
BITNUM_SIG = 5
POINTNUMS = 2 ** BITNUM_SIG            # 32
BITNUM_TANH = 5
POINTNUMT = 2 ** (BITNUM_TANH - 1)     # 16
MAX_CONDUCTANCE = 50.0
NOISE_STD = 2.6
NTHRESH = POINTNUMS - 1                # 31 thresholds actually used by the ADC

INPUT_SIZE = 40
HIDDEN_SIZE = 32
NUM_CLASS = 12
LSTM_WANDBIAS_MAX = 2.0
G_RATIO_LSTM = MAX_CONDUCTANCE / LSTM_WANDBIAS_MAX   # 25.0

OUT_PAD = 128                          # lane-dense classifier output width
SIG_SCALE = 1.0 / (POINTNUMS + 2)      # 1/34
TANH_SCALE = 2.0 / (POINTNUMS + 2)     # 2/34


# ---- ramp generation (glue; tiny 1-D math, stays in plain JAX) ----------------
def _ramp_from_v(v, dg):
    dv = v[1:] - v[:-1]                                   # (32,)
    num = jnp.round(dv, decimals=3)
    den = jnp.min(num)
    cell = num / den
    g = (MAX_CONDUCTANCE / jnp.max(cell)) * cell
    dv_act = (g + dg) * (jnp.max(dv) / 150.0)
    middle = dv_act.shape[0] // 2
    v0 = -jnp.sum(dv_act[:middle])
    vact = v0 + jnp.concatenate([jnp.zeros((1,), v.dtype), jnp.cumsum(dv_act)])
    return vact[:NTHRESH].astype(jnp.float32)             # only first 31 used


def ramp_sigmoid_thresholds(dg_s):
    t = jnp.arange(1, POINTNUMS + 2, dtype=jnp.float32) / (POINTNUMS + 2)
    v = jnp.log(t / (1.0 - t))
    return _ramp_from_v(v, dg_s)


def ramp_tanh_thresholds(dg_t):
    t = jnp.arange(-POINTNUMT, POINTNUMT + 1, dtype=jnp.float32) / (POINTNUMT + 1)
    v = 0.5 * jnp.log((1.0 + t) / (1.0 - t))
    return _ramp_from_v(v, dg_t)


# ---- Pallas kernel: LSTM recurrence + vectorized ADC + classifier -------------
def lstm_adc_kernel(x_ref, w_ref, u_ref, wpost_ref, bpost_ref,
                    thr_ref, scale_ref, off_ref, out_ref):
    TB, _ = x_ref.shape
    B = out_ref.shape[0]              # padded batch (multiple of 8)
    T = TB // B
    HS = HIDDEN_SIZE

    # One big input projection (replaces T tiny matmuls on the serial path).
    xw = jnp.dot(x_ref[...], w_ref[...],
                 preferred_element_type=jnp.float32)      # (T*B, 4*HS)

    # Hoist loop-invariant loads out of the recurrence.
    u = u_ref[...]                                        # (HS, 4*HS)
    scale = scale_ref[...]                                # (1, 4*HS)
    off = off_ref[...]                                    # (1, 4*HS)
    thr_rows = [thr_ref[i, :] for i in range(NTHRESH)]    # 31 x (4*HS,)

    h = jnp.zeros((B, HS), jnp.float32)
    c = jnp.zeros((B, HS), jnp.float32)

    # Fully unrolled recurrence (T is small & static).
    for t in range(T):
        gates = xw[t * B:(t + 1) * B, :] + jnp.dot(
            h, u, preferred_element_type=jnp.float32)     # (B, 4*HS)

        # Vectorized ADC over the whole gate slab: one compare+add per threshold.
        counter = jnp.zeros_like(gates)
        for r in thr_rows:
            counter = counter + (gates >= r).astype(jnp.float32)
        acts = counter * scale + off                      # per-column scale/offset

        i_t = acts[:, 0 * HS:1 * HS]
        f_t = acts[:, 1 * HS:2 * HS]
        g_t = acts[:, 2 * HS:3 * HS]
        o_t = acts[:, 3 * HS:4 * HS]

        c = f_t * c + i_t * g_t
        h = o_t * jnp.tanh(c)          # exact tanh, as in the PyTorch reference

    # postlayer: lane-dense padded logits = h @ W_post_pad + b_post_pad
    out_ref[...] = (jnp.dot(h, wpost_ref[...], preferred_element_type=jnp.float32)
                    + bpost_ref[...])


def lstm_classification_adc_noise(x, W, U, Wpost_T, bpost, sig_thr, tanh_thr):
    """x: (B, T, F) float32 -> logits (B, num_class) float32."""
    B, T, F = x.shape
    HS = HIDDEN_SIZE

    # Pad batch to a multiple of 8 (f32 sublane count) so vregs/MXU rows are full.
    B_pad = max(8, ((B + 7) // 8) * 8)
    x_pad = jnp.zeros((B_pad, T, F), jnp.float32).at[:B].set(x.astype(jnp.float32))
    # seq-major, flattened: (T, B_pad, F) -> (T*B_pad, F); rows t*B_pad:(t+1)*B_pad
    # are the timestep-t batch slab (sublane-aligned slices).
    x_flat = jnp.transpose(x_pad, (1, 0, 2)).reshape(T * B_pad, F)

    # Lane-dense classifier weights: pad width NUM_CLASS -> 128.
    wpost_pad = jnp.zeros((HS, OUT_PAD), jnp.float32).at[:, :NUM_CLASS].set(Wpost_T)
    bpost_pad = jnp.zeros((1, OUT_PAD), jnp.float32).at[:, :NUM_CLASS].set(
        bpost.reshape(1, NUM_CLASS))

    # Per-gate-column ADC threshold table + scale/offset rows. Gate layout along
    # the 4*HS lanes is [i | f | g | o]: sigmoid thresholds for i/f/o, tanh for g.
    sig_col = jnp.tile(sig_thr[:, None], (1, HS))         # (31, HS)
    tanh_col = jnp.tile(tanh_thr[:, None], (1, HS))       # (31, HS)
    thr_table = jnp.concatenate([sig_col, sig_col, tanh_col, sig_col], axis=1)

    ones = jnp.ones((1, HS), jnp.float32)
    scale_row = jnp.concatenate(
        [ones * SIG_SCALE, ones * SIG_SCALE, ones * TANH_SCALE, ones * SIG_SCALE],
        axis=1)                                           # (1, 4*HS)
    off_row = jnp.concatenate(
        [ones * 0.0, ones * 0.0, ones * (-1.0), ones * 0.0], axis=1)

    vmem = pl.BlockSpec(memory_space=pltpu.MemorySpace.VMEM)
    out_padded = pl.pallas_call(
        lstm_adc_kernel,
        out_shape=jax.ShapeDtypeStruct((B_pad, OUT_PAD), jnp.float32),
        in_specs=[vmem] * 8,
        out_specs=vmem,
    )(x_flat, W.astype(jnp.float32), U.astype(jnp.float32),
      wpost_pad, bpost_pad, thr_table, scale_row, off_row)

    return out_padded[:B, :NUM_CLASS]


# ---- deterministic parameter construction (mirrors module __init__/forward) ---
def build_params(key):
    kw, ku, kb, kdelg, kpw, kpb = jax.random.split(key, 6)
    stdv = 1.0 / math.sqrt(HIDDEN_SIZE)
    W_mu = jax.random.uniform(kw, (INPUT_SIZE, 4 * HIDDEN_SIZE),
                              minval=-stdv, maxval=stdv, dtype=jnp.float32)
    U_mu = jax.random.uniform(ku, (HIDDEN_SIZE, 4 * HIDDEN_SIZE),
                              minval=-stdv, maxval=stdv, dtype=jnp.float32)
    bias_mu = jax.random.uniform(kb, (4 * HIDDEN_SIZE,),
                                 minval=-stdv, maxval=stdv, dtype=jnp.float32)

    # clamp |w| >= 2 -> 2*sign(w) (no-op at this init scale, kept for fidelity)
    def clamp(w):
        return jnp.where(jnp.abs(w) >= LSTM_WANDBIAS_MAX,
                         LSTM_WANDBIAS_MAX * jnp.sign(w), w)
    W_mu, U_mu, bias_mu = clamp(W_mu), clamp(U_mu), clamp(bias_mu)

    # analog conductance noise added to weights (deterministic here)
    delg = jax.random.normal(kdelg, (73, 128), jnp.float32) * NOISE_STD
    W = delg[:INPUT_SIZE, :] / G_RATIO_LSTM + W_mu
    U = delg[INPUT_SIZE:INPUT_SIZE + HIDDEN_SIZE, :] / G_RATIO_LSTM + U_mu
    # self.bias is computed in the reference forward but never added to the gates.

    # postlayer = nn.Linear(hidden_size, num_class)
    lin_std = 1.0 / math.sqrt(HIDDEN_SIZE)
    W_post = jax.random.uniform(kpw, (NUM_CLASS, HIDDEN_SIZE),
                                minval=-lin_std, maxval=lin_std, dtype=jnp.float32)
    b_post = jax.random.uniform(kpb, (NUM_CLASS,),
                                minval=-lin_std, maxval=lin_std, dtype=jnp.float32)
    return W, U, W_post.T, b_post


if __name__ == "__main__":
    key = jax.random.PRNGKey(0)
    k_x, k_params, k_dgs, k_dgt = jax.random.split(key, 4)

    B, T = 2, 8
    x = jax.random.normal(k_x, (B, T, INPUT_SIZE), jnp.float32)

    # Δg_s / Δg_t: per-ramp-step conductance deviations (same length as Delta_V = 32)
    dg_s = jax.random.normal(k_dgs, (POINTNUMS,), jnp.float32) * NOISE_STD
    dg_t = jax.random.normal(k_dgt, (POINTNUMS,), jnp.float32) * NOISE_STD

    sig_thr = ramp_sigmoid_thresholds(dg_s)     # (31,)
    tanh_thr = ramp_tanh_thresholds(dg_t)       # (31,)

    W, U, Wpost_T, bpost = build_params(k_params)

    logits = lstm_classification_adc_noise(x, W, U, Wpost_T, bpost, sig_thr, tanh_thr)
    logits = jax.block_until_ready(logits)
    assert logits.shape == (B, NUM_CLASS) and logits.dtype == jnp.float32
    print("KERNEL_OK")
</pallas_src>

<mosaic_0001>
module attributes {stable_mosaic.version = 11 : i64} {
  func.func @lstm_adc_kernel(%arg0: memref<64x40xf32, #tpu.memory_space<vmem>>, %arg1: memref<40x128xf32, #tpu.memory_space<vmem>>, %arg2: memref<32x128xf32, #tpu.memory_space<vmem>>, %arg3: memref<32x128xf32, #tpu.memory_space<vmem>>, %arg4: memref<1x128xf32, #tpu.memory_space<vmem>>, %arg5: memref<31x128xf32, #tpu.memory_space<vmem>>, %arg6: memref<1x128xf32, #tpu.memory_space<vmem>>, %arg7: memref<1x128xf32, #tpu.memory_space<vmem>>, %arg8: memref<8x128xf32, #tpu.memory_space<vmem>>) attributes {dimension_semantics = [], scalar_prefetch = 0 : i64, scratch_operands = 0 : i64, tpu.core_type = #tpu.core_type<tc>} {
    %c0 = arith.constant 0 : index
    %c0_0 = arith.constant 0 : index
    %0 = vector.load %arg0[%c0, %c0_0] : memref<64x40xf32, #tpu.memory_space<vmem>>, vector<64x40xf32>
    %c0_1 = arith.constant 0 : index
    %c0_2 = arith.constant 0 : index
    %1 = vector.load %arg1[%c0_1, %c0_2] : memref<40x128xf32, #tpu.memory_space<vmem>>, vector<40x128xf32>
    %cst = arith.constant dense<0.000000e+00> : vector<64x128xf32>
    %2 = tpu.matmul %0, %1, %cst {dimension_numbers = #tpu.dot_dimension_numbers<[1], [0], [0], [1], [0, 0, 1, 1], [], []>} : vector<64x40xf32>, vector<40x128xf32>, vector<64x128xf32> -> vector<64x128xf32>
    %c0_3 = arith.constant 0 : index
    %c0_4 = arith.constant 0 : index
    %3 = vector.load %arg2[%c0_3, %c0_4] : memref<32x128xf32, #tpu.memory_space<vmem>>, vector<32x128xf32>
    %c0_5 = arith.constant 0 : index
    %c0_6 = arith.constant 0 : index
    %4 = vector.load %arg6[%c0_5, %c0_6] : memref<1x128xf32, #tpu.memory_space<vmem>>, vector<1x128xf32>
    %c0_7 = arith.constant 0 : index
    %c0_8 = arith.constant 0 : index
    %5 = vector.load %arg7[%c0_7, %c0_8] : memref<1x128xf32, #tpu.memory_space<vmem>>, vector<1x128xf32>
    %c0_9 = arith.constant 0 : index
    %c0_10 = arith.constant 0 : index
    %6 = vector.load %arg5[%c0_9, %c0_10] : memref<31x128xf32, #tpu.memory_space<vmem>>, vector<1x128xf32>
    %7 = vector.shape_cast %6 : vector<1x128xf32> to vector<128xf32>
    %c1 = arith.constant 1 : index
    %c0_11 = arith.constant 0 : index
    %8 = vector.load %arg5[%c1, %c0_11] : memref<31x128xf32, #tpu.memory_space<vmem>>, vector<1x128xf32>
    %9 = vector.shape_cast %8 : vector<1x128xf32> to vector<128xf32>
    %c2 = arith.constant 2 : index
    %c0_12 = arith.constant 0 : index
    %10 = vector.load %arg5[%c2, %c0_12] : memref<31x128xf32, #tpu.memory_space<vmem>>, vector<1x128xf32>
    %11 = vector.shape_cast %10 : vector<1x128xf32> to vector<128xf32>
    %c3 = arith.constant 3 : index
    %c0_13 = arith.constant 0 : index
    %12 = vector.load %arg5[%c3, %c0_13] : memref<31x128xf32, #tpu.memory_space<vmem>>, vector<1x128xf32>
    %13 = vector.shape_cast %12 : vector<1x128xf32> to vector<128xf32>
    %c4 = arith.constant 4 : index
    %c0_14 = arith.constant 0 : index
    %14 = vector.load %arg5[%c4, %c0_14] : memref<31x128xf32, #tpu.memory_space<vmem>>, vector<1x128xf32>
    %15 = vector.shape_cast %14 : vector<1x128xf32> to vector<128xf32>
    %c5 = arith.constant 5 : index
    %c0_15 = arith.constant 0 : index
    %16 = vector.load %arg5[%c5, %c0_15] : memref<31x128xf32, #tpu.memory_space<vmem>>, vector<1x128xf32>
    %17 = vector.shape_cast %16 : vector<1x128xf32> to vector<128xf32>
    %c6 = arith.constant 6 : index
    %c0_16 = arith.constant 0 : index
    %18 = vector.load %arg5[%c6, %c0_16] : memref<31x128xf32, #tpu.memory_space<vmem>>, vector<1x128xf32>
    %19 = vector.shape_cast %18 : vector<1x128xf32> to vector<128xf32>
    %c7 = arith.constant 7 : index
    %c0_17 = arith.constant 0 : index
    %20 = vector.load %arg5[%c7, %c0_17] : memref<31x128xf32, #tpu.memory_space<vmem>>, vector<1x128xf32>
    %21 = vector.shape_cast %20 : vector<1x128xf32> to vector<128xf32>
    %c8 = arith.constant 8 : index
    %c0_18 = arith.constant 0 : index
    %22 = vector.load %arg5[%c8, %c0_18] : memref<31x128xf32, #tpu.memory_space<vmem>>, vector<1x128xf32>
    %23 = vector.shape_cast %22 : vector<1x128xf32> to vector<128xf32>
    %c9 = arith.constant 9 : index
    %c0_19 = arith.constant 0 : index
    %24 = vector.load %arg5[%c9, %c0_19] : memref<31x128xf32, #tpu.memory_space<vmem>>, vector<1x128xf32>
    %25 = vector.shape_cast %24 : vector<1x128xf32> to vector<128xf32>
    %c10 = arith.constant 10 : index
    %c0_20 = arith.constant 0 : index
    %26 = vector.load %arg5[%c10, %c0_20] : memref<31x128xf32, #tpu.memory_space<vmem>>, vector<1x128xf32>
    %27 = vector.shape_cast %26 : vector<1x128xf32> to vector<128xf32>
    %c11 = arith.constant 11 : index
    %c0_21 = arith.constant 0 : index
    %28 = vector.load %arg5[%c11, %c0_21] : memref<31x128xf32, #tpu.memory_space<vmem>>, vector<1x128xf32>
    %29 = vector.shape_cast %28 : vector<1x128xf32> to vector<128xf32>
    %c12 = arith.constant 12 : index
    %c0_22 = arith.constant 0 : index
    %30 = vector.load %arg5[%c12, %c0_22] : memref<31x128xf32, #tpu.memory_space<vmem>>, vector<1x128xf32>
    %31 = vector.shape_cast %30 : vector<1x128xf32> to vector<128xf32>
    %c13 = arith.constant 13 : index
    %c0_23 = arith.constant 0 : index
    %32 = vector.load %arg5[%c13, %c0_23] : memref<31x128xf32, #tpu.memory_space<vmem>>, vector<1x128xf32>
    %33 = vector.shape_cast %32 : vector<1x128xf32> to vector<128xf32>
    %c14 = arith.constant 14 : index
    %c0_24 = arith.constant 0 : index
    %34 = vector.load %arg5[%c14, %c0_24] : memref<31x128xf32, #tpu.memory_space<vmem>>, vector<1x128xf32>
    %35 = vector.shape_cast %34 : vector<1x128xf32> to vector<128xf32>
    %c15 = arith.constant 15 : index
    %c0_25 = arith.constant 0 : index
    %36 = vector.load %arg5[%c15, %c0_25] : memref<31x128xf32, #tpu.memory_space<vmem>>, vector<1x128xf32>
    %37 = vector.shape_cast %36 : vector<1x128xf32> to vector<128xf32>
    %c16 = arith.constant 16 : index
    %c0_26 = arith.constant 0 : index
    %38 = vector.load %arg5[%c16, %c0_26] : memref<31x128xf32, #tpu.memory_space<vmem>>, vector<1x128xf32>
    %39 = vector.shape_cast %38 : vector<1x128xf32> to vector<128xf32>
    %c17 = arith.constant 17 : index
    %c0_27 = arith.constant 0 : index
    %40 = vector.load %arg5[%c17, %c0_27] : memref<31x128xf32, #tpu.memory_space<vmem>>, vector<1x128xf32>
    %41 = vector.shape_cast %40 : vector<1x128xf32> to vector<128xf32>
    %c18 = arith.constant 18 : index
    %c0_28 = arith.constant 0 : index
    %42 = vector.load %arg5[%c18, %c0_28] : memref<31x128xf32, #tpu.memory_space<vmem>>, vector<1x128xf32>
    %43 = vector.shape_cast %42 : vector<1x128xf32> to vector<128xf32>
    %c19 = arith.constant 19 : index
    %c0_29 = arith.constant 0 : index
    %44 = vector.load %arg5[%c19, %c0_29] : memref<31x128xf32, #tpu.memory_space<vmem>>, vector<1x128xf32>
    %45 = vector.shape_cast %44 : vector<1x128xf32> to vector<128xf32>
    %c20 = arith.constant 20 : index
    %c0_30 = arith.constant 0 : index
    %46 = vector.load %arg5[%c20, %c0_30] : memref<31x128xf32, #tpu.memory_space<vmem>>, vector<1x128xf32>
    %47 = vector.shape_cast %46 : vector<1x128xf32> to vector<128xf32>
    %c21 = arith.constant 21 : index
    %c0_31 = arith.constant 0 : index
    %48 = vector.load %arg5[%c21, %c0_31] : memref<31x128xf32, #tpu.memory_space<vmem>>, vector<1x128xf32>
    %49 = vector.shape_cast %48 : vector<1x128xf32> to vector<128xf32>
    %c22 = arith.constant 22 : index
    %c0_32 = arith.constant 0 : index
    %50 = vector.load %arg5[%c22, %c0_32] : memref<31x128xf32, #tpu.memory_space<vmem>>, vector<1x128xf32>
    %51 = vector.shape_cast %50 : vector<1x128xf32> to vector<128xf32>
    %c23 = arith.constant 23 : index
    %c0_33 = arith.constant 0 : index
    %52 = vector.load %arg5[%c23, %c0_33] : memref<31x128xf32, #tpu.memory_space<vmem>>, vector<1x128xf32>
    %53 = vector.shape_cast %52 : vector<1x128xf32> to vector<128xf32>
    %c24 = arith.constant 24 : index
    %c0_34 = arith.constant 0 : index
    %54 = vector.load %arg5[%c24, %c0_34] : memref<31x128xf32, #tpu.memory_space<vmem>>, vector<1x128xf32>
    %55 = vector.shape_cast %54 : vector<1x128xf32> to vector<128xf32>
    %c25 = arith.constant 25 : index
    %c0_35 = arith.constant 0 : index
    %56 = vector.load %arg5[%c25, %c0_35] : memref<31x128xf32, #tpu.memory_space<vmem>>, vector<1x128xf32>
    %57 = vector.shape_cast %56 : vector<1x128xf32> to vector<128xf32>
    %c26 = arith.constant 26 : index
    %c0_36 = arith.constant 0 : index
    %58 = vector.load %arg5[%c26, %c0_36] : memref<31x128xf32, #tpu.memory_space<vmem>>, vector<1x128xf32>
    %59 = vector.shape_cast %58 : vector<1x128xf32> to vector<128xf32>
    %c27 = arith.constant 27 : index
    %c0_37 = arith.constant 0 : index
    %60 = vector.load %arg5[%c27, %c0_37] : memref<31x128xf32, #tpu.memory_space<vmem>>, vector<1x128xf32>
    %61 = vector.shape_cast %60 : vector<1x128xf32> to vector<128xf32>
    %c28 = arith.constant 28 : index
    %c0_38 = arith.constant 0 : index
    %62 = vector.load %arg5[%c28, %c0_38] : memref<31x128xf32, #tpu.memory_space<vmem>>, vector<1x128xf32>
    %63 = vector.shape_cast %62 : vector<1x128xf32> to vector<128xf32>
    %c29 = arith.constant 29 : index
    %c0_39 = arith.constant 0 : index
    %64 = vector.load %arg5[%c29, %c0_39] : memref<31x128xf32, #tpu.memory_space<vmem>>, vector<1x128xf32>
    %65 = vector.shape_cast %64 : vector<1x128xf32> to vector<128xf32>
    %c30 = arith.constant 30 : index
    %c0_40 = arith.constant 0 : index
    %66 = vector.load %arg5[%c30, %c0_40] : memref<31x128xf32, #tpu.memory_space<vmem>>, vector<1x128xf32>
    %67 = vector.shape_cast %66 : vector<1x128xf32> to vector<128xf32>
    %cst_41 = arith.constant 0.000000e+00 : f32
    %68 = vector.broadcast %cst_41 : f32 to vector<8x32xf32>
    %cst_42 = arith.constant 0.000000e+00 : f32
    %69 = vector.broadcast %cst_42 : f32 to vector<8x32xf32>
    %70 = vector.extract_strided_slice %2 {offsets = [0, 0], sizes = [8, 128], strides = [1, 1]} : vector<64x128xf32> to vector<8x128xf32>
    %cst_43 = arith.constant dense<0.000000e+00> : vector<8x128xf32>
    %71 = tpu.matmul %68, %3, %cst_43 {dimension_numbers = #tpu.dot_dimension_numbers<[1], [0], [0], [1], [0, 0, 1, 1], [], []>} : vector<8x32xf32>, vector<32x128xf32>, vector<8x128xf32> -> vector<8x128xf32>
    %72 = arith.addf %70, %71 : vector<8x128xf32>
    %cst_44 = arith.constant 0.000000e+00 : f32
    %73 = vector.broadcast %cst_44 : f32 to vector<8x128xf32>
    %74 = vector.shape_cast %7 : vector<128xf32> to vector<1x128xf32>
    %75 = vector.broadcast %74 : vector<1x128xf32> to vector<8x128xf32>
    %76 = arith.cmpf oge, %72, %75 : vector<8x128xf32>
    %77 = arith.extui %76 : vector<8x128xi1> to vector<8x128xi32>
    %78 = arith.sitofp %77 : vector<8x128xi32> to vector<8x128xf32>
    %79 = arith.addf %73, %78 : vector<8x128xf32>
    %80 = vector.shape_cast %9 : vector<128xf32> to vector<1x128xf32>
    %81 = vector.broadcast %80 : vector<1x128xf32> to vector<8x128xf32>
    %82 = arith.cmpf oge, %72, %81 : vector<8x128xf32>
    %83 = arith.extui %82 : vector<8x128xi1> to vector<8x128xi32>
    %84 = arith.sitofp %83 : vector<8x128xi32> to vector<8x128xf32>
    %85 = arith.addf %79, %84 : vector<8x128xf32>
    %86 = vector.shape_cast %11 : vector<128xf32> to vector<1x128xf32>
    %87 = vector.broadcast %86 : vector<1x128xf32> to vector<8x128xf32>
    %88 = arith.cmpf oge, %72, %87 : vector<8x128xf32>
    %89 = arith.extui %88 : vector<8x128xi1> to vector<8x128xi32>
    %90 = arith.sitofp %89 : vector<8x128xi32> to vector<8x128xf32>
    %91 = arith.addf %85, %90 : vector<8x128xf32>
    %92 = vector.shape_cast %13 : vector<128xf32> to vector<1x128xf32>
    %93 = vector.broadcast %92 : vector<1x128xf32> to vector<8x128xf32>
    %94 = arith.cmpf oge, %72, %93 : vector<8x128xf32>
    %95 = arith.extui %94 : vector<8x128xi1> to vector<8x128xi32>
    %96 = arith.sitofp %95 : vector<8x128xi32> to vector<8x128xf32>
    %97 = arith.addf %91, %96 : vector<8x128xf32>
    %98 = vector.shape_cast %15 : vector<128xf32> to vector<1x128xf32>
    %99 = vector.broadcast %98 : vector<1x128xf32> to vector<8x128xf32>
    %100 = arith.cmpf oge, %72, %99 : vector<8x128xf32>
    %101 = arith.extui %100 : vector<8x128xi1> to vector<8x128xi32>
    %102 = arith.sitofp %101 : vector<8x128xi32> to vector<8x128xf32>
    %103 = arith.addf %97, %102 : vector<8x128xf32>
    %104 = vector.shape_cast %17 : vector<128xf32> to vector<1x128xf32>
    %105 = vector.broadcast %104 : vector<1x128xf32> to vector<8x128xf32>
    %106 = arith.cmpf oge, %72, %105 : vector<8x128xf32>
    %107 = arith.extui %106 : vector<8x128xi1> to vector<8x128xi32>
    %108 = arith.sitofp %107 : vector<8x128xi32> to vector<8x128xf32>
    %109 = arith.addf %103, %108 : vector<8x128xf32>
    %110 = vector.shape_cast %19 : vector<128xf32> to vector<1x128xf32>
    %111 = vector.broadcast %110 : vector<1x128xf32> to vector<8x128xf32>
    %112 = arith.cmpf oge, %72, %111 : vector<8x128xf32>
    %113 = arith.extui %112 : vector<8x128xi1> to vector<8x128xi32>
    %114 = arith.sitofp %113 : vector<8x128xi32> to vector<8x128xf32>
    %115 = arith.addf %109, %114 : vector<8x128xf32>
    %116 = vector.shape_cast %21 : vector<128xf32> to vector<1x128xf32>
    %117 = vector.broadcast %116 : vector<1x128xf32> to vector<8x128xf32>
    %118 = arith.cmpf oge, %72, %117 : vector<8x128xf32>
    %119 = arith.extui %118 : vector<8x128xi1> to vector<8x128xi32>
    %120 = arith.sitofp %119 : vector<8x128xi32> to vector<8x128xf32>
    %121 = arith.addf %115, %120 : vector<8x128xf32>
    %122 = vector.shape_cast %23 : vector<128xf32> to vector<1x128xf32>
    %123 = vector.broadcast %122 : vector<1x128xf32> to vector<8x128xf32>
    %124 = arith.cmpf oge, %72, %123 : vector<8x128xf32>
    %125 = arith.extui %124 : vector<8x128xi1> to vector<8x128xi32>
    %126 = arith.sitofp %125 : vector<8x128xi32> to vector<8x128xf32>
    %127 = arith.addf %121, %126 : vector<8x128xf32>
    %128 = vector.shape_cast %25 : vector<128xf32> to vector<1x128xf32>
    %129 = vector.broadcast %128 : vector<1x128xf32> to vector<8x128xf32>
    %130 = arith.cmpf oge, %72, %129 : vector<8x128xf32>
    %131 = arith.extui %130 : vector<8x128xi1> to vector<8x128xi32>
    %132 = arith.sitofp %131 : vector<8x128xi32> to vector<8x128xf32>
    %133 = arith.addf %127, %132 : vector<8x128xf32>
    %134 = vector.shape_cast %27 : vector<128xf32> to vector<1x128xf32>
    %135 = vector.broadcast %134 : vector<1x128xf32> to vector<8x128xf32>
    %136 = arith.cmpf oge, %72, %135 : vector<8x128xf32>
    %137 = arith.extui %136 : vector<8x128xi1> to vector<8x128xi32>
    %138 = arith.sitofp %137 : vector<8x128xi32> to vector<8x128xf32>
    %139 = arith.addf %133, %138 : vector<8x128xf32>
    %140 = vector.shape_cast %29 : vector<128xf32> to vector<1x128xf32>
    %141 = vector.broadcast %140 : vector<1x128xf32> to vector<8x128xf32>
    %142 = arith.cmpf oge, %72, %141 : vector<8x128xf32>
    %143 = arith.extui %142 : vector<8x128xi1> to vector<8x128xi32>
    %144 = arith.sitofp %143 : vector<8x128xi32> to vector<8x128xf32>
    %145 = arith.addf %139, %144 : vector<8x128xf32>
    %146 = vector.shape_cast %31 : vector<128xf32> to vector<1x128xf32>
    %147 = vector.broadcast %146 : vector<1x128xf32> to vector<8x128xf32>
    %148 = arith.cmpf oge, %72, %147 : vector<8x128xf32>
    %149 = arith.extui %148 : vector<8x128xi1> to vector<8x128xi32>
    %150 = arith.sitofp %149 : vector<8x128xi32> to vector<8x128xf32>
    %151 = arith.addf %145, %150 : vector<8x128xf32>
    %152 = vector.shape_cast %33 : vector<128xf32> to vector<1x128xf32>
    %153 = vector.broadcast %152 : vector<1x128xf32> to vector<8x128xf32>
    %154 = arith.cmpf oge, %72, %153 : vector<8x128xf32>
    %155 = arith.extui %154 : vector<8x128xi1> to vector<8x128xi32>
    %156 = arith.sitofp %155 : vector<8x128xi32> to vector<8x128xf32>
    %157 = arith.addf %151, %156 : vector<8x128xf32>
    %158 = vector.shape_cast %35 : vector<128xf32> to vector<1x128xf32>
    %159 = vector.broadcast %158 : vector<1x128xf32> to vector<8x128xf32>
    %160 = arith.cmpf oge, %72, %159 : vector<8x128xf32>
    %161 = arith.extui %160 : vector<8x128xi1> to vector<8x128xi32>
    %162 = arith.sitofp %161 : vector<8x128xi32> to vector<8x128xf32>
    %163 = arith.addf %157, %162 : vector<8x128xf32>
    %164 = vector.shape_cast %37 : vector<128xf32> to vector<1x128xf32>
    %165 = vector.broadcast %164 : vector<1x128xf32> to vector<8x128xf32>
    %166 = arith.cmpf oge, %72, %165 : vector<8x128xf32>
    %167 = arith.extui %166 : vector<8x128xi1> to vector<8x128xi32>
    %168 = arith.sitofp %167 : vector<8x128xi32> to vector<8x128xf32>
    %169 = arith.addf %163, %168 : vector<8x128xf32>
    %170 = vector.shape_cast %39 : vector<128xf32> to vector<1x128xf32>
    %171 = vector.broadcast %170 : vector<1x128xf32> to vector<8x128xf32>
    %172 = arith.cmpf oge, %72, %171 : vector<8x128xf32>
    %173 = arith.extui %172 : vector<8x128xi1> to vector<8x128xi32>
    %174 = arith.sitofp %173 : vector<8x128xi32> to vector<8x128xf32>
    %175 = arith.addf %169, %174 : vector<8x128xf32>
    %176 = vector.shape_cast %41 : vector<128xf32> to vector<1x128xf32>
    %177 = vector.broadcast %176 : vector<1x128xf32> to vector<8x128xf32>
    %178 = arith.cmpf oge, %72, %177 : vector<8x128xf32>
    %179 = arith.extui %178 : vector<8x128xi1> to vector<8x128xi32>
    %180 = arith.sitofp %179 : vector<8x128xi32> to vector<8x128xf32>
    %181 = arith.addf %175, %180 : vector<8x128xf32>
    %182 = vector.shape_cast %43 : vector<128xf32> to vector<1x128xf32>
    %183 = vector.broadcast %182 : vector<1x128xf32> to vector<8x128xf32>
    %184 = arith.cmpf oge, %72, %183 : vector<8x128xf32>
    %185 = arith.extui %184 : vector<8x128xi1> to vector<8x128xi32>
    %186 = arith.sitofp %185 : vector<8x128xi32> to vector<8x128xf32>
    %187 = arith.addf %181, %186 : vector<8x128xf32>
    %188 = vector.shape_cast %45 : vector<128xf32> to vector<1x128xf32>
    %189 = vector.broadcast %188 : vector<1x128xf32> to vector<8x128xf32>
    %190 = arith.cmpf oge, %72, %189 : vector<8x128xf32>
    %191 = arith.extui %190 : vector<8x128xi1> to vector<8x128xi32>
    %192 = arith.sitofp %191 : vector<8x128xi32> to vector<8x128xf32>
    %193 = arith.addf %187, %192 : vector<8x128xf32>
    %194 = vector.shape_cast %47 : vector<128xf32> to vector<1x128xf32>
    %195 = vector.broadcast %194 : vector<1x128xf32> to vector<8x128xf32>
    %196 = arith.cmpf oge, %72, %195 : vector<8x128xf32>
    %197 = arith.extui %196 : vector<8x128xi1> to vector<8x128xi32>
    %198 = arith.sitofp %197 : vector<8x128xi32> to vector<8x128xf32>
    %199 = arith.addf %193, %198 : vector<8x128xf32>
    %200 = vector.shape_cast %49 : vector<128xf32> to vector<1x128xf32>
    %201 = vector.broadcast %200 : vector<1x128xf32> to vector<8x128xf32>
    %202 = arith.cmpf oge, %72, %201 : vector<8x128xf32>
    %203 = arith.extui %202 : vector<8x128xi1> to vector<8x128xi32>
    %204 = arith.sitofp %203 : vector<8x128xi32> to vector<8x128xf32>
    %205 = arith.addf %199, %204 : vector<8x128xf32>
    %206 = vector.shape_cast %51 : vector<128xf32> to vector<1x128xf32>
    %207 = vector.broadcast %206 : vector<1x128xf32> to vector<8x128xf32>
    %208 = arith.cmpf oge, %72, %207 : vector<8x128xf32>
    %209 = arith.extui %208 : vector<8x128xi1> to vector<8x128xi32>
    %210 = arith.sitofp %209 : vector<8x128xi32> to vector<8x128xf32>
    %211 = arith.addf %205, %210 : vector<8x128xf32>
    %212 = vector.shape_cast %53 : vector<128xf32> to vector<1x128xf32>
    %213 = vector.broadcast %212 : vector<1x128xf32> to vector<8x128xf32>
    %214 = arith.cmpf oge, %72, %213 : vector<8x128xf32>
    %215 = arith.extui %214 : vector<8x128xi1> to vector<8x128xi32>
    %216 = arith.sitofp %215 : vector<8x128xi32> to vector<8x128xf32>
    %217 = arith.addf %211, %216 : vector<8x128xf32>
    %218 = vector.shape_cast %55 : vector<128xf32> to vector<1x128xf32>
    %219 = vector.broadcast %218 : vector<1x128xf32> to vector<8x128xf32>
    %220 = arith.cmpf oge, %72, %219 : vector<8x128xf32>
    %221 = arith.extui %220 : vector<8x128xi1> to vector<8x128xi32>
    %222 = arith.sitofp %221 : vector<8x128xi32> to vector<8x128xf32>
    %223 = arith.addf %217, %222 : vector<8x128xf32>
    %224 = vector.shape_cast %57 : vector<128xf32> to vector<1x128xf32>
    %225 = vector.broadcast %224 : vector<1x128xf32> to vector<8x128xf32>
    %226 = arith.cmpf oge, %72, %225 : vector<8x128xf32>
    %227 = arith.extui %226 : vector<8x128xi1> to vector<8x128xi32>
    %228 = arith.sitofp %227 : vector<8x128xi32> to vector<8x128xf32>
    %229 = arith.addf %223, %228 : vector<8x128xf32>
    %230 = vector.shape_cast %59 : vector<128xf32> to vector<1x128xf32>
    %231 = vector.broadcast %230 : vector<1x128xf32> to vector<8x128xf32>
    %232 = arith.cmpf oge, %72, %231 : vector<8x128xf32>
    %233 = arith.extui %232 : vector<8x128xi1> to vector<8x128xi32>
    %234 = arith.sitofp %233 : vector<8x128xi32> to vector<8x128xf32>
    %235 = arith.addf %229, %234 : vector<8x128xf32>
    %236 = vector.shape_cast %61 : vector<128xf32> to vector<1x128xf32>
    %237 = vector.broadcast %236 : vector<1x128xf32> to vector<8x128xf32>
    %238 = arith.cmpf oge, %72, %237 : vector<8x128xf32>
    %239 = arith.extui %238 : vector<8x128xi1> to vector<8x128xi32>
    %240 = arith.sitofp %239 : vector<8x128xi32> to vector<8x128xf32>
    %241 = arith.addf %235, %240 : vector<8x128xf32>
    %242 = vector.shape_cast %63 : vector<128xf32> to vector<1x128xf32>
    %243 = vector.broadcast %242 : vector<1x128xf32> to vector<8x128xf32>
    %244 = arith.cmpf oge, %72, %243 : vector<8x128xf32>
    %245 = arith.extui %244 : vector<8x128xi1> to vector<8x128xi32>
    %246 = arith.sitofp %245 : vector<8x128xi32> to vector<8x128xf32>
    %247 = arith.addf %241, %246 : vector<8x128xf32>
    %248 = vector.shape_cast %65 : vector<128xf32> to vector<1x128xf32>
    %249 = vector.broadcast %248 : vector<1x128xf32> to vector<8x128xf32>
    %250 = arith.cmpf oge, %72, %249 : vector<8x128xf32>
    %251 = arith.extui %250 : vector<8x128xi1> to vector<8x128xi32>
    %252 = arith.sitofp %251 : vector<8x128xi32> to vector<8x128xf32>
    %253 = arith.addf %247, %252 : vector<8x128xf32>
    %254 = vector.shape_cast %67 : vector<128xf32> to vector<1x128xf32>
    %255 = vector.broadcast %254 : vector<1x128xf32> to vector<8x128xf32>
    %256 = arith.cmpf oge, %72, %255 : vector<8x128xf32>
    %257 = arith.extui %256 : vector<8x128xi1> to vector<8x128xi32>
    %258 = arith.sitofp %257 : vector<8x128xi32> to vector<8x128xf32>
    %259 = arith.addf %253, %258 : vector<8x128xf32>
    %260 = vector.broadcast %4 : vector<1x128xf32> to vector<8x128xf32>
    %261 = arith.mulf %259, %260 : vector<8x128xf32>
    %262 = vector.broadcast %5 : vector<1x128xf32> to vector<8x128xf32>
    %263 = arith.addf %261, %262 : vector<8x128xf32>
    %264 = vector.extract_strided_slice %263 {offsets = [0, 0], sizes = [8, 32], strides = [1, 1]} : vector<8x128xf32> to vector<8x32xf32>
    %265 = vector.extract_strided_slice %263 {offsets = [0, 32], sizes = [8, 32], strides = [1, 1]} : vector<8x128xf32> to vector<8x32xf32>
    %266 = vector.extract_strided_slice %263 {offsets = [0, 64], sizes = [8, 32], strides = [1, 1]} : vector<8x128xf32> to vector<8x32xf32>
    %267 = vector.extract_strided_slice %263 {offsets = [0, 96], sizes = [8, 32], strides = [1, 1]} : vector<8x128xf32> to vector<8x32xf32>
    %268 = arith.mulf %265, %69 : vector<8x32xf32>
    %269 = arith.mulf %264, %266 : vector<8x32xf32>
    %270 = arith.addf %268, %269 : vector<8x32xf32>
    %271 = math.tanh %270 : vector<8x32xf32>
    %272 = arith.mulf %267, %271 : vector<8x32xf32>
    %273 = vector.extract_strided_slice %2 {offsets = [8, 0], sizes = [8, 128], strides = [1, 1]} : vector<64x128xf32> to vector<8x128xf32>
    %cst_45 = arith.constant dense<0.000000e+00> : vector<8x128xf32>
    %274 = tpu.matmul %272, %3, %cst_45 {dimension_numbers = #tpu.dot_dimension_numbers<[1], [0], [0], [1], [0, 0, 1, 1], [], []>} : vector<8x32xf32>, vector<32x128xf32>, vector<8x128xf32> -> vector<8x128xf32>
    %275 = arith.addf %273, %274 : vector<8x128xf32>
    %cst_46 = arith.constant 0.000000e+00 : f32
    %276 = vector.broadcast %cst_46 : f32 to vector<8x128xf32>
    %277 = vector.shape_cast %7 : vector<128xf32> to vector<1x128xf32>
    %278 = vector.broadcast %277 : vector<1x128xf32> to vector<8x128xf32>
    %279 = arith.cmpf oge, %275, %278 : vector<8x128xf32>
    %280 = arith.extui %279 : vector<8x128xi1> to vector<8x128xi32>
    %281 = arith.sitofp %280 : vector<8x128xi32> to vector<8x128xf32>
    %282 = arith.addf %276, %281 : vector<8x128xf32>
    %283 = vector.shape_cast %9 : vector<128xf32> to vector<1x128xf32>
    %284 = vector.broadcast %283 : vector<1x128xf32> to vector<8x128xf32>
    %285 = arith.cmpf oge, %275, %284 : vector<8x128xf32>
    %286 = arith.extui %285 : vector<8x128xi1> to vector<8x128xi32>
    %287 = arith.sitofp %286 : vector<8x128xi32> to vector<8x128xf32>
    %288 = arith.addf %282, %287 : vector<8x128xf32>
    %289 = vector.shape_cast %11 : vector<128xf32> to vector<1x128xf32>
    %290 = vector.broadcast %289 : vector<1x128xf32> to vector<8x128xf32>
    %291 = arith.cmpf oge, %275, %290 : vector<8x128xf32>
    %292 = arith.extui %291 : vector<8x128xi1> to vector<8x128xi32>
    %293 = arith.sitofp %292 : vector<8x128xi32> to vector<8x128xf32>
    %294 = arith.addf %288, %293 : vector<8x128xf32>
    %295 = vector.shape_cast %13 : vector<128xf32> to vector<1x128xf32>
    %296 = vector.broadcast %295 : vector<1x128xf32> to vector<8x128xf32>
    %297 = arith.cmpf oge, %275, %296 : vector<8x128xf32>
    %298 = arith.extui %297 : vector<8x128xi1> to vector<8x128xi32>
    %299 = arith.sitofp %298 : vector<8x128xi32> to vector<8x128xf32>
    %300 = arith.addf %294, %299 : vector<8x128xf32>
    %301 = vector.shape_cast %15 : vector<128xf32> to vector<1x128xf32>
    %302 = vector.broadcast %301 : vector<1x128xf32> to vector<8x128xf32>
    %303 = arith.cmpf oge, %275, %302 : vector<8x128xf32>
    %304 = arith.extui %303 : vector<8x128xi1> to vector<8x128xi32>
    %305 = arith.sitofp %304 : vector<8x128xi32> to vector<8x128xf32>
    %306 = arith.addf %300, %305 : vector<8x128xf32>
    %307 = vector.shape_cast %17 : vector<128xf32> to vector<1x128xf32>
    %308 = vector.broadcast %307 : vector<1x128xf32> to vector<8x128xf32>
    %309 = arith.cmpf oge, %275, %308 : vector<8x128xf32>
    %310 = arith.extui %309 : vector<8x128xi1> to vector<8x128xi32>
    %311 = arith.sitofp %310 : vector<8x128xi32> to vector<8x128xf32>
    %312 = arith.addf %306, %311 : vector<8x128xf32>
    %313 = vector.shape_cast %19 : vector<128xf32> to vector<1x128xf32>
    %314 = vector.broadcast %313 : vector<1x128xf32> to vector<8x128xf32>
    %315 = arith.cmpf oge, %275, %314 : vector<8x128xf32>
    %316 = arith.extui %315 : vector<8x128xi1> to vector<8x128xi32>
    %317 = arith.sitofp %316 : vector<8x128xi32> to vector<8x128xf32>
    %318 = arith.addf %312, %317 : vector<8x128xf32>
    %319 = vector.shape_cast %21 : vector<128xf32> to vector<1x128xf32>
    %320 = vector.broadcast %319 : vector<1x128xf32> to vector<8x128xf32>
    %321 = arith.cmpf oge, %275, %320 : vector<8x128xf32>
    %322 = arith.extui %321 : vector<8x128xi1> to vector<8x128xi32>
    %323 = arith.sitofp %322 : vector<8x128xi32> to vector<8x128xf32>
    %324 = arith.addf %318, %323 : vector<8x128xf32>
    %325 = vector.shape_cast %23 : vector<128xf32> to vector<1x128xf32>
    %326 = vector.broadcast %325 : vector<1x128xf32> to vector<8x128xf32>
    %327 = arith.cmpf oge, %275, %326 : vector<8x128xf32>
    %328 = arith.extui %327 : vector<8x128xi1> to vector<8x128xi32>
    %329 = arith.sitofp %328 : vector<8x128xi32> to vector<8x128xf32>
    %330 = arith.addf %324, %329 : vector<8x128xf32>
    %331 = vector.shape_cast %25 : vector<128xf32> to vector<1x128xf32>
    %332 = vector.broadcast %331 : vector<1x128xf32> to vector<8x128xf32>
    %333 = arith.cmpf oge, %275, %332 : vector<8x128xf32>
    %334 = arith.extui %333 : vector<8x128xi1> to vector<8x128xi32>
    %335 = arith.sitofp %334 : vector<8x128xi32> to vector<8x128xf32>
    %336 = arith.addf %330, %335 : vector<8x128xf32>
    %337 = vector.shape_cast %27 : vector<128xf32> to vector<1x128xf32>
    %338 = vector.broadcast %337 : vector<1x128xf32> to vector<8x128xf32>
    %339 = arith.cmpf oge, %275, %338 : vector<8x128xf32>
    %340 = arith.extui %339 : vector<8x128xi1> to vector<8x128xi32>
    %341 = arith.sitofp %340 : vector<8x128xi32> to vector<8x128xf32>
    %342 = arith.addf %336, %341 : vector<8x128xf32>
    %343 = vector.shape_cast %29 : vector<128xf32> to vector<1x128xf32>
    %344 = vector.broadcast %343 : vector<1x128xf32> to vector<8x128xf32>
    %345 = arith.cmpf oge, %275, %344 : vector<8x128xf32>
    %346 = arith.extui %345 : vector<8x128xi1> to vector<8x128xi32>
    %347 = arith.sitofp %346 : vector<8x128xi32> to vector<8x128xf32>
    %348 = arith.addf %342, %347 : vector<8x128xf32>
    %349 = vector.shape_cast %31 : vector<128xf32> to vector<1x128xf32>
    %350 = vector.broadcast %349 : vector<1x128xf32> to vector<8x128xf32>
    %351 = arith.cmpf oge, %275, %350 : vector<8x128xf32>
    %352 = arith.extui %351 : vector<8x128xi1> to vector<8x128xi32>
    %353 = arith.sitofp %352 : vector<8x128xi32> to vector<8x128xf32>
    %354 = arith.addf %348, %353 : vector<8x128xf32>
    %355 = vector.shape_cast %33 : vector<128xf32> to vector<1x128xf32>
    %356 = vector.broadcast %355 : vector<1x128xf32> to vector<8x128xf32>
    %357 = arith.cmpf oge, %275, %356 : vector<8x128xf32>
    %358 = arith.extui %357 : vector<8x128xi1> to vector<8x128xi32>
    %359 = arith.sitofp %358 : vector<8x128xi32> to vector<8x128xf32>
    %360 = arith.addf %354, %359 : vector<8x128xf32>
    %361 = vector.shape_cast %35 : vector<128xf32> to vector<1x128xf32>
    %362 = vector.broadcast %361 : vector<1x128xf32> to vector<8x128xf32>
    %363 = arith.cmpf oge, %275, %362 : vector<8x128xf32>
    %364 = arith.extui %363 : vector<8x128xi1> to vector<8x128xi32>
    %365 = arith.sitofp %364 : vector<8x128xi32> to vector<8x128xf32>
    %366 = arith.addf %360, %365 : vector<8x128xf32>
    %367 = vector.shape_cast %37 : vector<128xf32> to vector<1x128xf32>
    %368 = vector.broadcast %367 : vector<1x128xf32> to vector<8x128xf32>
    %369 = arith.cmpf oge, %275, %368 : vector<8x128xf32>
    %370 = arith.extui %369 : vector<8x128xi1> to vector<8x128xi32>
    %371 = arith.sitofp %370 : vector<8x128xi32> to vector<8x128xf32>
    %372 = arith.addf %366, %371 : vector<8x128xf32>
    %373 = vector.shape_cast %39 : vector<128xf32> to vector<1x128xf32>
    %374 = vector.broadcast %373 : vector<1x128xf32> to vector<8x128xf32>
    %375 = arith.cmpf oge, %275, %374 : vector<8x128xf32>
    %376 = arith.extui %375 : vector<8x128xi1> to vector<8x128xi32>
    %377 = arith.sitofp %376 : vector<8x128xi32> to vector<8x128xf32>
    %378 = arith.addf %372, %377 : vector<8x128xf32>
    %379 = vector.shape_cast %41 : vector<128xf32> to vector<1x128xf32>
    %380 = vector.broadcast %379 : vector<1x128xf32> to vector<8x128xf32>
    %381 = arith.cmpf oge, %275, %380 : vector<8x128xf32>
    %382 = arith.extui %381 : vector<8x128xi1> to vector<8x128xi32>
    %383 = arith.sitofp %382 : vector<8x128xi32> to vector<8x128xf32>
    %384 = arith.addf %378, %383 : vector<8x128xf32>
    %385 = vector.shape_cast %43 : vector<128xf32> to vector<1x128xf32>
    %386 = vector.broadcast %385 : vector<1x128xf32> to vector<8x128xf32>
    %387 = arith.cmpf oge, %275, %386 : vector<8x128xf32>
    %388 = arith.extui %387 : vector<8x128xi1> to vector<8x128xi32>
    %389 = arith.sitofp %388 : vector<8x128xi32> to vector<8x128xf32>
    %390 = arith.addf %384, %389 : vector<8x128xf32>
    %391 = vector.shape_cast %45 : vector<128xf32> to vector<1x128xf32>
    %392 = vector.broadcast %391 : vector<1x128xf32> to vector<8x128xf32>
    %393 = arith.cmpf oge, %275, %392 : vector<8x128xf32>
    %394 = arith.extui %393 : vector<8x128xi1> to vector<8x128xi32>
    %395 = arith.sitofp %394 : vector<8x128xi32> to vector<8x128xf32>
    %396 = arith.addf %390, %395 : vector<8x128xf32>
    %397 = vector.shape_cast %47 : vector<128xf32> to vector<1x128xf32>
    %398 = vector.broadcast %397 : vector<1x128xf32> to vector<8x128xf32>
    %399 = arith.cmpf oge, %275, %398 : vector<8x128xf32>
    %400 = arith.extui %399 : vector<8x128xi1> to vector<8x128xi32>
    %401 = arith.sitofp %400 : vector<8x128xi32> to vector<8x128xf32>
    %402 = arith.addf %396, %401 : vector<8x128xf32>
    %403 = vector.shape_cast %49 : vector<128xf32> to vector<1x128xf32>
    %404 = vector.broadcast %403 : vector<1x128xf32> to vector<8x128xf32>
    %405 = arith.cmpf oge, %275, %404 : vector<8x128xf32>
    %406 = arith.extui %405 : vector<8x128xi1> to vector<8x128xi32>
    %407 = arith.sitofp %406 : vector<8x128xi32> to vector<8x128xf32>
    %408 = arith.addf %402, %407 : vector<8x128xf32>
    %409 = vector.shape_cast %51 : vector<128xf32> to vector<1x128xf32>
    %410 = vector.broadcast %409 : vector<1x128xf32> to vector<8x128xf32>
    %411 = arith.cmpf oge, %275, %410 : vector<8x128xf32>
    %412 = arith.extui %411 : vector<8x128xi1> to vector<8x128xi32>
    %413 = arith.sitofp %412 : vector<8x128xi32> to vector<8x128xf32>
    %414 = arith.addf %408, %413 : vector<8x128xf32>
    %415 = vector.shape_cast %53 : vector<128xf32> to vector<1x128xf32>
    %416 = vector.broadcast %415 : vector<1x128xf32> to vector<8x128xf32>
    %417 = arith.cmpf oge, %275, %416 : vector<8x128xf32>
    %418 = arith.extui %417 : vector<8x128xi1> to vector<8x128xi32>
    %419 = arith.sitofp %418 : vector<8x128xi32> to vector<8x128xf32>
    %420 = arith.addf %414, %419 : vector<8x128xf32>
    %421 = vector.shape_cast %55 : vector<128xf32> to vector<1x128xf32>
    %422 = vector.broadcast %421 : vector<1x128xf32> to vector<8x128xf32>
    %423 = arith.cmpf oge, %275, %422 : vector<8x128xf32>
    %424 = arith.extui %423 : vector<8x128xi1> to vector<8x128xi32>
    %425 = arith.sitofp %424 : vector<8x128xi32> to vector<8x128xf32>
    %426 = arith.addf %420, %425 : vector<8x128xf32>
    %427 = vector.shape_cast %57 : vector<128xf32> to vector<1x128xf32>
    %428 = vector.broadcast %427 : vector<1x128xf32> to vector<8x128xf32>
    %429 = arith.cmpf oge, %275, %428 : vector<8x128xf32>
    %430 = arith.extui %429 : vector<8x128xi1> to vector<8x128xi32>
    %431 = arith.sitofp %430 : vector<8x128xi32> to vector<8x128xf32>
    %432 = arith.addf %426, %431 : vector<8x128xf32>
    %433 = vector.shape_cast %59 : vector<128xf32> to vector<1x128xf32>
    %434 = vector.broadcast %433 : vector<1x128xf32> to vector<8x128xf32>
    %435 = arith.cmpf oge, %275, %434 : vector<8x128xf32>
    %436 = arith.extui %435 : vector<8x128xi1> to vector<8x128xi32>
    %437 = arith.sitofp %436 : vector<8x128xi32> to vector<8x128xf32>
    %438 = arith.addf %432, %437 : vector<8x128xf32>
    %439 = vector.shape_cast %61 : vector<128xf32> to vector<1x128xf32>
    %440 = vector.broadcast %439 : vector<1x128xf32> to vector<8x128xf32>
    %441 = arith.cmpf oge, %275, %440 : vector<8x128xf32>
    %442 = arith.extui %441 : vector<8x128xi1> to vector<8x128xi32>
    %443 = arith.sitofp %442 : vector<8x128xi32> to vector<8x128xf32>
    %444 = arith.addf %438, %443 : vector<8x128xf32>
    %445 = vector.shape_cast %63 : vector<128xf32> to vector<1x128xf32>
    %446 = vector.broadcast %445 : vector<1x128xf32> to vector<8x128xf32>
    %447 = arith.cmpf oge, %275, %446 : vector<8x128xf32>
    %448 = arith.extui %447 : vector<8x128xi1> to vector<8x128xi32>
    %449 = arith.sitofp %448 : vector<8x128xi32> to vector<8x128xf32>
    %450 = arith.addf %444, %449 : vector<8x128xf32>
    %451 = vector.shape_cast %65 : vector<128xf32> to vector<1x128xf32>
    %452 = vector.broadcast %451 : vector<1x128xf32> to vector<8x128xf32>
    %453 = arith.cmpf oge, %275, %452 : vector<8x128xf32>
    %454 = arith.extui %453 : vector<8x128xi1> to vector<8x128xi32>
    %455 = arith.sitofp %454 : vector<8x128xi32> to vector<8x128xf32>
    %456 = arith.addf %450, %455 : vector<8x128xf32>
    %457 = vector.shape_cast %67 : vector<128xf32> to vector<1x128xf32>
    %458 = vector.broadcast %457 : vector<1x128xf32> to vector<8x128xf32>
    %459 = arith.cmpf oge, %275, %458 : vector<8x128xf32>
    %460 = arith.extui %459 : vector<8x128xi1> to vector<8x128xi32>
    %461 = arith.sitofp %460 : vector<8x128xi32> to vector<8x128xf32>
    %462 = arith.addf %456, %461 : vector<8x128xf32>
    %463 = vector.broadcast %4 : vector<1x128xf32> to vector<8x128xf32>
    %464 = arith.mulf %462, %463 : vector<8x128xf32>
    %465 = vector.broadcast %5 : vector<1x128xf32> to vector<8x128xf32>
    %466 = arith.addf %464, %465 : vector<8x128xf32>
    %467 = vector.extract_strided_slice %466 {offsets = [0, 0], sizes = [8, 32], strides = [1, 1]} : vector<8x128xf32> to vector<8x32xf32>
    %468 = vector.extract_strided_slice %466 {offsets = [0, 32], sizes = [8, 32], strides = [1, 1]} : vector<8x128xf32> to vector<8x32xf32>
    %469 = vector.extract_strided_slice %466 {offsets = [0, 64], sizes = [8, 32], strides = [1, 1]} : vector<8x128xf32> to vector<8x32xf32>
    %470 = vector.extract_strided_slice %466 {offsets = [0, 96], sizes = [8, 32], strides = [1, 1]} : vector<8x128xf32> to vector<8x32xf32>
    %471 = arith.mulf %468, %270 : vector<8x32xf32>
    %472 = arith.mulf %467, %469 : vector<8x32xf32>
    %473 = arith.addf %471, %472 : vector<8x32xf32>
    %474 = math.tanh %473 : vector<8x32xf32>
    %475 = arith.mulf %470, %474 : vector<8x32xf32>
    %476 = vector.extract_strided_slice %2 {offsets = [16, 0], sizes = [8, 128], strides = [1, 1]} : vector<64x128xf32> to vector<8x128xf32>
    %cst_47 = arith.constant dense<0.000000e+00> : vector<8x128xf32>
    %477 = tpu.matmul %475, %3, %cst_47 {dimension_numbers = #tpu.dot_dimension_numbers<[1], [0], [0], [1], [0, 0, 1, 1], [], []>} : vector<8x32xf32>, vector<32x128xf32>, vector<8x128xf32> -> vector<8x128xf32>
    %478 = arith.addf %476, %477 : vector<8x128xf32>
    %cst_48 = arith.constant 0.000000e+00 : f32
    %479 = vector.broadcast %cst_48 : f32 to vector<8x128xf32>
    %480 = vector.shape_cast %7 : vector<128xf32> to vector<1x128xf32>
    %481 = vector.broadcast %480 : vector<1x128xf32> to vector<8x128xf32>
    %482 = arith.cmpf oge, %478, %481 : vector<8x128xf32>
    %483 = arith.extui %482 : vector<8x128xi1> to vector<8x128xi32>
    %484 = arith.sitofp %483 : vector<8x128xi32> to vector<8x128xf32>
    %485 = arith.addf %479, %484 : vector<8x128xf32>
    %486 = vector.shape_cast %9 : vector<128xf32> to vector<1x128xf32>
    %487 = vector.broadcast %486 : vector<1x128xf32> to vector<8x128xf32>
    %488 = arith.cmpf oge, %478, %487 : vector<8x128xf32>
    %489 = arith.extui %488 : vector<8x128xi1> to vector<8x128xi32>
    %490 = arith.sitofp %489 : vector<8x128xi32> to vector<8x128xf32>
    %491 = arith.addf %485, %490 : vector<8x128xf32>
    %492 = vector.shape_cast %11 : vector<128xf32> to vector<1x128xf32>
    %493 = vector.broadcast %492 : vector<1x128xf32> to vector<8x128xf32>
    %494 = arith.cmpf oge, %478, %493 : vector<8x128xf32>
    %495 = arith.extui %494 : vector<8x128xi1> to vector<8x128xi32>
    %496 = arith.sitofp %495 : vector<8x128xi32> to vector<8x128xf32>
    %497 = arith.addf %491, %496 : vector<8x128xf32>
    %498 = vector.shape_cast %13 : vector<128xf32> to vector<1x128xf32>
    %499 = vector.broadcast %498 : vector<1x128xf32> to vector<8x128xf32>
    %500 = arith.cmpf oge, %478, %499 : vector<8x128xf32>
    %501 = arith.extui %500 : vector<8x128xi1> to vector<8x128xi32>
    %502 = arith.sitofp %501 : vector<8x128xi32> to vector<8x128xf32>
    %503 = arith.addf %497, %502 : vector<8x128xf32>
    %504 = vector.shape_cast %15 : vector<128xf32> to vector<1x128xf32>
    %505 = vector.broadcast %504 : vector<1x128xf32> to vector<8x128xf32>
    %506 = arith.cmpf oge, %478, %505 : vector<8x128xf32>
    %507 = arith.extui %506 : vector<8x128xi1> to vector<8x128xi32>
    %508 = arith.sitofp %507 : vector<8x128xi32> to vector<8x128xf32>
    %509 = arith.addf %503, %508 : vector<8x128xf32>
    %510 = vector.shape_cast %17 : vector<128xf32> to vector<1x128xf32>
    %511 = vector.broadcast %510 : vector<1x128xf32> to vector<8x128xf32>
    %512 = arith.cmpf oge, %478, %511 : vector<8x128xf32>
    %513 = arith.extui %512 : vector<8x128xi1> to vector<8x128xi32>
    %514 = arith.sitofp %513 : vector<8x128xi32> to vector<8x128xf32>
    %515 = arith.addf %509, %514 : vector<8x128xf32>
    %516 = vector.shape_cast %19 : vector<128xf32> to vector<1x128xf32>
    %517 = vector.broadcast %516 : vector<1x128xf32> to vector<8x128xf32>
    %518 = arith.cmpf oge, %478, %517 : vector<8x128xf32>
    %519 = arith.extui %518 : vector<8x128xi1> to vector<8x128xi32>
    %520 = arith.sitofp %519 : vector<8x128xi32> to vector<8x128xf32>
    %521 = arith.addf %515, %520 : vector<8x128xf32>
    %522 = vector.shape_cast %21 : vector<128xf32> to vector<1x128xf32>
    %523 = vector.broadcast %522 : vector<1x128xf32> to vector<8x128xf32>
    %524 = arith.cmpf oge, %478, %523 : vector<8x128xf32>
    %525 = arith.extui %524 : vector<8x128xi1> to vector<8x128xi32>
    %526 = arith.sitofp %525 : vector<8x128xi32> to vector<8x128xf32>
    %527 = arith.addf %521, %526 : vector<8x128xf32>
    %528 = vector.shape_cast %23 : vector<128xf32> to vector<1x128xf32>
    %529 = vector.broadcast %528 : vector<1x128xf32> to vector<8x128xf32>
    %530 = arith.cmpf oge, %478, %529 : vector<8x128xf32>
    %531 = arith.extui %530 : vector<8x128xi1> to vector<8x128xi32>
    %532 = arith.sitofp %531 : vector<8x128xi32> to vector<8x128xf32>
    %533 = arith.addf %527, %532 : vector<8x128xf32>
    %534 = vector.shape_cast %25 : vector<128xf32> to vector<1x128xf32>
    %535 = vector.broadcast %534 : vector<1x128xf32> to vector<8x128xf32>
    %536 = arith.cmpf oge, %478, %535 : vector<8x128xf32>
    %537 = arith.extui %536 : vector<8x128xi1> to vector<8x128xi32>
    %538 = arith.sitofp %537 : vector<8x128xi32> to vector<8x128xf32>
    %539 = arith.addf %533, %538 : vector<8x128xf32>
    %540 = vector.shape_cast %27 : vector<128xf32> to vector<1x128xf32>
    %541 = vector.broadcast %540 : vector<1x128xf32> to vector<8x128xf32>
    %542 = arith.cmpf oge, %478, %541 : vector<8x128xf32>
    %543 = arith.extui %542 : vector<8x128xi1> to vector<8x128xi32>
    %544 = arith.sitofp %543 : vector<8x128xi32> to vector<8x128xf32>
    %545 = arith.addf %539, %544 : vector<8x128xf32>
    %546 = vector.shape_cast %29 : vector<128xf32> to vector<1x128xf32>
    %547 = vector.broadcast %546 : vector<1x128xf32> to vector<8x128xf32>
    %548 = arith.cmpf oge, %478, %547 : vector<8x128xf32>
    %549 = arith.extui %548 : vector<8x128xi1> to vector<8x128xi32>
    %550 = arith.sitofp %549 : vector<8x128xi32> to vector<8x128xf32>
    %551 = arith.addf %545, %550 : vector<8x128xf32>
    %552 = vector.shape_cast %31 : vector<128xf32> to vector<1x128xf32>
    %553 = vector.broadcast %552 : vector<1x128xf32> to vector<8x128xf32>
    %554 = arith.cmpf oge, %478, %553 : vector<8x128xf32>
    %555 = arith.extui %554 : vector<8x128xi1> to vector<8x128xi32>
    %556 = arith.sitofp %555 : vector<8x128xi32> to vector<8x128xf32>
    %557 = arith.addf %551, %556 : vector<8x128xf32>
    %558 = vector.shape_cast %33 : vector<128xf32> to vector<1x128xf32>
    %559 = vector.broadcast %558 : vector<1x128xf32> to vector<8x128xf32>
    %560 = arith.cmpf oge, %478, %559 : vector<8x128xf32>
    %561 = arith.extui %560 : vector<8x128xi1> to vector<8x128xi32>
    %562 = arith.sitofp %561 : vector<8x128xi32> to vector<8x128xf32>
    %563 = arith.addf %557, %562 : vector<8x128xf32>
    %564 = vector.shape_cast %35 : vector<128xf32> to vector<1x128xf32>
    %565 = vector.broadcast %564 : vector<1x128xf32> to vector<8x128xf32>
    %566 = arith.cmpf oge, %478, %565 : vector<8x128xf32>
    %567 = arith.extui %566 : vector<8x128xi1> to vector<8x128xi32>
    %568 = arith.sitofp %567 : vector<8x128xi32> to vector<8x128xf32>
    %569 = arith.addf %563, %568 : vector<8x128xf32>
    %570 = vector.shape_cast %37 : vector<128xf32> to vector<1x128xf32>
    %571 = vector.broadcast %570 : vector<1x128xf32> to vector<8x128xf32>
    %572 = arith.cmpf oge, %478, %571 : vector<8x128xf32>
    %573 = arith.extui %572 : vector<8x128xi1> to vector<8x128xi32>
    %574 = arith.sitofp %573 : vector<8x128xi32> to vector<8x128xf32>
    %575 = arith.addf %569, %574 : vector<8x128xf32>
    %576 = vector.shape_cast %39 : vector<128xf32> to vector<1x128xf32>
    %577 = vector.broadcast %576 : vector<1x128xf32> to vector<8x128xf32>
    %578 = arith.cmpf oge, %478, %577 : vector<8x128xf32>
    %579 = arith.extui %578 : vector<8x128xi1> to vector<8x128xi32>
    %580 = arith.sitofp %579 : vector<8x128xi32> to vector<8x128xf32>
    %581 = arith.addf %575, %580 : vector<8x128xf32>
    %582 = vector.shape_cast %41 : vector<128xf32> to vector<1x128xf32>
    %583 = vector.broadcast %582 : vector<1x128xf32> to vector<8x128xf32>
    %584 = arith.cmpf oge, %478, %583 : vector<8x128xf32>
    %585 = arith.extui %584 : vector<8x128xi1> to vector<8x128xi32>
    %586 = arith.sitofp %585 : vector<8x128xi32> to vector<8x128xf32>
    %587 = arith.addf %581, %586 : vector<8x128xf32>
    %588 = vector.shape_cast %43 : vector<128xf32> to vector<1x128xf32>
    %589 = vector.broadcast %588 : vector<1x128xf32> to vector<8x128xf32>
    %590 = arith.cmpf oge, %478, %589 : vector<8x128xf32>
    %591 = arith.extui %590 : vector<8x128xi1> to vector<8x128xi32>
    %592 = arith.sitofp %591 : vector<8x128xi32> to vector<8x128xf32>
    %593 = arith.addf %587, %592 : vector<8x128xf32>
    %594 = vector.shape_cast %45 : vector<128xf32> to vector<1x128xf32>
    %595 = vector.broadcast %594 : vector<1x128xf32> to vector<8x128xf32>
    %596 = arith.cmpf oge, %478, %595 : vector<8x128xf32>
    %597 = arith.extui %596 : vector<8x128xi1> to vector<8x128xi32>
    %598 = arith.sitofp %597 : vector<8x128xi32> to vector<8x128xf32>
    %599 = arith.addf %593, %598 : vector<8x128xf32>
    %600 = vector.shape_cast %47 : vector<128xf32> to vector<1x128xf32>
    %601 = vector.broadcast %600 : vector<1x128xf32> to vector<8x128xf32>
    %602 = arith.cmpf oge, %478, %601 : vector<8x128xf32>
    %603 = arith.extui %602 : vector<8x128xi1> to vector<8x128xi32>
    %604 = arith.sitofp %603 : vector<8x128xi32> to vector<8x128xf32>
    %605 = arith.addf %599, %604 : vector<8x128xf32>
    %606 = vector.shape_cast %49 : vector<128xf32> to vector<1x128xf32>
    %607 = vector.broadcast %606 : vector<1x128xf32> to vector<8x128xf32>
    %608 = arith.cmpf oge, %478, %607 : vector<8x128xf32>
    %609 = arith.extui %608 : vector<8x128xi1> to vector<8x128xi32>
    %610 = arith.sitofp %609 : vector<8x128xi32> to vector<8x128xf32>
    %611 = arith.addf %605, %610 : vector<8x128xf32>
    %612 = vector.shape_cast %51 : vector<128xf32> to vector<1x128xf32>
    %613 = vector.broadcast %612 : vector<1x128xf32> to vector<8x128xf32>
    %614 = arith.cmpf oge, %478, %613 : vector<8x128xf32>
    %615 = arith.extui %614 : vector<8x128xi1> to vector<8x128xi32>
    %616 = arith.sitofp %615 : vector<8x128xi32> to vector<8x128xf32>
    %617 = arith.addf %611, %616 : vector<8x128xf32>
    %618 = vector.shape_cast %53 : vector<128xf32> to vector<1x128xf32>
    %619 = vector.broadcast %618 : vector<1x128xf32> to vector<8x128xf32>
    %620 = arith.cmpf oge, %478, %619 : vector<8x128xf32>
    %621 = arith.extui %620 : vector<8x128xi1> to vector<8x128xi32>
    %622 = arith.sitofp %621 : vector<8x128xi32> to vector<8x128xf32>
    %623 = arith.addf %617, %622 : vector<8x128xf32>
    %624 = vector.shape_cast %55 : vector<128xf32> to vector<1x128xf32>
    %625 = vector.broadcast %624 : vector<1x128xf32> to vector<8x128xf32>
    %626 = arith.cmpf oge, %478, %625 : vector<8x128xf32>
    %627 = arith.extui %626 : vector<8x128xi1> to vector<8x128xi32>
    %628 = arith.sitofp %627 : vector<8x128xi32> to vector<8x128xf32>
    %629 = arith.addf %623, %628 : vector<8x128xf32>
    %630 = vector.shape_cast %57 : vector<128xf32> to vector<1x128xf32>
    %631 = vector.broadcast %630 : vector<1x128xf32> to vector<8x128xf32>
    %632 = arith.cmpf oge, %478, %631 : vector<8x128xf32>
    %633 = arith.extui %632 : vector<8x128xi1> to vector<8x128xi32>
    %634 = arith.sitofp %633 : vector<8x128xi32> to vector<8x128xf32>
    %635 = arith.addf %629, %634 : vector<8x128xf32>
    %636 = vector.shape_cast %59 : vector<128xf32> to vector<1x128xf32>
    %637 = vector.broadcast %636 : vector<1x128xf32> to vector<8x128xf32>
    %638 = arith.cmpf oge, %478, %637 : vector<8x128xf32>
    %639 = arith.extui %638 : vector<8x128xi1> to vector<8x128xi32>
    %640 = arith.sitofp %639 : vector<8x128xi32> to vector<8x128xf32>
    %641 = arith.addf %635, %640 : vector<8x128xf32>
    %642 = vector.shape_cast %61 : vector<128xf32> to vector<1x128xf32>
    %643 = vector.broadcast %642 : vector<1x128xf32> to vector<8x128xf32>
    %644 = arith.cmpf oge, %478, %643 : vector<8x128xf32>
    %645 = arith.extui %644 : vector<8x128xi1> to vector<8x128xi32>
    %646 = arith.sitofp %645 : vector<8x128xi32> to vector<8x128xf32>
    %647 = arith.addf %641, %646 : vector<8x128xf32>
    %648 = vector.shape_cast %63 : vector<128xf32> to vector<1x128xf32>
    %649 = vector.broadcast %648 : vector<1x128xf32> to vector<8x128xf32>
    %650 = arith.cmpf oge, %478, %649 : vector<8x128xf32>
    %651 = arith.extui %650 : vector<8x128xi1> to vector<8x128xi32>
    %652 = arith.sitofp %651 : vector<8x128xi32> to vector<8x128xf32>
    %653 = arith.addf %647, %652 : vector<8x128xf32>
    %654 = vector.shape_cast %65 : vector<128xf32> to vector<1x128xf32>
    %655 = vector.broadcast %654 : vector<1x128xf32> to vector<8x128xf32>
    %656 = arith.cmpf oge, %478, %655 : vector<8x128xf32>
    %657 = arith.extui %656 : vector<8x128xi1> to vector<8x128xi32>
    %658 = arith.sitofp %657 : vector<8x128xi32> to vector<8x128xf32>
    %659 = arith.addf %653, %658 : vector<8x128xf32>
    %660 = vector.shape_cast %67 : vector<128xf32> to vector<1x128xf32>
    %661 = vector.broadcast %660 : vector<1x128xf32> to vector<8x128xf32>
    %662 = arith.cmpf oge, %478, %661 : vector<8x128xf32>
    %663 = arith.extui %662 : vector<8x128xi1> to vector<8x128xi32>
    %664 = arith.sitofp %663 : vector<8x128xi32> to vector<8x128xf32>
    %665 = arith.addf %659, %664 : vector<8x128xf32>
    %666 = vector.broadcast %4 : vector<1x128xf32> to vector<8x128xf32>
    %667 = arith.mulf %665, %666 : vector<8x128xf32>
    %668 = vector.broadcast %5 : vector<1x128xf32> to vector<8x128xf32>
    %669 = arith.addf %667, %668 : vector<8x128xf32>
    %670 = vector.extract_strided_slice %669 {offsets = [0, 0], sizes = [8, 32], strides = [1, 1]} : vector<8x128xf32> to vector<8x32xf32>
    %671 = vector.extract_strided_slice %669 {offsets = [0, 32], sizes = [8, 32], strides = [1, 1]} : vector<8x128xf32> to vector<8x32xf32>
    %672 = vector.extract_strided_slice %669 {offsets = [0, 64], sizes = [8, 32], strides = [1, 1]} : vector<8x128xf32> to vector<8x32xf32>
    %673 = vector.extract_strided_slice %669 {offsets = [0, 96], sizes = [8, 32], strides = [1, 1]} : vector<8x128xf32> to vector<8x32xf32>
    %674 = arith.mulf %671, %473 : vector<8x32xf32>
    %675 = arith.mulf %670, %672 : vector<8x32xf32>
    %676 = arith.addf %674, %675 : vector<8x32xf32>
    %677 = math.tanh %676 : vector<8x32xf32>
    %678 = arith.mulf %673, %677 : vector<8x32xf32>
    %679 = vector.extract_strided_slice %2 {offsets = [24, 0], sizes = [8, 128], strides = [1, 1]} : vector<64x128xf32> to vector<8x128xf32>
    %cst_49 = arith.constant dense<0.000000e+00> : vector<8x128xf32>
    %680 = tpu.matmul %678, %3, %cst_49 {dimension_numbers = #tpu.dot_dimension_numbers<[1], [0], [0], [1], [0, 0, 1, 1], [], []>} : vector<8x32xf32>, vector<32x128xf32>, vector<8x128xf32> -> vector<8x128xf32>
    %681 = arith.addf %679, %680 : vector<8x128xf32>
    %cst_50 = arith.constant 0.000000e+00 : f32
    %682 = vector.broadcast %cst_50 : f32 to vector<8x128xf32>
    %683 = vector.shape_cast %7 : vector<128xf32> to vector<1x128xf32>
    %684 = vector.broadcast %683 : vector<1x128xf32> to vector<8x128xf32>
    %685 = arith.cmpf oge, %681, %684 : vector<8x128xf32>
    %686 = arith.extui %685 : vector<8x128xi1> to vector<8x128xi32>
    %687 = arith.sitofp %686 : vector<8x128xi32> to vector<8x128xf32>
    %688 = arith.addf %682, %687 : vector<8x128xf32>
    %689 = vector.shape_cast %9 : vector<128xf32> to vector<1x128xf32>
    %690 = vector.broadcast %689 : vector<1x128xf32> to vector<8x128xf32>
    %691 = arith.cmpf oge, %681, %690 : vector<8x128xf32>
    %692 = arith.extui %691 : vector<8x128xi1> to vector<8x128xi32>
    %693 = arith.sitofp %692 : vector<8x128xi32> to vector<8x128xf32>
    %694 = arith.addf %688, %693 : vector<8x128xf32>
    %695 = vector.shape_cast %11 : vector<128xf32> to vector<1x128xf32>
    %696 = vector.broadcast %695 : vector<1x128xf32> to vector<8x128xf32>
    %697 = arith.cmpf oge, %681, %696 : vector<8x128xf32>
    %698 = arith.extui %697 : vector<8x128xi1> to vector<8x128xi32>
    %699 = arith.sitofp %698 : vector<8x128xi32> to vector<8x128xf32>
    %700 = arith.addf %694, %699 : vector<8x128xf32>
    %701 = vector.shape_cast %13 : vector<128xf32> to vector<1x128xf32>
    %702 = vector.broadcast %701 : vector<1x128xf32> to vector<8x128xf32>
    %703 = arith.cmpf oge, %681, %702 : vector<8x128xf32>
    %704 = arith.extui %703 : vector<8x128xi1> to vector<8x128xi32>
    %705 = arith.sitofp %704 : vector<8x128xi32> to vector<8x128xf32>
    %706 = arith.addf %700, %705 : vector<8x128xf32>
    %707 = vector.shape_cast %15 : vector<128xf32> to vector<1x128xf32>
    %708 = vector.broadcast %707 : vector<1x128xf32> to vector<8x128xf32>
    %709 = arith.cmpf oge, %681, %708 : vector<8x128xf32>
    %710 = arith.extui %709 : vector<8x128xi1> to vector<8x128xi32>
    %711 = arith.sitofp %710 : vector<8x128xi32> to vector<8x128xf32>
    %712 = arith.addf %706, %711 : vector<8x128xf32>
    %713 = vector.shape_cast %17 : vector<128xf32> to vector<1x128xf32>
    %714 = vector.broadcast %713 : vector<1x128xf32> to vector<8x128xf32>
    %715 = arith.cmpf oge, %681, %714 : vector<8x128xf32>
    %716 = arith.extui %715 : vector<8x128xi1> to vector<8x128xi32>
    %717 = arith.sitofp %716 : vector<8x128xi32> to vector<8x128xf32>
    %718 = arith.addf %712, %717 : vector<8x128xf32>
    %719 = vector.shape_cast %19 : vector<128xf32> to vector<1x128xf32>
    %720 = vector.broadcast %719 : vector<1x128xf32> to vector<8x128xf32>
    %721 = arith.cmpf oge, %681, %720 : vector<8x128xf32>
    %722 = arith.extui %721 : vector<8x128xi1> to vector<8x128xi32>
    %723 = arith.sitofp %722 : vector<8x128xi32> to vector<8x128xf32>
    %724 = arith.addf %718, %723 : vector<8x128xf32>
    %725 = vector.shape_cast %21 : vector<128xf32> to vector<1x128xf32>
    %726 = vector.broadcast %725 : vector<1x128xf32> to vector<8x128xf32>
    %727 = arith.cmpf oge, %681, %726 : vector<8x128xf32>
    %728 = arith.extui %727 : vector<8x128xi1> to vector<8x128xi32>
    %729 = arith.sitofp %728 : vector<8x128xi32> to vector<8x128xf32>
    %730 = arith.addf %724, %729 : vector<8x128xf32>
    %731 = vector.shape_cast %23 : vector<128xf32> to vector<1x128xf32>
    %732 = vector.broadcast %731 : vector<1x128xf32> to vector<8x128xf32>
    %733 = arith.cmpf oge, %681, %732 : vector<8x128xf32>
    %734 = arith.extui %733 : vector<8x128xi1> to vector<8x128xi32>
    %735 = arith.sitofp %734 : vector<8x128xi32> to vector<8x128xf32>
    %736 = arith.addf %730, %735 : vector<8x128xf32>
    %737 = vector.shape_cast %25 : vector<128xf32> to vector<1x128xf32>
    %738 = vector.broadcast %737 : vector<1x128xf32> to vector<8x128xf32>
    %739 = arith.cmpf oge, %681, %738 : vector<8x128xf32>
    %740 = arith.extui %739 : vector<8x128xi1> to vector<8x128xi32>
    %741 = arith.sitofp %740 : vector<8x128xi32> to vector<8x128xf32>
    %742 = arith.addf %736, %741 : vector<8x128xf32>
    %743 = vector.shape_cast %27 : vector<128xf32> to vector<1x128xf32>
    %744 = vector.broadcast %743 : vector<1x128xf32> to vector<8x128xf32>
    %745 = arith.cmpf oge, %681, %744 : vector<8x128xf32>
    %746 = arith.extui %745 : vector<8x128xi1> to vector<8x128xi32>
    %747 = arith.sitofp %746 : vector<8x128xi32> to vector<8x128xf32>
    %748 = arith.addf %742, %747 : vector<8x128xf32>
    %749 = vector.shape_cast %29 : vector<128xf32> to vector<1x128xf32>
    %750 = vector.broadcast %749 : vector<1x128xf32> to vector<8x128xf32>
    %751 = arith.cmpf oge, %681, %750 : vector<8x128xf32>
    %752 = arith.extui %751 : vector<8x128xi1> to vector<8x128xi32>
    %753 = arith.sitofp %752 : vector<8x128xi32> to vector<8x128xf32>
    %754 = arith.addf %748, %753 : vector<8x128xf32>
    %755 = vector.shape_cast %31 : vector<128xf32> to vector<1x128xf32>
    %756 = vector.broadcast %755 : vector<1x128xf32> to vector<8x128xf32>
    %757 = arith.cmpf oge, %681, %756 : vector<8x128xf32>
    %758 = arith.extui %757 : vector<8x128xi1> to vector<8x128xi32>
    %759 = arith.sitofp %758 : vector<8x128xi32> to vector<8x128xf32>
    %760 = arith.addf %754, %759 : vector<8x128xf32>
    %761 = vector.shape_cast %33 : vector<128xf32> to vector<1x128xf32>
    %762 = vector.broadcast %761 : vector<1x128xf32> to vector<8x128xf32>
    %763 = arith.cmpf oge, %681, %762 : vector<8x128xf32>
    %764 = arith.extui %763 : vector<8x128xi1> to vector<8x128xi32>
    %765 = arith.sitofp %764 : vector<8x128xi32> to vector<8x128xf32>
    %766 = arith.addf %760, %765 : vector<8x128xf32>
    %767 = vector.shape_cast %35 : vector<128xf32> to vector<1x128xf32>
    %768 = vector.broadcast %767 : vector<1x128xf32> to vector<8x128xf32>
    %769 = arith.cmpf oge, %681, %768 : vector<8x128xf32>
    %770 = arith.extui %769 : vector<8x128xi1> to vector<8x128xi32>
    %771 = arith.sitofp %770 : vector<8x128xi32> to vector<8x128xf32>
    %772 = arith.addf %766, %771 : vector<8x128xf32>
    %773 = vector.shape_cast %37 : vector<128xf32> to vector<1x128xf32>
    %774 = vector.broadcast %773 : vector<1x128xf32> to vector<8x128xf32>
    %775 = arith.cmpf oge, %681, %774 : vector<8x128xf32>
    %776 = arith.extui %775 : vector<8x128xi1> to vector<8x128xi32>
    %777 = arith.sitofp %776 : vector<8x128xi32> to vector<8x128xf32>
    %778 = arith.addf %772, %777 : vector<8x128xf32>
    %779 = vector.shape_cast %39 : vector<128xf32> to vector<1x128xf32>
    %780 = vector.broadcast %779 : vector<1x128xf32> to vector<8x128xf32>
    %781 = arith.cmpf oge, %681, %780 : vector<8x128xf32>
    %782 = arith.extui %781 : vector<8x128xi1> to vector<8x128xi32>
    %783 = arith.sitofp %782 : vector<8x128xi32> to vector<8x128xf32>
    %784 = arith.addf %778, %783 : vector<8x128xf32>
    %785 = vector.shape_cast %41 : vector<128xf32> to vector<1x128xf32>
    %786 = vector.broadcast %785 : vector<1x128xf32> to vector<8x128xf32>
    %787 = arith.cmpf oge, %681, %786 : vector<8x128xf32>
    %788 = arith.extui %787 : vector<8x128xi1> to vector<8x128xi32>
    %789 = arith.sitofp %788 : vector<8x128xi32> to vector<8x128xf32>
    %790 = arith.addf %784, %789 : vector<8x128xf32>
    %791 = vector.shape_cast %43 : vector<128xf32> to vector<1x128xf32>
    %792 = vector.broadcast %791 : vector<1x128xf32> to vector<8x128xf32>
    %793 = arith.cmpf oge, %681, %792 : vector<8x128xf32>
    %794 = arith.extui %793 : vector<8x128xi1> to vector<8x128xi32>
    %795 = arith.sitofp %794 : vector<8x128xi32> to vector<8x128xf32>
    %796 = arith.addf %790, %795 : vector<8x128xf32>
    %797 = vector.shape_cast %45 : vector<128xf32> to vector<1x128xf32>
    %798 = vector.broadcast %797 : vector<1x128xf32> to vector<8x128xf32>
    %799 = arith.cmpf oge, %681, %798 : vector<8x128xf32>
    %800 = arith.extui %799 : vector<8x128xi1> to vector<8x128xi32>
    %801 = arith.sitofp %800 : vector<8x128xi32> to vector<8x128xf32>
    %802 = arith.addf %796, %801 : vector<8x128xf32>
    %803 = vector.shape_cast %47 : vector<128xf32> to vector<1x128xf32>
    %804 = vector.broadcast %803 : vector<1x128xf32> to vector<8x128xf32>
    %805 = arith.cmpf oge, %681, %804 : vector<8x128xf32>
    %806 = arith.extui %805 : vector<8x128xi1> to vector<8x128xi32>
    %807 = arith.sitofp %806 : vector<8x128xi32> to vector<8x128xf32>
    %808 = arith.addf %802, %807 : vector<8x128xf32>
    %809 = vector.shape_cast %49 : vector<128xf32> to vector<1x128xf32>
    %810 = vector.broadcast %809 : vector<1x128xf32> to vector<8x128xf32>
    %811 = arith.cmpf oge, %681, %810 : vector<8x128xf32>
    %812 = arith.extui %811 : vector<8x128xi1> to vector<8x128xi32>
    %813 = arith.sitofp %812 : vector<8x128xi32> to vector<8x128xf32>
    %814 = arith.addf %808, %813 : vector<8x128xf32>
    %815 = vector.shape_cast %51 : vector<128xf32> to vector<1x128xf32>
    %816 = vector.broadcast %815 : vector<1x128xf32> to vector<8x128xf32>
    %817 = arith.cmpf oge, %681, %816 : vector<8x128xf32>
    %818 = arith.extui %817 : vector<8x128xi1> to vector<8x128xi32>
    %819 = arith.sitofp %818 : vector<8x128xi32> to vector<8x128xf32>
    %820 = arith.addf %814, %819 : vector<8x128xf32>
    %821 = vector.shape_cast %53 : vector<128xf32> to vector<1x128xf32>
    %822 = vector.broadcast %821 : vector<1x128xf32> to vector<8x128xf32>
    %823 = arith.cmpf oge, %681, %822 : vector<8x128xf32>
    %824 = arith.extui %823 : vector<8x128xi1> to vector<8x128xi32>
    %825 = arith.sitofp %824 : vector<8x128xi32> to vector<8x128xf32>
    %826 = arith.addf %820, %825 : vector<8x128xf32>
    %827 = vector.shape_cast %55 : vector<128xf32> to vector<1x128xf32>
    %828 = vector.broadcast %827 : vector<1x128xf32> to vector<8x128xf32>
    %829 = arith.cmpf oge, %681, %828 : vector<8x128xf32>
    %830 = arith.extui %829 : vector<8x128xi1> to vector<8x128xi32>
    %831 = arith.sitofp %830 : vector<8x128xi32> to vector<8x128xf32>
    %832 = arith.addf %826, %831 : vector<8x128xf32>
    %833 = vector.shape_cast %57 : vector<128xf32> to vector<1x128xf32>
    %834 = vector.broadcast %833 : vector<1x128xf32> to vector<8x128xf32>
    %835 = arith.cmpf oge, %681, %834 : vector<8x128xf32>
    %836 = arith.extui %835 : vector<8x128xi1> to vector<8x128xi32>
    %837 = arith.sitofp %836 : vector<8x128xi32> to vector<8x128xf32>
    %838 = arith.addf %832, %837 : vector<8x128xf32>
    %839 = vector.shape_cast %59 : vector<128xf32> to vector<1x128xf32>
    %840 = vector.broadcast %839 : vector<1x128xf32> to vector<8x128xf32>
    %841 = arith.cmpf oge, %681, %840 : vector<8x128xf32>
    %842 = arith.extui %841 : vector<8x128xi1> to vector<8x128xi32>
    %843 = arith.sitofp %842 : vector<8x128xi32> to vector<8x128xf32>
    %844 = arith.addf %838, %843 : vector<8x128xf32>
    %845 = vector.shape_cast %61 : vector<128xf32> to vector<1x128xf32>
    %846 = vector.broadcast %845 : vector<1x128xf32> to vector<8x128xf32>
    %847 = arith.cmpf oge, %681, %846 : vector<8x128xf32>
    %848 = arith.extui %847 : vector<8x128xi1> to vector<8x128xi32>
    %849 = arith.sitofp %848 : vector<8x128xi32> to vector<8x128xf32>
    %850 = arith.addf %844, %849 : vector<8x128xf32>
    %851 = vector.shape_cast %63 : vector<128xf32> to vector<1x128xf32>
    %852 = vector.broadcast %851 : vector<1x128xf32> to vector<8x128xf32>
    %853 = arith.cmpf oge, %681, %852 : vector<8x128xf32>
    %854 = arith.extui %853 : vector<8x128xi1> to vector<8x128xi32>
    %855 = arith.sitofp %854 : vector<8x128xi32> to vector<8x128xf32>
    %856 = arith.addf %850, %855 : vector<8x128xf32>
    %857 = vector.shape_cast %65 : vector<128xf32> to vector<1x128xf32>
    %858 = vector.broadcast %857 : vector<1x128xf32> to vector<8x128xf32>
    %859 = arith.cmpf oge, %681, %858 : vector<8x128xf32>
    %860 = arith.extui %859 : vector<8x128xi1> to vector<8x128xi32>
    %861 = arith.sitofp %860 : vector<8x128xi32> to vector<8x128xf32>
    %862 = arith.addf %856, %861 : vector<8x128xf32>
    %863 = vector.shape_cast %67 : vector<128xf32> to vector<1x128xf32>
    %864 = vector.broadcast %863 : vector<1x128xf32> to vector<8x128xf32>
    %865 = arith.cmpf oge, %681, %864 : vector<8x128xf32>
    %866 = arith.extui %865 : vector<8x128xi1> to vector<8x128xi32>
    %867 = arith.sitofp %866 : vector<8x128xi32> to vector<8x128xf32>
    %868 = arith.addf %862, %867 : vector<8x128xf32>
    %869 = vector.broadcast %4 : vector<1x128xf32> to vector<8x128xf32>
    %870 = arith.mulf %868, %869 : vector<8x128xf32>
    %871 = vector.broadcast %5 : vector<1x128xf32> to vector<8x128xf32>
    %872 = arith.addf %870, %871 : vector<8x128xf32>
    %873 = vector.extract_strided_slice %872 {offsets = [0, 0], sizes = [8, 32], strides = [1, 1]} : vector<8x128xf32> to vector<8x32xf32>
    %874 = vector.extract_strided_slice %872 {offsets = [0, 32], sizes = [8, 32], strides = [1, 1]} : vector<8x128xf32> to vector<8x32xf32>
    %875 = vector.extract_strided_slice %872 {offsets = [0, 64], sizes = [8, 32], strides = [1, 1]} : vector<8x128xf32> to vector<8x32xf32>
    %876 = vector.extract_strided_slice %872 {offsets = [0, 96], sizes = [8, 32], strides = [1, 1]} : vector<8x128xf32> to vector<8x32xf32>
    %877 = arith.mulf %874, %676 : vector<8x32xf32>
    %878 = arith.mulf %873, %875 : vector<8x32xf32>
    %879 = arith.addf %877, %878 : vector<8x32xf32>
    %880 = math.tanh %879 : vector<8x32xf32>
    %881 = arith.mulf %876, %880 : vector<8x32xf32>
    %882 = vector.extract_strided_slice %2 {offsets = [32, 0], sizes = [8, 128], strides = [1, 1]} : vector<64x128xf32> to vector<8x128xf32>
    %cst_51 = arith.constant dense<0.000000e+00> : vector<8x128xf32>
    %883 = tpu.matmul %881, %3, %cst_51 {dimension_numbers = #tpu.dot_dimension_numbers<[1], [0], [0], [1], [0, 0, 1, 1], [], []>} : vector<8x32xf32>, vector<32x128xf32>, vector<8x128xf32> -> vector<8x128xf32>
    %884 = arith.addf %882, %883 : vector<8x128xf32>
    %cst_52 = arith.constant 0.000000e+00 : f32
    %885 = vector.broadcast %cst_52 : f32 to vector<8x128xf32>
    %886 = vector.shape_cast %7 : vector<128xf32> to vector<1x128xf32>
    %887 = vector.broadcast %886 : vector<1x128xf32> to vector<8x128xf32>
    %888 = arith.cmpf oge, %884, %887 : vector<8x128xf32>
    %889 = arith.extui %888 : vector<8x128xi1> to vector<8x128xi32>
    %890 = arith.sitofp %889 : vector<8x128xi32> to vector<8x128xf32>
    %891 = arith.addf %885, %890 : vector<8x128xf32>
    %892 = vector.shape_cast %9 : vector<128xf32> to vector<1x128xf32>
    %893 = vector.broadcast %892 : vector<1x128xf32> to vector<8x128xf32>
    %894 = arith.cmpf oge, %884, %893 : vector<8x128xf32>
    %895 = arith.extui %894 : vector<8x128xi1> to vector<8x128xi32>
    %896 = arith.sitofp %895 : vector<8x128xi32> to vector<8x128xf32>
    %897 = arith.addf %891, %896 : vector<8x128xf32>
    %898 = vector.shape_cast %11 : vector<128xf32> to vector<1x128xf32>
    %899 = vector.broadcast %898 : vector<1x128xf32> to vector<8x128xf32>
    %900 = arith.cmpf oge, %884, %899 : vector<8x128xf32>
    %901 = arith.extui %900 : vector<8x128xi1> to vector<8x128xi32>
    %902 = arith.sitofp %901 : vector<8x128xi32> to vector<8x128xf32>
    %903 = arith.addf %897, %902 : vector<8x128xf32>
    %904 = vector.shape_cast %13 : vector<128xf32> to vector<1x128xf32>
    %905 = vector.broadcast %904 : vector<1x128xf32> to vector<8x128xf32>
    %906 = arith.cmpf oge, %884, %905 : vector<8x128xf32>
    %907 = arith.extui %906 : vector<8x128xi1> to vector<8x128xi32>
    %908 = arith.sitofp %907 : vector<8x128xi32> to vector<8x128xf32>
    %909 = arith.addf %903, %908 : vector<8x128xf32>
    %910 = vector.shape_cast %15 : vector<128xf32> to vector<1x128xf32>
    %911 = vector.broadcast %910 : vector<1x128xf32> to vector<8x128xf32>
    %912 = arith.cmpf oge, %884, %911 : vector<8x128xf32>
    %913 = arith.extui %912 : vector<8x128xi1> to vector<8x128xi32>
    %914 = arith.sitofp %913 : vector<8x128xi32> to vector<8x128xf32>
    %915 = arith.addf %909, %914 : vector<8x128xf32>
    %916 = vector.shape_cast %17 : vector<128xf32> to vector<1x128xf32>
    %917 = vector.broadcast %916 : vector<1x128xf32> to vector<8x128xf32>
    %918 = arith.cmpf oge, %884, %917 : vector<8x128xf32>
    %919 = arith.extui %918 : vector<8x128xi1> to vector<8x128xi32>
    %920 = arith.sitofp %919 : vector<8x128xi32> to vector<8x128xf32>
    %921 = arith.addf %915, %920 : vector<8x128xf32>
    %922 = vector.shape_cast %19 : vector<128xf32> to vector<1x128xf32>
    %923 = vector.broadcast %922 : vector<1x128xf32> to vector<8x128xf32>
    %924 = arith.cmpf oge, %884, %923 : vector<8x128xf32>
    %925 = arith.extui %924 : vector<8x128xi1> to vector<8x128xi32>
    %926 = arith.sitofp %925 : vector<8x128xi32> to vector<8x128xf32>
    %927 = arith.addf %921, %926 : vector<8x128xf32>
    %928 = vector.shape_cast %21 : vector<128xf32> to vector<1x128xf32>
    %929 = vector.broadcast %928 : vector<1x128xf32> to vector<8x128xf32>
    %930 = arith.cmpf oge, %884, %929 : vector<8x128xf32>
    %931 = arith.extui %930 : vector<8x128xi1> to vector<8x128xi32>
    %932 = arith.sitofp %931 : vector<8x128xi32> to vector<8x128xf32>
    %933 = arith.addf %927, %932 : vector<8x128xf32>
    %934 = vector.shape_cast %23 : vector<128xf32> to vector<1x128xf32>
    %935 = vector.broadcast %934 : vector<1x128xf32> to vector<8x128xf32>
    %936 = arith.cmpf oge, %884, %935 : vector<8x128xf32>
    %937 = arith.extui %936 : vector<8x128xi1> to vector<8x128xi32>
    %938 = arith.sitofp %937 : vector<8x128xi32> to vector<8x128xf32>
    %939 = arith.addf %933, %938 : vector<8x128xf32>
    %940 = vector.shape_cast %25 : vector<128xf32> to vector<1x128xf32>
    %941 = vector.broadcast %940 : vector<1x128xf32> to vector<8x128xf32>
    %942 = arith.cmpf oge, %884, %941 : vector<8x128xf32>
    %943 = arith.extui %942 : vector<8x128xi1> to vector<8x128xi32>
    %944 = arith.sitofp %943 : vector<8x128xi32> to vector<8x128xf32>
    %945 = arith.addf %939, %944 : vector<8x128xf32>
    %946 = vector.shape_cast %27 : vector<128xf32> to vector<1x128xf32>
    %947 = vector.broadcast %946 : vector<1x128xf32> to vector<8x128xf32>
    %948 = arith.cmpf oge, %884, %947 : vector<8x128xf32>
    %949 = arith.extui %948 : vector<8x128xi1> to vector<8x128xi32>
    %950 = arith.sitofp %949 : vector<8x128xi32> to vector<8x128xf32>
    %951 = arith.addf %945, %950 : vector<8x128xf32>
    %952 = vector.shape_cast %29 : vector<128xf32> to vector<1x128xf32>
    %953 = vector.broadcast %952 : vector<1x128xf32> to vector<8x128xf32>
    %954 = arith.cmpf oge, %884, %953 : vector<8x128xf32>
    %955 = arith.extui %954 : vector<8x128xi1> to vector<8x128xi32>
    %956 = arith.sitofp %955 : vector<8x128xi32> to vector<8x128xf32>
    %957 = arith.addf %951, %956 : vector<8x128xf32>
    %958 = vector.shape_cast %31 : vector<128xf32> to vector<1x128xf32>
    %959 = vector.broadcast %958 : vector<1x128xf32> to vector<8x128xf32>
    %960 = arith.cmpf oge, %884, %959 : vector<8x128xf32>
    %961 = arith.extui %960 : vector<8x128xi1> to vector<8x128xi32>
    %962 = arith.sitofp %961 : vector<8x128xi32> to vector<8x128xf32>
    %963 = arith.addf %957, %962 : vector<8x128xf32>
    %964 = vector.shape_cast %33 : vector<128xf32> to vector<1x128xf32>
    %965 = vector.broadcast %964 : vector<1x128xf32> to vector<8x128xf32>
    %966 = arith.cmpf oge, %884, %965 : vector<8x128xf32>
    %967 = arith.extui %966 : vector<8x128xi1> to vector<8x128xi32>
    %968 = arith.sitofp %967 : vector<8x128xi32> to vector<8x128xf32>
    %969 = arith.addf %963, %968 : vector<8x128xf32>
    %970 = vector.shape_cast %35 : vector<128xf32> to vector<1x128xf32>
    %971 = vector.broadcast %970 : vector<1x128xf32> to vector<8x128xf32>
    %972 = arith.cmpf oge, %884, %971 : vector<8x128xf32>
    %973 = arith.extui %972 : vector<8x128xi1> to vector<8x128xi32>
    %974 = arith.sitofp %973 : vector<8x128xi32> to vector<8x128xf32>
    %975 = arith.addf %969, %974 : vector<8x128xf32>
    %976 = vector.shape_cast %37 : vector<128xf32> to vector<1x128xf32>
    %977 = vector.broadcast %976 : vector<1x128xf32> to vector<8x128xf32>
    %978 = arith.cmpf oge, %884, %977 : vector<8x128xf32>
    %979 = arith.extui %978 : vector<8x128xi1> to vector<8x128xi32>
    %980 = arith.sitofp %979 : vector<8x128xi32> to vector<8x128xf32>
    %981 = arith.addf %975, %980 : vector<8x128xf32>
    %982 = vector.shape_cast %39 : vector<128xf32> to vector<1x128xf32>
    %983 = vector.broadcast %982 : vector<1x128xf32> to vector<8x128xf32>
    %984 = arith.cmpf oge, %884, %983 : vector<8x128xf32>
    %985 = arith.extui %984 : vector<8x128xi1> to vector<8x128xi32>
    %986 = arith.sitofp %985 : vector<8x128xi32> to vector<8x128xf32>
    %987 = arith.addf %981, %986 : vector<8x128xf32>
    %988 = vector.shape_cast %41 : vector<128xf32> to vector<1x128xf32>
    %989 = vector.broadcast %988 : vector<1x128xf32> to vector<8x128xf32>
    %990 = arith.cmpf oge, %884, %989 : vector<8x128xf32>
    %991 = arith.extui %990 : vector<8x128xi1> to vector<8x128xi32>
    %992 = arith.sitofp %991 : vector<8x128xi32> to vector<8x128xf32>
    %993 = arith.addf %987, %992 : vector<8x128xf32>
    %994 = vector.shape_cast %43 : vector<128xf32> to vector<1x128xf32>
    %995 = vector.broadcast %994 : vector<1x128xf32> to vector<8x128xf32>
    %996 = arith.cmpf oge, %884, %995 : vector<8x128xf32>
    %997 = arith.extui %996 : vector<8x128xi1> to vector<8x128xi32>
    %998 = arith.sitofp %997 : vector<8x128xi32> to vector<8x128xf32>
    %999 = arith.addf %993, %998 : vector<8x128xf32>
    %1000 = vector.shape_cast %45 : vector<128xf32> to vector<1x128xf32>
    %1001 = vector.broadcast %1000 : vector<1x128xf32> to vector<8x128xf32>
    %1002 = arith.cmpf oge, %884, %1001 : vector<8x128xf32>
    %1003 = arith.extui %1002 : vector<8x128xi1> to vector<8x128xi32>
    %1004 = arith.sitofp %1003 : vector<8x128xi32> to vector<8x128xf32>
    %1005 = arith.addf %999, %1004 : vector<8x128xf32>
    %1006 = vector.shape_cast %47 : vector<128xf32> to vector<1x128xf32>
    %1007 = vector.broadcast %1006 : vector<1x128xf32> to vector<8x128xf32>
    %1008 = arith.cmpf oge, %884, %1007 : vector<8x128xf32>
    %1009 = arith.extui %1008 : vector<8x128xi1> to vector<8x128xi32>
    %1010 = arith.sitofp %1009 : vector<8x128xi32> to vector<8x128xf32>
    %1011 = arith.addf %1005, %1010 : vector<8x128xf32>
    %1012 = vector.shape_cast %49 : vector<128xf32> to vector<1x128xf32>
    %1013 = vector.broadcast %1012 : vector<1x128xf32> to vector<8x128xf32>
    %1014 = arith.cmpf oge, %884, %1013 : vector<8x128xf32>
    %1015 = arith.extui %1014 : vector<8x128xi1> to vector<8x128xi32>
    %1016 = arith.sitofp %1015 : vector<8x128xi32> to vector<8x128xf32>
    %1017 = arith.addf %1011, %1016 : vector<8x128xf32>
    %1018 = vector.shape_cast %51 : vector<128xf32> to vector<1x128xf32>
    %1019 = vector.broadcast %1018 : vector<1x128xf32> to vector<8x128xf32>
    %1020 = arith.cmpf oge, %884, %1019 : vector<8x128xf32>
    %1021 = arith.extui %1020 : vector<8x128xi1> to vector<8x128xi32>
    %1022 = arith.sitofp %1021 : vector<8x128xi32> to vector<8x128xf32>
    %1023 = arith.addf %1017, %1022 : vector<8x128xf32>
    %1024 = vector.shape_cast %53 : vector<128xf32> to vector<1x128xf32>
    %1025 = vector.broadcast %1024 : vector<1x128xf32> to vector<8x128xf32>
    %1026 = arith.cmpf oge, %884, %1025 : vector<8x128xf32>
    %1027 = arith.extui %1026 : vector<8x128xi1> to vector<8x128xi32>
    %1028 = arith.sitofp %1027 : vector<8x128xi32> to vector<8x128xf32>
    %1029 = arith.addf %1023, %1028 : vector<8x128xf32>
    %1030 = vector.shape_cast %55 : vector<128xf32> to vector<1x128xf32>
    %1031 = vector.broadcast %1030 : vector<1x128xf32> to vector<8x128xf32>
    %1032 = arith.cmpf oge, %884, %1031 : vector<8x128xf32>
    %1033 = arith.extui %1032 : vector<8x128xi1> to vector<8x128xi32>
    %1034 = arith.sitofp %1033 : vector<8x128xi32> to vector<8x128xf32>
    %1035 = arith.addf %1029, %1034 : vector<8x128xf32>
    %1036 = vector.shape_cast %57 : vector<128xf32> to vector<1x128xf32>
    %1037 = vector.broadcast %1036 : vector<1x128xf32> to vector<8x128xf32>
    %1038 = arith.cmpf oge, %884, %1037 : vector<8x128xf32>
    %1039 = arith.extui %1038 : vector<8x128xi1> to vector<8x128xi32>
    %1040 = arith.sitofp %1039 : vector<8x128xi32> to vector<8x128xf32>
    %1041 = arith.addf %1035, %1040 : vector<8x128xf32>
    %1042 = vector.shape_cast %59 : vector<128xf32> to vector<1x128xf32>
    %1043 = vector.broadcast %1042 : vector<1x128xf32> to vector<8x128xf32>
    %1044 = arith.cmpf oge, %884, %1043 : vector<8x128xf32>
    %1045 = arith.extui %1044 : vector<8x128xi1> to vector<8x128xi32>
    %1046 = arith.sitofp %1045 : vector<8x128xi32> to vector<8x128xf32>
    %1047 = arith.addf %1041, %1046 : vector<8x128xf32>
    %1048 = vector.shape_cast %61 : vector<128xf32> to vector<1x128xf32>
    %1049 = vector.broadcast %1048 : vector<1x128xf32> to vector<8x128xf32>
    %1050 = arith.cmpf oge, %884, %1049 : vector<8x128xf32>
    %1051 = arith.extui %1050 : vector<8x128xi1> to vector<8x128xi32>
    %1052 = arith.sitofp %1051 : vector<8x128xi32> to vector<8x128xf32>
    %1053 = arith.addf %1047, %1052 : vector<8x128xf32>
    %1054 = vector.shape_cast %63 : vector<128xf32> to vector<1x128xf32>
    %1055 = vector.broadcast %1054 : vector<1x128xf32> to vector<8x128xf32>
    %1056 = arith.cmpf oge, %884, %1055 : vector<8x128xf32>
    %1057 = arith.extui %1056 : vector<8x128xi1> to vector<8x128xi32>
    %1058 = arith.sitofp %1057 : vector<8x128xi32> to vector<8x128xf32>
    %1059 = arith.addf %1053, %1058 : vector<8x128xf32>
    %1060 = vector.shape_cast %65 : vector<128xf32> to vector<1x128xf32>
    %1061 = vector.broadcast %1060 : vector<1x128xf32> to vector<8x128xf32>
    %1062 = arith.cmpf oge, %884, %1061 : vector<8x128xf32>
    %1063 = arith.extui %1062 : vector<8x128xi1> to vector<8x128xi32>
    %1064 = arith.sitofp %1063 : vector<8x128xi32> to vector<8x128xf32>
    %1065 = arith.addf %1059, %1064 : vector<8x128xf32>
    %1066 = vector.shape_cast %67 : vector<128xf32> to vector<1x128xf32>
    %1067 = vector.broadcast %1066 : vector<1x128xf32> to vector<8x128xf32>
    %1068 = arith.cmpf oge, %884, %1067 : vector<8x128xf32>
    %1069 = arith.extui %1068 : vector<8x128xi1> to vector<8x128xi32>
    %1070 = arith.sitofp %1069 : vector<8x128xi32> to vector<8x128xf32>
    %1071 = arith.addf %1065, %1070 : vector<8x128xf32>
    %1072 = vector.broadcast %4 : vector<1x128xf32> to vector<8x128xf32>
    %1073 = arith.mulf %1071, %1072 : vector<8x128xf32>
    %1074 = vector.broadcast %5 : vector<1x128xf32> to vector<8x128xf32>
    %1075 = arith.addf %1073, %1074 : vector<8x128xf32>
    %1076 = vector.extract_strided_slice %1075 {offsets = [0, 0], sizes = [8, 32], strides = [1, 1]} : vector<8x128xf32> to vector<8x32xf32>
    %1077 = vector.extract_strided_slice %1075 {offsets = [0, 32], sizes = [8, 32], strides = [1, 1]} : vector<8x128xf32> to vector<8x32xf32>
    %1078 = vector.extract_strided_slice %1075 {offsets = [0, 64], sizes = [8, 32], strides = [1, 1]} : vector<8x128xf32> to vector<8x32xf32>
    %1079 = vector.extract_strided_slice %1075 {offsets = [0, 96], sizes = [8, 32], strides = [1, 1]} : vector<8x128xf32> to vector<8x32xf32>
    %1080 = arith.mulf %1077, %879 : vector<8x32xf32>
    %1081 = arith.mulf %1076, %1078 : vector<8x32xf32>
    %1082 = arith.addf %1080, %1081 : vector<8x32xf32>
    %1083 = math.tanh %1082 : vector<8x32xf32>
    %1084 = arith.mulf %1079, %1083 : vector<8x32xf32>
    %1085 = vector.extract_strided_slice %2 {offsets = [40, 0], sizes = [8, 128], strides = [1, 1]} : vector<64x128xf32> to vector<8x128xf32>
    %cst_53 = arith.constant dense<0.000000e+00> : vector<8x128xf32>
    %1086 = tpu.matmul %1084, %3, %cst_53 {dimension_numbers = #tpu.dot_dimension_numbers<[1], [0], [0], [1], [0, 0, 1, 1], [], []>} : vector<8x32xf32>, vector<32x128xf32>, vector<8x128xf32> -> vector<8x128xf32>
    %1087 = arith.addf %1085, %1086 : vector<8x128xf32>
    %cst_54 = arith.constant 0.000000e+00 : f32
    %1088 = vector.broadcast %cst_54 : f32 to vector<8x128xf32>
    %1089 = vector.shape_cast %7 : vector<128xf32> to vector<1x128xf32>
    %1090 = vector.broadcast %1089 : vector<1x128xf32> to vector<8x128xf32>
    %1091 = arith.cmpf oge, %1087, %1090 : vector<8x128xf32>
    %1092 = arith.extui %1091 : vector<8x128xi1> to vector<8x128xi32>
    %1093 = arith.sitofp %1092 : vector<8x128xi32> to vector<8x128xf32>
    %1094 = arith.addf %1088, %1093 : vector<8x128xf32>
    %1095 = vector.shape_cast %9 : vector<128xf32> to vector<1x128xf32>
    %1096 = vector.broadcast %1095 : vector<1x128xf32> to vector<8x128xf32>
    %1097 = arith.cmpf oge, %1087, %1096 : vector<8x128xf32>
    %1098 = arith.extui %1097 : vector<8x128xi1> to vector<8x128xi32>
    %1099 = arith.sitofp %1098 : vector<8x128xi32> to vector<8x128xf32>
    %1100 = arith.addf %1094, %1099 : vector<8x128xf32>
    %1101 = vector.shape_cast %11 : vector<128xf32> to vector<1x128xf32>
    %1102 = vector.broadcast %1101 : vector<1x128xf32> to vector<8x128xf32>
    %1103 = arith.cmpf oge, %1087, %1102 : vector<8x128xf32>
    %1104 = arith.extui %1103 : vector<8x128xi1> to vector<8x128xi32>
    %1105 = arith.sitofp %1104 : vector<8x128xi32> to vector<8x128xf32>
    %1106 = arith.addf %1100, %1105 : vector<8x128xf32>
    %1107 = vector.shape_cast %13 : vector<128xf32> to vector<1x128xf32>
    %1108 = vector.broadcast %1107 : vector<1x128xf32> to vector<8x128xf32>
    %1109 = arith.cmpf oge, %1087, %1108 : vector<8x128xf32>
    %1110 = arith.extui %1109 : vector<8x128xi1> to vector<8x128xi32>
    %1111 = arith.sitofp %1110 : vector<8x128xi32> to vector<8x128xf32>
    %1112 = arith.addf %1106, %1111 : vector<8x128xf32>
    %1113 = vector.shape_cast %15 : vector<128xf32> to vector<1x128xf32>
    %1114 = vector.broadcast %1113 : vector<1x128xf32> to vector<8x128xf32>
    %1115 = arith.cmpf oge, %1087, %1114 : vector<8x128xf32>
    %1116 = arith.extui %1115 : vector<8x128xi1> to vector<8x128xi32>
    %1117 = arith.sitofp %1116 : vector<8x128xi32> to vector<8x128xf32>
    %1118 = arith.addf %1112, %1117 : vector<8x128xf32>
    %1119 = vector.shape_cast %17 : vector<128xf32> to vector<1x128xf32>
    %1120 = vector.broadcast %1119 : vector<1x128xf32> to vector<8x128xf32>
    %1121 = arith.cmpf oge, %1087, %1120 : vector<8x128xf32>
    %1122 = arith.extui %1121 : vector<8x128xi1> to vector<8x128xi32>
    %1123 = arith.sitofp %1122 : vector<8x128xi32> to vector<8x128xf32>
    %1124 = arith.addf %1118, %1123 : vector<8x128xf32>
    %1125 = vector.shape_cast %19 : vector<128xf32> to vector<1x128xf32>
    %1126 = vector.broadcast %1125 : vector<1x128xf32> to vector<8x128xf32>
    %1127 = arith.cmpf oge, %1087, %1126 : vector<8x128xf32>
    %1128 = arith.extui %1127 : vector<8x128xi1> to vector<8x128xi32>
    %1129 = arith.sitofp %1128 : vector<8x128xi32> to vector<8x128xf32>
    %1130 = arith.addf %1124, %1129 : vector<8x128xf32>
    %1131 = vector.shape_cast %21 : vector<128xf32> to vector<1x128xf32>
    %1132 = vector.broadcast %1131 : vector<1x128xf32> to vector<8x128xf32>
    %1133 = arith.cmpf oge, %1087, %1132 : vector<8x128xf32>
    %1134 = arith.extui %1133 : vector<8x128xi1> to vector<8x128xi32>
    %1135 = arith.sitofp %1134 : vector<8x128xi32> to vector<8x128xf32>
    %1136 = arith.addf %1130, %1135 : vector<8x128xf32>
    %1137 = vector.shape_cast %23 : vector<128xf32> to vector<1x128xf32>
    %1138 = vector.broadcast %1137 : vector<1x128xf32> to vector<8x128xf32>
    %1139 = arith.cmpf oge, %1087, %1138 : vector<8x128xf32>
    %1140 = arith.extui %1139 : vector<8x128xi1> to vector<8x128xi32>
    %1141 = arith.sitofp %1140 : vector<8x128xi32> to vector<8x128xf32>
    %1142 = arith.addf %1136, %1141 : vector<8x128xf32>
    %1143 = vector.shape_cast %25 : vector<128xf32> to vector<1x128xf32>
    %1144 = vector.broadcast %1143 : vector<1x128xf32> to vector<8x128xf32>
    %1145 = arith.cmpf oge, %1087, %1144 : vector<8x128xf32>
    %1146 = arith.extui %1145 : vector<8x128xi1> to vector<8x128xi32>
    %1147 = arith.sitofp %1146 : vector<8x128xi32> to vector<8x128xf32>
    %1148 = arith.addf %1142, %1147 : vector<8x128xf32>
    %1149 = vector.shape_cast %27 : vector<128xf32> to vector<1x128xf32>
    %1150 = vector.broadcast %1149 : vector<1x128xf32> to vector<8x128xf32>
    %1151 = arith.cmpf oge, %1087, %1150 : vector<8x128xf32>
    %1152 = arith.extui %1151 : vector<8x128xi1> to vector<8x128xi32>
    %1153 = arith.sitofp %1152 : vector<8x128xi32> to vector<8x128xf32>
    %1154 = arith.addf %1148, %1153 : vector<8x128xf32>
    %1155 = vector.shape_cast %29 : vector<128xf32> to vector<1x128xf32>
    %1156 = vector.broadcast %1155 : vector<1x128xf32> to vector<8x128xf32>
    %1157 = arith.cmpf oge, %1087, %1156 : vector<8x128xf32>
    %1158 = arith.extui %1157 : vector<8x128xi1> to vector<8x128xi32>
    %1159 = arith.sitofp %1158 : vector<8x128xi32> to vector<8x128xf32>
    %1160 = arith.addf %1154, %1159 : vector<8x128xf32>
    %1161 = vector.shape_cast %31 : vector<128xf32> to vector<1x128xf32>
    %1162 = vector.broadcast %1161 : vector<1x128xf32> to vector<8x128xf32>
    %1163 = arith.cmpf oge, %1087, %1162 : vector<8x128xf32>
    %1164 = arith.extui %1163 : vector<8x128xi1> to vector<8x128xi32>
    %1165 = arith.sitofp %1164 : vector<8x128xi32> to vector<8x128xf32>
    %1166 = arith.addf %1160, %1165 : vector<8x128xf32>
    %1167 = vector.shape_cast %33 : vector<128xf32> to vector<1x128xf32>
    %1168 = vector.broadcast %1167 : vector<1x128xf32> to vector<8x128xf32>
    %1169 = arith.cmpf oge, %1087, %1168 : vector<8x128xf32>
    %1170 = arith.extui %1169 : vector<8x128xi1> to vector<8x128xi32>
    %1171 = arith.sitofp %1170 : vector<8x128xi32> to vector<8x128xf32>
    %1172 = arith.addf %1166, %1171 : vector<8x128xf32>
    %1173 = vector.shape_cast %35 : vector<128xf32> to vector<1x128xf32>
    %1174 = vector.broadcast %1173 : vector<1x128xf32> to vector<8x128xf32>
    %1175 = arith.cmpf oge, %1087, %1174 : vector<8x128xf32>
    %1176 = arith.extui %1175 : vector<8x128xi1> to vector<8x128xi32>
    %1177 = arith.sitofp %1176 : vector<8x128xi32> to vector<8x128xf32>
    %1178 = arith.addf %1172, %1177 : vector<8x128xf32>
    %1179 = vector.shape_cast %37 : vector<128xf32> to vector<1x128xf32>
    %1180 = vector.broadcast %1179 : vector<1x128xf32> to vector<8x128xf32>
    %1181 = arith.cmpf oge, %1087, %1180 : vector<8x128xf32>
    %1182 = arith.extui %1181 : vector<8x128xi1> to vector<8x128xi32>
    %1183 = arith.sitofp %1182 : vector<8x128xi32> to vector<8x128xf32>
    %1184 = arith.addf %1178, %1183 : vector<8x128xf32>
    %1185 = vector.shape_cast %39 : vector<128xf32> to vector<1x128xf32>
    %1186 = vector.broadcast %1185 : vector<1x128xf32> to vector<8x128xf32>
    %1187 = arith.cmpf oge, %1087, %1186 : vector<8x128xf32>
    %1188 = arith.extui %1187 : vector<8x128xi1> to vector<8x128xi32>
    %1189 = arith.sitofp %1188 : vector<8x128xi32> to vector<8x128xf32>
    %1190 = arith.addf %1184, %1189 : vector<8x128xf32>
    %1191 = vector.shape_cast %41 : vector<128xf32> to vector<1x128xf32>
    %1192 = vector.broadcast %1191 : vector<1x128xf32> to vector<8x128xf32>
    %1193 = arith.cmpf oge, %1087, %1192 : vector<8x128xf32>
    %1194 = arith.extui %1193 : vector<8x128xi1> to vector<8x128xi32>
    %1195 = arith.sitofp %1194 : vector<8x128xi32> to vector<8x128xf32>
    %1196 = arith.addf %1190, %1195 : vector<8x128xf32>
    %1197 = vector.shape_cast %43 : vector<128xf32> to vector<1x128xf32>
    %1198 = vector.broadcast %1197 : vector<1x128xf32> to vector<8x128xf32>
    %1199 = arith.cmpf oge, %1087, %1198 : vector<8x128xf32>
    %1200 = arith.extui %1199 : vector<8x128xi1> to vector<8x128xi32>
    %1201 = arith.sitofp %1200 : vector<8x128xi32> to vector<8x128xf32>
    %1202 = arith.addf %1196, %1201 : vector<8x128xf32>
    %1203 = vector.shape_cast %45 : vector<128xf32> to vector<1x128xf32>
    %1204 = vector.broadcast %1203 : vector<1x128xf32> to vector<8x128xf32>
    %1205 = arith.cmpf oge, %1087, %1204 : vector<8x128xf32>
    %1206 = arith.extui %1205 : vector<8x128xi1> to vector<8x128xi32>
    %1207 = arith.sitofp %1206 : vector<8x128xi32> to vector<8x128xf32>
    %1208 = arith.addf %1202, %1207 : vector<8x128xf32>
    %1209 = vector.shape_cast %47 : vector<128xf32> to vector<1x128xf32>
    %1210 = vector.broadcast %1209 : vector<1x128xf32> to vector<8x128xf32>
    %1211 = arith.cmpf oge, %1087, %1210 : vector<8x128xf32>
    %1212 = arith.extui %1211 : vector<8x128xi1> to vector<8x128xi32>
    %1213 = arith.sitofp %1212 : vector<8x128xi32> to vector<8x128xf32>
    %1214 = arith.addf %1208, %1213 : vector<8x128xf32>
    %1215 = vector.shape_cast %49 : vector<128xf32> to vector<1x128xf32>
    %1216 = vector.broadcast %1215 : vector<1x128xf32> to vector<8x128xf32>
    %1217 = arith.cmpf oge, %1087, %1216 : vector<8x128xf32>
    %1218 = arith.extui %1217 : vector<8x128xi1> to vector<8x128xi32>
    %1219 = arith.sitofp %1218 : vector<8x128xi32> to vector<8x128xf32>
    %1220 = arith.addf %1214, %1219 : vector<8x128xf32>
    %1221 = vector.shape_cast %51 : vector<128xf32> to vector<1x128xf32>
    %1222 = vector.broadcast %1221 : vector<1x128xf32> to vector<8x128xf32>
    %1223 = arith.cmpf oge, %1087, %1222 : vector<8x128xf32>
    %1224 = arith.extui %1223 : vector<8x128xi1> to vector<8x128xi32>
    %1225 = arith.sitofp %1224 : vector<8x128xi32> to vector<8x128xf32>
    %1226 = arith.addf %1220, %1225 : vector<8x128xf32>
    %1227 = vector.shape_cast %53 : vector<128xf32> to vector<1x128xf32>
    %1228 = vector.broadcast %1227 : vector<1x128xf32> to vector<8x128xf32>
    %1229 = arith.cmpf oge, %1087, %1228 : vector<8x128xf32>
    %1230 = arith.extui %1229 : vector<8x128xi1> to vector<8x128xi32>
    %1231 = arith.sitofp %1230 : vector<8x128xi32> to vector<8x128xf32>
    %1232 = arith.addf %1226, %1231 : vector<8x128xf32>
    %1233 = vector.shape_cast %55 : vector<128xf32> to vector<1x128xf32>
    %1234 = vector.broadcast %1233 : vector<1x128xf32> to vector<8x128xf32>
    %1235 = arith.cmpf oge, %1087, %1234 : vector<8x128xf32>
    %1236 = arith.extui %1235 : vector<8x128xi1> to vector<8x128xi32>
    %1237 = arith.sitofp %1236 : vector<8x128xi32> to vector<8x128xf32>
    %1238 = arith.addf %1232, %1237 : vector<8x128xf32>
    %1239 = vector.shape_cast %57 : vector<128xf32> to vector<1x128xf32>
    %1240 = vector.broadcast %1239 : vector<1x128xf32> to vector<8x128xf32>
    %1241 = arith.cmpf oge, %1087, %1240 : vector<8x128xf32>
    %1242 = arith.extui %1241 : vector<8x128xi1> to vector<8x128xi32>
    %1243 = arith.sitofp %1242 : vector<8x128xi32> to vector<8x128xf32>
    %1244 = arith.addf %1238, %1243 : vector<8x128xf32>
    %1245 = vector.shape_cast %59 : vector<128xf32> to vector<1x128xf32>
    %1246 = vector.broadcast %1245 : vector<1x128xf32> to vector<8x128xf32>
    %1247 = arith.cmpf oge, %1087, %1246 : vector<8x128xf32>
    %1248 = arith.extui %1247 : vector<8x128xi1> to vector<8x128xi32>
    %1249 = arith.sitofp %1248 : vector<8x128xi32> to vector<8x128xf32>
    %1250 = arith.addf %1244, %1249 : vector<8x128xf32>
    %1251 = vector.shape_cast %61 : vector<128xf32> to vector<1x128xf32>
    %1252 = vector.broadcast %1251 : vector<1x128xf32> to vector<8x128xf32>
    %1253 = arith.cmpf oge, %1087, %1252 : vector<8x128xf32>
    %1254 = arith.extui %1253 : vector<8x128xi1> to vector<8x128xi32>
    %1255 = arith.sitofp %1254 : vector<8x128xi32> to vector<8x128xf32>
    %1256 = arith.addf %1250, %1255 : vector<8x128xf32>
    %1257 = vector.shape_cast %63 : vector<128xf32> to vector<1x128xf32>
    %1258 = vector.broadcast %1257 : vector<1x128xf32> to vector<8x128xf32>
    %1259 = arith.cmpf oge, %1087, %1258 : vector<8x128xf32>
    %1260 = arith.extui %1259 : vector<8x128xi1> to vector<8x128xi32>
    %1261 = arith.sitofp %1260 : vector<8x128xi32> to vector<8x128xf32>
    %1262 = arith.addf %1256, %1261 : vector<8x128xf32>
    %1263 = vector.shape_cast %65 : vector<128xf32> to vector<1x128xf32>
    %1264 = vector.broadcast %1263 : vector<1x128xf32> to vector<8x128xf32>
    %1265 = arith.cmpf oge, %1087, %1264 : vector<8x128xf32>
    %1266 = arith.extui %1265 : vector<8x128xi1> to vector<8x128xi32>
    %1267 = arith.sitofp %1266 : vector<8x128xi32> to vector<8x128xf32>
    %1268 = arith.addf %1262, %1267 : vector<8x128xf32>
    %1269 = vector.shape_cast %67 : vector<128xf32> to vector<1x128xf32>
    %1270 = vector.broadcast %1269 : vector<1x128xf32> to vector<8x128xf32>
    %1271 = arith.cmpf oge, %1087, %1270 : vector<8x128xf32>
    %1272 = arith.extui %1271 : vector<8x128xi1> to vector<8x128xi32>
    %1273 = arith.sitofp %1272 : vector<8x128xi32> to vector<8x128xf32>
    %1274 = arith.addf %1268, %1273 : vector<8x128xf32>
    %1275 = vector.broadcast %4 : vector<1x128xf32> to vector<8x128xf32>
    %1276 = arith.mulf %1274, %1275 : vector<8x128xf32>
    %1277 = vector.broadcast %5 : vector<1x128xf32> to vector<8x128xf32>
    %1278 = arith.addf %1276, %1277 : vector<8x128xf32>
    %1279 = vector.extract_strided_slice %1278 {offsets = [0, 0], sizes = [8, 32], strides = [1, 1]} : vector<8x128xf32> to vector<8x32xf32>
    %1280 = vector.extract_strided_slice %1278 {offsets = [0, 32], sizes = [8, 32], strides = [1, 1]} : vector<8x128xf32> to vector<8x32xf32>
    %1281 = vector.extract_strided_slice %1278 {offsets = [0, 64], sizes = [8, 32], strides = [1, 1]} : vector<8x128xf32> to vector<8x32xf32>
    %1282 = vector.extract_strided_slice %1278 {offsets = [0, 96], sizes = [8, 32], strides = [1, 1]} : vector<8x128xf32> to vector<8x32xf32>
    %1283 = arith.mulf %1280, %1082 : vector<8x32xf32>
    %1284 = arith.mulf %1279, %1281 : vector<8x32xf32>
    %1285 = arith.addf %1283, %1284 : vector<8x32xf32>
    %1286 = math.tanh %1285 : vector<8x32xf32>
    %1287 = arith.mulf %1282, %1286 : vector<8x32xf32>
    %1288 = vector.extract_strided_slice %2 {offsets = [48, 0], sizes = [8, 128], strides = [1, 1]} : vector<64x128xf32> to vector<8x128xf32>
    %cst_55 = arith.constant dense<0.000000e+00> : vector<8x128xf32>
    %1289 = tpu.matmul %1287, %3, %cst_55 {dimension_numbers = #tpu.dot_dimension_numbers<[1], [0], [0], [1], [0, 0, 1, 1], [], []>} : vector<8x32xf32>, vector<32x128xf32>, vector<8x128xf32> -> vector<8x128xf32>
    %1290 = arith.addf %1288, %1289 : vector<8x128xf32>
    %cst_56 = arith.constant 0.000000e+00 : f32
    %1291 = vector.broadcast %cst_56 : f32 to vector<8x128xf32>
    %1292 = vector.shape_cast %7 : vector<128xf32> to vector<1x128xf32>
    %1293 = vector.broadcast %1292 : vector<1x128xf32> to vector<8x128xf32>
    %1294 = arith.cmpf oge, %1290, %1293 : vector<8x128xf32>
    %1295 = arith.extui %1294 : vector<8x128xi1> to vector<8x128xi32>
    %1296 = arith.sitofp %1295 : vector<8x128xi32> to vector<8x128xf32>
    %1297 = arith.addf %1291, %1296 : vector<8x128xf32>
    %1298 = vector.shape_cast %9 : vector<128xf32> to vector<1x128xf32>
    %1299 = vector.broadcast %1298 : vector<1x128xf32> to vector<8x128xf32>
    %1300 = arith.cmpf oge, %1290, %1299 : vector<8x128xf32>
    %1301 = arith.extui %1300 : vector<8x128xi1> to vector<8x128xi32>
    %1302 = arith.sitofp %1301 : vector<8x128xi32> to vector<8x128xf32>
    %1303 = arith.addf %1297, %1302 : vector<8x128xf32>
    %1304 = vector.shape_cast %11 : vector<128xf32> to vector<1x128xf32>
    %1305 = vector.broadcast %1304 : vector<1x128xf32> to vector<8x128xf32>
    %1306 = arith.cmpf oge, %1290, %1305 : vector<8x128xf32>
    %1307 = arith.extui %1306 : vector<8x128xi1> to vector<8x128xi32>
    %1308 = arith.sitofp %1307 : vector<8x128xi32> to vector<8x128xf32>
    %1309 = arith.addf %1303, %1308 : vector<8x128xf32>
    %1310 = vector.shape_cast %13 : vector<128xf32> to vector<1x128xf32>
    %1311 = vector.broadcast %1310 : vector<1x128xf32> to vector<8x128xf32>
    %1312 = arith.cmpf oge, %1290, %1311 : vector<8x128xf32>
    %1313 = arith.extui %1312 : vector<8x128xi1> to vector<8x128xi32>
    %1314 = arith.sitofp %1313 : vector<8x128xi32> to vector<8x128xf32>
    %1315 = arith.addf %1309, %1314 : vector<8x128xf32>
    %1316 = vector.shape_cast %15 : vector<128xf32> to vector<1x128xf32>
    %1317 = vector.broadcast %1316 : vector<1x128xf32> to vector<8x128xf32>
    %1318 = arith.cmpf oge, %1290, %1317 : vector<8x128xf32>
    %1319 = arith.extui %1318 : vector<8x128xi1> to vector<8x128xi32>
    %1320 = arith.sitofp %1319 : vector<8x128xi32> to vector<8x128xf32>
    %1321 = arith.addf %1315, %1320 : vector<8x128xf32>
    %1322 = vector.shape_cast %17 : vector<128xf32> to vector<1x128xf32>
    %1323 = vector.broadcast %1322 : vector<1x128xf32> to vector<8x128xf32>
    %1324 = arith.cmpf oge, %1290, %1323 : vector<8x128xf32>
    %1325 = arith.extui %1324 : vector<8x128xi1> to vector<8x128xi32>
    %1326 = arith.sitofp %1325 : vector<8x128xi32> to vector<8x128xf32>
    %1327 = arith.addf %1321, %1326 : vector<8x128xf32>
    %1328 = vector.shape_cast %19 : vector<128xf32> to vector<1x128xf32>
    %1329 = vector.broadcast %1328 : vector<1x128xf32> to vector<8x128xf32>
    %1330 = arith.cmpf oge, %1290, %1329 : vector<8x128xf32>
    %1331 = arith.extui %1330 : vector<8x128xi1> to vector<8x128xi32>
    %1332 = arith.sitofp %1331 : vector<8x128xi32> to vector<8x128xf32>
    %1333 = arith.addf %1327, %1332 : vector<8x128xf32>
    %1334 = vector.shape_cast %21 : vector<128xf32> to vector<1x128xf32>
    %1335 = vector.broadcast %1334 : vector<1x128xf32> to vector<8x128xf32>
    %1336 = arith.cmpf oge, %1290, %1335 : vector<8x128xf32>
    %1337 = arith.extui %1336 : vector<8x128xi1> to vector<8x128xi32>
    %1338 = arith.sitofp %1337 : vector<8x128xi32> to vector<8x128xf32>
    %1339 = arith.addf %1333, %1338 : vector<8x128xf32>
    %1340 = vector.shape_cast %23 : vector<128xf32> to vector<1x128xf32>
    %1341 = vector.broadcast %1340 : vector<1x128xf32> to vector<8x128xf32>
    %1342 = arith.cmpf oge, %1290, %1341 : vector<8x128xf32>
    %1343 = arith.extui %1342 : vector<8x128xi1> to vector<8x128xi32>
    %1344 = arith.sitofp %1343 : vector<8x128xi32> to vector<8x128xf32>
    %1345 = arith.addf %1339, %1344 : vector<8x128xf32>
    %1346 = vector.shape_cast %25 : vector<128xf32> to vector<1x128xf32>
    %1347 = vector.broadcast %1346 : vector<1x128xf32> to vector<8x128xf32>
    %1348 = arith.cmpf oge, %1290, %1347 : vector<8x128xf32>
    %1349 = arith.extui %1348 : vector<8x128xi1> to vector<8x128xi32>
    %1350 = arith.sitofp %1349 : vector<8x128xi32> to vector<8x128xf32>
    %1351 = arith.addf %1345, %1350 : vector<8x128xf32>
    %1352 = vector.shape_cast %27 : vector<128xf32> to vector<1x128xf32>
    %1353 = vector.broadcast %1352 : vector<1x128xf32> to vector<8x128xf32>
    %1354 = arith.cmpf oge, %1290, %1353 : vector<8x128xf32>
    %1355 = arith.extui %1354 : vector<8x128xi1> to vector<8x128xi32>
    %1356 = arith.sitofp %1355 : vector<8x128xi32> to vector<8x128xf32>
    %1357 = arith.addf %1351, %1356 : vector<8x128xf32>
    %1358 = vector.shape_cast %29 : vector<128xf32> to vector<1x128xf32>
    %1359 = vector.broadcast %1358 : vector<1x128xf32> to vector<8x128xf32>
    %1360 = arith.cmpf oge, %1290, %1359 : vector<8x128xf32>
    %1361 = arith.extui %1360 : vector<8x128xi1> to vector<8x128xi32>
    %1362 = arith.sitofp %1361 : vector<8x128xi32> to vector<8x128xf32>
    %1363 = arith.addf %1357, %1362 : vector<8x128xf32>
    %1364 = vector.shape_cast %31 : vector<128xf32> to vector<1x128xf32>
    %1365 = vector.broadcast %1364 : vector<1x128xf32> to vector<8x128xf32>
    %1366 = arith.cmpf oge, %1290, %1365 : vector<8x128xf32>
    %1367 = arith.extui %1366 : vector<8x128xi1> to vector<8x128xi32>
    %1368 = arith.sitofp %1367 : vector<8x128xi32> to vector<8x128xf32>
    %1369 = arith.addf %1363, %1368 : vector<8x128xf32>
    %1370 = vector.shape_cast %33 : vector<128xf32> to vector<1x128xf32>
    %1371 = vector.broadcast %1370 : vector<1x128xf32> to vector<8x128xf32>
    %1372 = arith.cmpf oge, %1290, %1371 : vector<8x128xf32>
    %1373 = arith.extui %1372 : vector<8x128xi1> to vector<8x128xi32>
    %1374 = arith.sitofp %1373 : vector<8x128xi32> to vector<8x128xf32>
    %1375 = arith.addf %1369, %1374 : vector<8x128xf32>
    %1376 = vector.shape_cast %35 : vector<128xf32> to vector<1x128xf32>
    %1377 = vector.broadcast %1376 : vector<1x128xf32> to vector<8x128xf32>
    %1378 = arith.cmpf oge, %1290, %1377 : vector<8x128xf32>
    %1379 = arith.extui %1378 : vector<8x128xi1> to vector<8x128xi32>
    %1380 = arith.sitofp %1379 : vector<8x128xi32> to vector<8x128xf32>
    %1381 = arith.addf %1375, %1380 : vector<8x128xf32>
    %1382 = vector.shape_cast %37 : vector<128xf32> to vector<1x128xf32>
    %1383 = vector.broadcast %1382 : vector<1x128xf32> to vector<8x128xf32>
    %1384 = arith.cmpf oge, %1290, %1383 : vector<8x128xf32>
    %1385 = arith.extui %1384 : vector<8x128xi1> to vector<8x128xi32>
    %1386 = arith.sitofp %1385 : vector<8x128xi32> to vector<8x128xf32>
    %1387 = arith.addf %1381, %1386 : vector<8x128xf32>
    %1388 = vector.shape_cast %39 : vector<128xf32> to vector<1x128xf32>
    %1389 = vector.broadcast %1388 : vector<1x128xf32> to vector<8x128xf32>
    %1390 = arith.cmpf oge, %1290, %1389 : vector<8x128xf32>
    %1391 = arith.extui %1390 : vector<8x128xi1> to vector<8x128xi32>
    %1392 = arith.sitofp %1391 : vector<8x128xi32> to vector<8x128xf32>
    %1393 = arith.addf %1387, %1392 : vector<8x128xf32>
    %1394 = vector.shape_cast %41 : vector<128xf32> to vector<1x128xf32>
    %1395 = vector.broadcast %1394 : vector<1x128xf32> to vector<8x128xf32>
    %1396 = arith.cmpf oge, %1290, %1395 : vector<8x128xf32>
    %1397 = arith.extui %1396 : vector<8x128xi1> to vector<8x128xi32>
    %1398 = arith.sitofp %1397 : vector<8x128xi32> to vector<8x128xf32>
    %1399 = arith.addf %1393, %1398 : vector<8x128xf32>
    %1400 = vector.shape_cast %43 : vector<128xf32> to vector<1x128xf32>
    %1401 = vector.broadcast %1400 : vector<1x128xf32> to vector<8x128xf32>
    %1402 = arith.cmpf oge, %1290, %1401 : vector<8x128xf32>
    %1403 = arith.extui %1402 : vector<8x128xi1> to vector<8x128xi32>
    %1404 = arith.sitofp %1403 : vector<8x128xi32> to vector<8x128xf32>
    %1405 = arith.addf %1399, %1404 : vector<8x128xf32>
    %1406 = vector.shape_cast %45 : vector<128xf32> to vector<1x128xf32>
    %1407 = vector.broadcast %1406 : vector<1x128xf32> to vector<8x128xf32>
    %1408 = arith.cmpf oge, %1290, %1407 : vector<8x128xf32>
    %1409 = arith.extui %1408 : vector<8x128xi1> to vector<8x128xi32>
    %1410 = arith.sitofp %1409 : vector<8x128xi32> to vector<8x128xf32>
    %1411 = arith.addf %1405, %1410 : vector<8x128xf32>
    %1412 = vector.shape_cast %47 : vector<128xf32> to vector<1x128xf32>
    %1413 = vector.broadcast %1412 : vector<1x128xf32> to vector<8x128xf32>
    %1414 = arith.cmpf oge, %1290, %1413 : vector<8x128xf32>
    %1415 = arith.extui %1414 : vector<8x128xi1> to vector<8x128xi32>
    %1416 = arith.sitofp %1415 : vector<8x128xi32> to vector<8x128xf32>
    %1417 = arith.addf %1411, %1416 : vector<8x128xf32>
    %1418 = vector.shape_cast %49 : vector<128xf32> to vector<1x128xf32>
    %1419 = vector.broadcast %1418 : vector<1x128xf32> to vector<8x128xf32>
    %1420 = arith.cmpf oge, %1290, %1419 : vector<8x128xf32>
    %1421 = arith.extui %1420 : vector<8x128xi1> to vector<8x128xi32>
    %1422 = arith.sitofp %1421 : vector<8x128xi32> to vector<8x128xf32>
    %1423 = arith.addf %1417, %1422 : vector<8x128xf32>
    %1424 = vector.shape_cast %51 : vector<128xf32> to vector<1x128xf32>
    %1425 = vector.broadcast %1424 : vector<1x128xf32> to vector<8x128xf32>
    %1426 = arith.cmpf oge, %1290, %1425 : vector<8x128xf32>
    %1427 = arith.extui %1426 : vector<8x128xi1> to vector<8x128xi32>
    %1428 = arith.sitofp %1427 : vector<8x128xi32> to vector<8x128xf32>
    %1429 = arith.addf %1423, %1428 : vector<8x128xf32>
    %1430 = vector.shape_cast %53 : vector<128xf32> to vector<1x128xf32>
    %1431 = vector.broadcast %1430 : vector<1x128xf32> to vector<8x128xf32>
    %1432 = arith.cmpf oge, %1290, %1431 : vector<8x128xf32>
    %1433 = arith.extui %1432 : vector<8x128xi1> to vector<8x128xi32>
    %1434 = arith.sitofp %1433 : vector<8x128xi32> to vector<8x128xf32>
    %1435 = arith.addf %1429, %1434 : vector<8x128xf32>
    %1436 = vector.shape_cast %55 : vector<128xf32> to vector<1x128xf32>
    %1437 = vector.broadcast %1436 : vector<1x128xf32> to vector<8x128xf32>
    %1438 = arith.cmpf oge, %1290, %1437 : vector<8x128xf32>
    %1439 = arith.extui %1438 : vector<8x128xi1> to vector<8x128xi32>
    %1440 = arith.sitofp %1439 : vector<8x128xi32> to vector<8x128xf32>
    %1441 = arith.addf %1435, %1440 : vector<8x128xf32>
    %1442 = vector.shape_cast %57 : vector<128xf32> to vector<1x128xf32>
    %1443 = vector.broadcast %1442 : vector<1x128xf32> to vector<8x128xf32>
    %1444 = arith.cmpf oge, %1290, %1443 : vector<8x128xf32>
    %1445 = arith.extui %1444 : vector<8x128xi1> to vector<8x128xi32>
    %1446 = arith.sitofp %1445 : vector<8x128xi32> to vector<8x128xf32>
    %1447 = arith.addf %1441, %1446 : vector<8x128xf32>
    %1448 = vector.shape_cast %59 : vector<128xf32> to vector<1x128xf32>
    %1449 = vector.broadcast %1448 : vector<1x128xf32> to vector<8x128xf32>
    %1450 = arith.cmpf oge, %1290, %1449 : vector<8x128xf32>
    %1451 = arith.extui %1450 : vector<8x128xi1> to vector<8x128xi32>
    %1452 = arith.sitofp %1451 : vector<8x128xi32> to vector<8x128xf32>
    %1453 = arith.addf %1447, %1452 : vector<8x128xf32>
    %1454 = vector.shape_cast %61 : vector<128xf32> to vector<1x128xf32>
    %1455 = vector.broadcast %1454 : vector<1x128xf32> to vector<8x128xf32>
    %1456 = arith.cmpf oge, %1290, %1455 : vector<8x128xf32>
    %1457 = arith.extui %1456 : vector<8x128xi1> to vector<8x128xi32>
    %1458 = arith.sitofp %1457 : vector<8x128xi32> to vector<8x128xf32>
    %1459 = arith.addf %1453, %1458 : vector<8x128xf32>
    %1460 = vector.shape_cast %63 : vector<128xf32> to vector<1x128xf32>
    %1461 = vector.broadcast %1460 : vector<1x128xf32> to vector<8x128xf32>
    %1462 = arith.cmpf oge, %1290, %1461 : vector<8x128xf32>
    %1463 = arith.extui %1462 : vector<8x128xi1> to vector<8x128xi32>
    %1464 = arith.sitofp %1463 : vector<8x128xi32> to vector<8x128xf32>
    %1465 = arith.addf %1459, %1464 : vector<8x128xf32>
    %1466 = vector.shape_cast %65 : vector<128xf32> to vector<1x128xf32>
    %1467 = vector.broadcast %1466 : vector<1x128xf32> to vector<8x128xf32>
    %1468 = arith.cmpf oge, %1290, %1467 : vector<8x128xf32>
    %1469 = arith.extui %1468 : vector<8x128xi1> to vector<8x128xi32>
    %1470 = arith.sitofp %1469 : vector<8x128xi32> to vector<8x128xf32>
    %1471 = arith.addf %1465, %1470 : vector<8x128xf32>
    %1472 = vector.shape_cast %67 : vector<128xf32> to vector<1x128xf32>
    %1473 = vector.broadcast %1472 : vector<1x128xf32> to vector<8x128xf32>
    %1474 = arith.cmpf oge, %1290, %1473 : vector<8x128xf32>
    %1475 = arith.extui %1474 : vector<8x128xi1> to vector<8x128xi32>
    %1476 = arith.sitofp %1475 : vector<8x128xi32> to vector<8x128xf32>
    %1477 = arith.addf %1471, %1476 : vector<8x128xf32>
    %1478 = vector.broadcast %4 : vector<1x128xf32> to vector<8x128xf32>
    %1479 = arith.mulf %1477, %1478 : vector<8x128xf32>
    %1480 = vector.broadcast %5 : vector<1x128xf32> to vector<8x128xf32>
    %1481 = arith.addf %1479, %1480 : vector<8x128xf32>
    %1482 = vector.extract_strided_slice %1481 {offsets = [0, 0], sizes = [8, 32], strides = [1, 1]} : vector<8x128xf32> to vector<8x32xf32>
    %1483 = vector.extract_strided_slice %1481 {offsets = [0, 32], sizes = [8, 32], strides = [1, 1]} : vector<8x128xf32> to vector<8x32xf32>
    %1484 = vector.extract_strided_slice %1481 {offsets = [0, 64], sizes = [8, 32], strides = [1, 1]} : vector<8x128xf32> to vector<8x32xf32>
    %1485 = vector.extract_strided_slice %1481 {offsets = [0, 96], sizes = [8, 32], strides = [1, 1]} : vector<8x128xf32> to vector<8x32xf32>
    %1486 = arith.mulf %1483, %1285 : vector<8x32xf32>
    %1487 = arith.mulf %1482, %1484 : vector<8x32xf32>
    %1488 = arith.addf %1486, %1487 : vector<8x32xf32>
    %1489 = math.tanh %1488 : vector<8x32xf32>
    %1490 = arith.mulf %1485, %1489 : vector<8x32xf32>
    %1491 = vector.extract_strided_slice %2 {offsets = [56, 0], sizes = [8, 128], strides = [1, 1]} : vector<64x128xf32> to vector<8x128xf32>
    %cst_57 = arith.constant dense<0.000000e+00> : vector<8x128xf32>
    %1492 = tpu.matmul %1490, %3, %cst_57 {dimension_numbers = #tpu.dot_dimension_numbers<[1], [0], [0], [1], [0, 0, 1, 1], [], []>} : vector<8x32xf32>, vector<32x128xf32>, vector<8x128xf32> -> vector<8x128xf32>
    %1493 = arith.addf %1491, %1492 : vector<8x128xf32>
    %cst_58 = arith.constant 0.000000e+00 : f32
    %1494 = vector.broadcast %cst_58 : f32 to vector<8x128xf32>
    %1495 = vector.shape_cast %7 : vector<128xf32> to vector<1x128xf32>
    %1496 = vector.broadcast %1495 : vector<1x128xf32> to vector<8x128xf32>
    %1497 = arith.cmpf oge, %1493, %1496 : vector<8x128xf32>
    %1498 = arith.extui %1497 : vector<8x128xi1> to vector<8x128xi32>
    %1499 = arith.sitofp %1498 : vector<8x128xi32> to vector<8x128xf32>
    %1500 = arith.addf %1494, %1499 : vector<8x128xf32>
    %1501 = vector.shape_cast %9 : vector<128xf32> to vector<1x128xf32>
    %1502 = vector.broadcast %1501 : vector<1x128xf32> to vector<8x128xf32>
    %1503 = arith.cmpf oge, %1493, %1502 : vector<8x128xf32>
    %1504 = arith.extui %1503 : vector<8x128xi1> to vector<8x128xi32>
    %1505 = arith.sitofp %1504 : vector<8x128xi32> to vector<8x128xf32>
    %1506 = arith.addf %1500, %1505 : vector<8x128xf32>
    %1507 = vector.shape_cast %11 : vector<128xf32> to vector<1x128xf32>
    %1508 = vector.broadcast %1507 : vector<1x128xf32> to vector<8x128xf32>
    %1509 = arith.cmpf oge, %1493, %1508 : vector<8x128xf32>
    %1510 = arith.extui %1509 : vector<8x128xi1> to vector<8x128xi32>
    %1511 = arith.sitofp %1510 : vector<8x128xi32> to vector<8x128xf32>
    %1512 = arith.addf %1506, %1511 : vector<8x128xf32>
    %1513 = vector.shape_cast %13 : vector<128xf32> to vector<1x128xf32>
    %1514 = vector.broadcast %1513 : vector<1x128xf32> to vector<8x128xf32>
    %1515 = arith.cmpf oge, %1493, %1514 : vector<8x128xf32>
    %1516 = arith.extui %1515 : vector<8x128xi1> to vector<8x128xi32>
    %1517 = arith.sitofp %1516 : vector<8x128xi32> to vector<8x128xf32>
    %1518 = arith.addf %1512, %1517 : vector<8x128xf32>
    %1519 = vector.shape_cast %15 : vector<128xf32> to vector<1x128xf32>
    %1520 = vector.broadcast %1519 : vector<1x128xf32> to vector<8x128xf32>
    %1521 = arith.cmpf oge, %1493, %1520 : vector<8x128xf32>
    %1522 = arith.extui %1521 : vector<8x128xi1> to vector<8x128xi32>
    %1523 = arith.sitofp %1522 : vector<8x128xi32> to vector<8x128xf32>
    %1524 = arith.addf %1518, %1523 : vector<8x128xf32>
    %1525 = vector.shape_cast %17 : vector<128xf32> to vector<1x128xf32>
    %1526 = vector.broadcast %1525 : vector<1x128xf32> to vector<8x128xf32>
    %1527 = arith.cmpf oge, %1493, %1526 : vector<8x128xf32>
    %1528 = arith.extui %1527 : vector<8x128xi1> to vector<8x128xi32>
    %1529 = arith.sitofp %1528 : vector<8x128xi32> to vector<8x128xf32>
    %1530 = arith.addf %1524, %1529 : vector<8x128xf32>
    %1531 = vector.shape_cast %19 : vector<128xf32> to vector<1x128xf32>
    %1532 = vector.broadcast %1531 : vector<1x128xf32> to vector<8x128xf32>
    %1533 = arith.cmpf oge, %1493, %1532 : vector<8x128xf32>
    %1534 = arith.extui %1533 : vector<8x128xi1> to vector<8x128xi32>
    %1535 = arith.sitofp %1534 : vector<8x128xi32> to vector<8x128xf32>
    %1536 = arith.addf %1530, %1535 : vector<8x128xf32>
    %1537 = vector.shape_cast %21 : vector<128xf32> to vector<1x128xf32>
    %1538 = vector.broadcast %1537 : vector<1x128xf32> to vector<8x128xf32>
    %1539 = arith.cmpf oge, %1493, %1538 : vector<8x128xf32>
    %1540 = arith.extui %1539 : vector<8x128xi1> to vector<8x128xi32>
    %1541 = arith.sitofp %1540 : vector<8x128xi32> to vector<8x128xf32>
    %1542 = arith.addf %1536, %1541 : vector<8x128xf32>
    %1543 = vector.shape_cast %23 : vector<128xf32> to vector<1x128xf32>
    %1544 = vector.broadcast %1543 : vector<1x128xf32> to vector<8x128xf32>
    %1545 = arith.cmpf oge, %1493, %1544 : vector<8x128xf32>
    %1546 = arith.extui %1545 : vector<8x128xi1> to vector<8x128xi32>
    %1547 = arith.sitofp %1546 : vector<8x128xi32> to vector<8x128xf32>
    %1548 = arith.addf %1542, %1547 : vector<8x128xf32>
    %1549 = vector.shape_cast %25 : vector<128xf32> to vector<1x128xf32>
    %1550 = vector.broadcast %1549 : vector<1x128xf32> to vector<8x128xf32>
    %1551 = arith.cmpf oge, %1493, %1550 : vector<8x128xf32>
    %1552 = arith.extui %1551 : vector<8x128xi1> to vector<8x128xi32>
    %1553 = arith.sitofp %1552 : vector<8x128xi32> to vector<8x128xf32>
    %1554 = arith.addf %1548, %1553 : vector<8x128xf32>
    %1555 = vector.shape_cast %27 : vector<128xf32> to vector<1x128xf32>
    %1556 = vector.broadcast %1555 : vector<1x128xf32> to vector<8x128xf32>
    %1557 = arith.cmpf oge, %1493, %1556 : vector<8x128xf32>
    %1558 = arith.extui %1557 : vector<8x128xi1> to vector<8x128xi32>
    %1559 = arith.sitofp %1558 : vector<8x128xi32> to vector<8x128xf32>
    %1560 = arith.addf %1554, %1559 : vector<8x128xf32>
    %1561 = vector.shape_cast %29 : vector<128xf32> to vector<1x128xf32>
    %1562 = vector.broadcast %1561 : vector<1x128xf32> to vector<8x128xf32>
    %1563 = arith.cmpf oge, %1493, %1562 : vector<8x128xf32>
    %1564 = arith.extui %1563 : vector<8x128xi1> to vector<8x128xi32>
    %1565 = arith.sitofp %1564 : vector<8x128xi32> to vector<8x128xf32>
    %1566 = arith.addf %1560, %1565 : vector<8x128xf32>
    %1567 = vector.shape_cast %31 : vector<128xf32> to vector<1x128xf32>
    %1568 = vector.broadcast %1567 : vector<1x128xf32> to vector<8x128xf32>
    %1569 = arith.cmpf oge, %1493, %1568 : vector<8x128xf32>
    %1570 = arith.extui %1569 : vector<8x128xi1> to vector<8x128xi32>
    %1571 = arith.sitofp %1570 : vector<8x128xi32> to vector<8x128xf32>
    %1572 = arith.addf %1566, %1571 : vector<8x128xf32>
    %1573 = vector.shape_cast %33 : vector<128xf32> to vector<1x128xf32>
    %1574 = vector.broadcast %1573 : vector<1x128xf32> to vector<8x128xf32>
    %1575 = arith.cmpf oge, %1493, %1574 : vector<8x128xf32>
    %1576 = arith.extui %1575 : vector<8x128xi1> to vector<8x128xi32>
    %1577 = arith.sitofp %1576 : vector<8x128xi32> to vector<8x128xf32>
    %1578 = arith.addf %1572, %1577 : vector<8x128xf32>
    %1579 = vector.shape_cast %35 : vector<128xf32> to vector<1x128xf32>
    %1580 = vector.broadcast %1579 : vector<1x128xf32> to vector<8x128xf32>
    %1581 = arith.cmpf oge, %1493, %1580 : vector<8x128xf32>
    %1582 = arith.extui %1581 : vector<8x128xi1> to vector<8x128xi32>
    %1583 = arith.sitofp %1582 : vector<8x128xi32> to vector<8x128xf32>
    %1584 = arith.addf %1578, %1583 : vector<8x128xf32>
    %1585 = vector.shape_cast %37 : vector<128xf32> to vector<1x128xf32>
    %1586 = vector.broadcast %1585 : vector<1x128xf32> to vector<8x128xf32>
    %1587 = arith.cmpf oge, %1493, %1586 : vector<8x128xf32>
    %1588 = arith.extui %1587 : vector<8x128xi1> to vector<8x128xi32>
    %1589 = arith.sitofp %1588 : vector<8x128xi32> to vector<8x128xf32>
    %1590 = arith.addf %1584, %1589 : vector<8x128xf32>
    %1591 = vector.shape_cast %39 : vector<128xf32> to vector<1x128xf32>
    %1592 = vector.broadcast %1591 : vector<1x128xf32> to vector<8x128xf32>
    %1593 = arith.cmpf oge, %1493, %1592 : vector<8x128xf32>
    %1594 = arith.extui %1593 : vector<8x128xi1> to vector<8x128xi32>
    %1595 = arith.sitofp %1594 : vector<8x128xi32> to vector<8x128xf32>
    %1596 = arith.addf %1590, %1595 : vector<8x128xf32>
    %1597 = vector.shape_cast %41 : vector<128xf32> to vector<1x128xf32>
    %1598 = vector.broadcast %1597 : vector<1x128xf32> to vector<8x128xf32>
    %1599 = arith.cmpf oge, %1493, %1598 : vector<8x128xf32>
    %1600 = arith.extui %1599 : vector<8x128xi1> to vector<8x128xi32>
    %1601 = arith.sitofp %1600 : vector<8x128xi32> to vector<8x128xf32>
    %1602 = arith.addf %1596, %1601 : vector<8x128xf32>
    %1603 = vector.shape_cast %43 : vector<128xf32> to vector<1x128xf32>
    %1604 = vector.broadcast %1603 : vector<1x128xf32> to vector<8x128xf32>
    %1605 = arith.cmpf oge, %1493, %1604 : vector<8x128xf32>
    %1606 = arith.extui %1605 : vector<8x128xi1> to vector<8x128xi32>
    %1607 = arith.sitofp %1606 : vector<8x128xi32> to vector<8x128xf32>
    %1608 = arith.addf %1602, %1607 : vector<8x128xf32>
    %1609 = vector.shape_cast %45 : vector<128xf32> to vector<1x128xf32>
    %1610 = vector.broadcast %1609 : vector<1x128xf32> to vector<8x128xf32>
    %1611 = arith.cmpf oge, %1493, %1610 : vector<8x128xf32>
    %1612 = arith.extui %1611 : vector<8x128xi1> to vector<8x128xi32>
    %1613 = arith.sitofp %1612 : vector<8x128xi32> to vector<8x128xf32>
    %1614 = arith.addf %1608, %1613 : vector<8x128xf32>
    %1615 = vector.shape_cast %47 : vector<128xf32> to vector<1x128xf32>
    %1616 = vector.broadcast %1615 : vector<1x128xf32> to vector<8x128xf32>
    %1617 = arith.cmpf oge, %1493, %1616 : vector<8x128xf32>
    %1618 = arith.extui %1617 : vector<8x128xi1> to vector<8x128xi32>
    %1619 = arith.sitofp %1618 : vector<8x128xi32> to vector<8x128xf32>
    %1620 = arith.addf %1614, %1619 : vector<8x128xf32>
    %1621 = vector.shape_cast %49 : vector<128xf32> to vector<1x128xf32>
    %1622 = vector.broadcast %1621 : vector<1x128xf32> to vector<8x128xf32>
    %1623 = arith.cmpf oge, %1493, %1622 : vector<8x128xf32>
    %1624 = arith.extui %1623 : vector<8x128xi1> to vector<8x128xi32>
    %1625 = arith.sitofp %1624 : vector<8x128xi32> to vector<8x128xf32>
    %1626 = arith.addf %1620, %1625 : vector<8x128xf32>
    %1627 = vector.shape_cast %51 : vector<128xf32> to vector<1x128xf32>
    %1628 = vector.broadcast %1627 : vector<1x128xf32> to vector<8x128xf32>
    %1629 = arith.cmpf oge, %1493, %1628 : vector<8x128xf32>
    %1630 = arith.extui %1629 : vector<8x128xi1> to vector<8x128xi32>
    %1631 = arith.sitofp %1630 : vector<8x128xi32> to vector<8x128xf32>
    %1632 = arith.addf %1626, %1631 : vector<8x128xf32>
    %1633 = vector.shape_cast %53 : vector<128xf32> to vector<1x128xf32>
    %1634 = vector.broadcast %1633 : vector<1x128xf32> to vector<8x128xf32>
    %1635 = arith.cmpf oge, %1493, %1634 : vector<8x128xf32>
    %1636 = arith.extui %1635 : vector<8x128xi1> to vector<8x128xi32>
    %1637 = arith.sitofp %1636 : vector<8x128xi32> to vector<8x128xf32>
    %1638 = arith.addf %1632, %1637 : vector<8x128xf32>
    %1639 = vector.shape_cast %55 : vector<128xf32> to vector<1x128xf32>
    %1640 = vector.broadcast %1639 : vector<1x128xf32> to vector<8x128xf32>
    %1641 = arith.cmpf oge, %1493, %1640 : vector<8x128xf32>
    %1642 = arith.extui %1641 : vector<8x128xi1> to vector<8x128xi32>
    %1643 = arith.sitofp %1642 : vector<8x128xi32> to vector<8x128xf32>
    %1644 = arith.addf %1638, %1643 : vector<8x128xf32>
    %1645 = vector.shape_cast %57 : vector<128xf32> to vector<1x128xf32>
    %1646 = vector.broadcast %1645 : vector<1x128xf32> to vector<8x128xf32>
    %1647 = arith.cmpf oge, %1493, %1646 : vector<8x128xf32>
    %1648 = arith.extui %1647 : vector<8x128xi1> to vector<8x128xi32>
    %1649 = arith.sitofp %1648 : vector<8x128xi32> to vector<8x128xf32>
    %1650 = arith.addf %1644, %1649 : vector<8x128xf32>
    %1651 = vector.shape_cast %59 : vector<128xf32> to vector<1x128xf32>
    %1652 = vector.broadcast %1651 : vector<1x128xf32> to vector<8x128xf32>
    %1653 = arith.cmpf oge, %1493, %1652 : vector<8x128xf32>
    %1654 = arith.extui %1653 : vector<8x128xi1> to vector<8x128xi32>
    %1655 = arith.sitofp %1654 : vector<8x128xi32> to vector<8x128xf32>
    %1656 = arith.addf %1650, %1655 : vector<8x128xf32>
    %1657 = vector.shape_cast %61 : vector<128xf32> to vector<1x128xf32>
    %1658 = vector.broadcast %1657 : vector<1x128xf32> to vector<8x128xf32>
    %1659 = arith.cmpf oge, %1493, %1658 : vector<8x128xf32>
    %1660 = arith.extui %1659 : vector<8x128xi1> to vector<8x128xi32>
    %1661 = arith.sitofp %1660 : vector<8x128xi32> to vector<8x128xf32>
    %1662 = arith.addf %1656, %1661 : vector<8x128xf32>
    %1663 = vector.shape_cast %63 : vector<128xf32> to vector<1x128xf32>
    %1664 = vector.broadcast %1663 : vector<1x128xf32> to vector<8x128xf32>
    %1665 = arith.cmpf oge, %1493, %1664 : vector<8x128xf32>
    %1666 = arith.extui %1665 : vector<8x128xi1> to vector<8x128xi32>
    %1667 = arith.sitofp %1666 : vector<8x128xi32> to vector<8x128xf32>
    %1668 = arith.addf %1662, %1667 : vector<8x128xf32>
    %1669 = vector.shape_cast %65 : vector<128xf32> to vector<1x128xf32>
    %1670 = vector.broadcast %1669 : vector<1x128xf32> to vector<8x128xf32>
    %1671 = arith.cmpf oge, %1493, %1670 : vector<8x128xf32>
    %1672 = arith.extui %1671 : vector<8x128xi1> to vector<8x128xi32>
    %1673 = arith.sitofp %1672 : vector<8x128xi32> to vector<8x128xf32>
    %1674 = arith.addf %1668, %1673 : vector<8x128xf32>
    %1675 = vector.shape_cast %67 : vector<128xf32> to vector<1x128xf32>
    %1676 = vector.broadcast %1675 : vector<1x128xf32> to vector<8x128xf32>
    %1677 = arith.cmpf oge, %1493, %1676 : vector<8x128xf32>
    %1678 = arith.extui %1677 : vector<8x128xi1> to vector<8x128xi32>
    %1679 = arith.sitofp %1678 : vector<8x128xi32> to vector<8x128xf32>
    %1680 = arith.addf %1674, %1679 : vector<8x128xf32>
    %1681 = vector.broadcast %4 : vector<1x128xf32> to vector<8x128xf32>
    %1682 = arith.mulf %1680, %1681 : vector<8x128xf32>
    %1683 = vector.broadcast %5 : vector<1x128xf32> to vector<8x128xf32>
    %1684 = arith.addf %1682, %1683 : vector<8x128xf32>
    %1685 = vector.extract_strided_slice %1684 {offsets = [0, 0], sizes = [8, 32], strides = [1, 1]} : vector<8x128xf32> to vector<8x32xf32>
    %1686 = vector.extract_strided_slice %1684 {offsets = [0, 32], sizes = [8, 32], strides = [1, 1]} : vector<8x128xf32> to vector<8x32xf32>
    %1687 = vector.extract_strided_slice %1684 {offsets = [0, 64], sizes = [8, 32], strides = [1, 1]} : vector<8x128xf32> to vector<8x32xf32>
    %1688 = vector.extract_strided_slice %1684 {offsets = [0, 96], sizes = [8, 32], strides = [1, 1]} : vector<8x128xf32> to vector<8x32xf32>
    %1689 = arith.mulf %1686, %1488 : vector<8x32xf32>
    %1690 = arith.mulf %1685, %1687 : vector<8x32xf32>
    %1691 = arith.addf %1689, %1690 : vector<8x32xf32>
    %1692 = math.tanh %1691 : vector<8x32xf32>
    %1693 = arith.mulf %1688, %1692 : vector<8x32xf32>
    %c0_59 = arith.constant 0 : index
    %c0_60 = arith.constant 0 : index
    %1694 = vector.load %arg3[%c0_59, %c0_60] : memref<32x128xf32, #tpu.memory_space<vmem>>, vector<32x128xf32>
    %cst_61 = arith.constant dense<0.000000e+00> : vector<8x128xf32>
    %1695 = tpu.matmul %1693, %1694, %cst_61 {dimension_numbers = #tpu.dot_dimension_numbers<[1], [0], [0], [1], [0, 0, 1, 1], [], []>} : vector<8x32xf32>, vector<32x128xf32>, vector<8x128xf32> -> vector<8x128xf32>
    %c0_62 = arith.constant 0 : index
    %c0_63 = arith.constant 0 : index
    %1696 = vector.load %arg4[%c0_62, %c0_63] : memref<1x128xf32, #tpu.memory_space<vmem>>, vector<1x128xf32>
    %1697 = vector.broadcast %1696 : vector<1x128xf32> to vector<8x128xf32>
    %1698 = arith.addf %1695, %1697 : vector<8x128xf32>
    %c0_64 = arith.constant 0 : index
    %c0_65 = arith.constant 0 : index
    %1699 = vector.load %arg8[%c0_64, %c0_65] : memref<8x128xf32, #tpu.memory_space<vmem>>, vector<8x128xf32>
    tpu.vector_store %arg8[%c0_64, %c0_65], %1698 {strides = array<i32>} : memref<8x128xf32, #tpu.memory_space<vmem>>, vector<8x128xf32>,
    return
  }
}

</mosaic_0001>

<llo_original>
// kernel: tpu_custom_call.1
$region0: #{tpu_custom_call.1}
  #allocation0 [shape = 'u32[]', space=smem, size = 0x4, offset = 0x4, fixed_abs, tag = 'smem constant byte address 0x4 - core index']
  #allocation1 [shape = 'u32[144,128]{1,0:T(1,128)}', space=vmem, size = 0x12000, scoped, tag = 'internal scratch']
  %s0 = inlined_call_operand.vmem [shape: f32[64,40], index: 0, kind: input, shape index: {}]
  %s1 = inlined_call_operand.vmem [shape: f32[40,128], index: 1, kind: input, shape index: {}]
  %s2 = inlined_call_operand.vmem [shape: f32[32,128], index: 2, kind: input, shape index: {}]
  %s3 = inlined_call_operand.vmem [shape: f32[32,128], index: 3, kind: input, shape index: {}]
  %s4 = inlined_call_operand.vmem [shape: f32[1,128], index: 4, kind: input, shape index: {}]
  %s5 = inlined_call_operand.hbm [shape: f32[31,128], index: 5, kind: input, shape index: {}]
  %s6 = inlined_call_operand.vmem [shape: f32[1,128], index: 6, kind: input, shape index: {}]
  %s7 = inlined_call_operand.vmem [shape: f32[1,128], index: 7, kind: input, shape index: {}]
  %s8 = inlined_call_operand.hbm [shape: f32[8,128], index: 8, kind: output, shape index: {}]
  %s9 = sld [smem:[#allocation0]]
  $region46: #{tpu_custom_call.1} parent=0
    _
  %s11 = ssub.s32 1, %s9
  %s12 = scalar_select 0, %s11, %s9
  $region1: #{tpu_custom_call.1} parent=0
    #allocation2 [shape = 'u8[16384]{0}', space=vmem, size = 0x4000, scoped, tag = 'input window, operand 5, single buffered']
    #allocation3 [shape = 's32[1]{0}', space=sflag, size = 0x4, scoped, tag = 'scoped memory for tpu_custom_call.1']
    #allocation4 [shape = 's32[1]{0}', space=sflag, size = 0x4, scoped, tag = 'scoped memory for tpu_custom_call.1']
    #allocation5 [shape = 'u8[4096]{0}', space=vmem, size = 0x1000, scoped, tag = 'output window, operand 0, single buffered']
    %13 = vsyncpa [#allocation3], 0
    %14 = vsyncpa [#allocation4], 0
    // Predicated region
    $region2: #{tpu_custom_call.1} parent=1 // pred_check
      _
    $region3: #{tpu_custom_call.1} parent=1 // pred_check_branch
      %16 = sbr.rel (0) target = $region5
    $region4: #{tpu_custom_call.1} parent=1 // pred_region
      _
    $region5: #{tpu_custom_call.1} parent=1 // pred_fallthru
      _
    // Predicated region
    $region6: #{tpu_custom_call.1} parent=1 // pred_check
      _
    $region7: #{tpu_custom_call.1} parent=1 // pred_check_branch
      %18 = sbr.rel (0) target = $region9
    $region8: #{tpu_custom_call.1} parent=1 // pred_region
      _
    $region9: #{tpu_custom_call.1} parent=1 // pred_fallthru
      _
    // Predicated region
    $region10: #{tpu_custom_call.1} parent=1 // pred_check
      _
    $region11: #{tpu_custom_call.1} parent=1 // pred_check_branch
      %20 = sbr.rel (0) target = $region13
    $region12: #{tpu_custom_call.1} parent=1 // pred_region
      _
    $region13: #{tpu_custom_call.1} parent=1 // pred_fallthru
      _
    // Predicated region
    $region14: #{tpu_custom_call.1} parent=1 // pred_check
      _
    $region15: #{tpu_custom_call.1} parent=1 // pred_check_branch
      %22 = sbr.rel (0) target = $region17
    $region16: #{tpu_custom_call.1} parent=1 // pred_region
      _
    $region17: #{tpu_custom_call.1} parent=1 // pred_fallthru
      _
    // Predicated region
    $region18: #{tpu_custom_call.1} parent=1 // pred_check
      _
    $region19: #{tpu_custom_call.1} parent=1 // pred_check_branch
      %24 = sbr.rel (0) target = $region21
    $region20: #{tpu_custom_call.1} parent=1 // pred_region
      _
    $region21: #{tpu_custom_call.1} parent=1 // pred_fallthru
      _
    // Predicated region
    $region22: #{tpu_custom_call.1} parent=1 // pred_check
      _
    $region23: #{tpu_custom_call.1} parent=1 // pred_check_branch
      %26 = sbr.rel (0) target = $region25
    $region24: #{tpu_custom_call.1} parent=1 // pred_region
      %s28 = ssub.s32 512, 512
      %29 = vsyncadd [#allocation3], %s28
      %s30 = sshll.u32 [#allocation2], 4
      %s31 = int_to_ptr.vmem [resolvable:$true] %s30
      %36 = dma.hbm_to_vmem [thread:$0]  %s5, 512, %s31, [#allocation3], 128, 128, 8
    $region25: #{tpu_custom_call.1} parent=1 // pred_fallthru
      _
    // Predicated region
    $region26: #{tpu_custom_call.1} parent=1 // pred_check
      _
    $region27: #{tpu_custom_call.1} parent=1 // pred_check_branch
      %38 = sbr.rel (0) target = $region29
    $region28: #{tpu_custom_call.1} parent=1 // pred_region
      _
    $region29: #{tpu_custom_call.1} parent=1 // pred_fallthru
      _
    // Predicated region
    $region30: #{tpu_custom_call.1} parent=1 // pred_check
      _
    $region31: #{tpu_custom_call.1} parent=1 // pred_check_branch
      %40 = sbr.rel (0) target = $region33
    $region32: #{tpu_custom_call.1} parent=1 // pred_region
      _
    $region33: #{tpu_custom_call.1} parent=1 // pred_fallthru
      _
    // Predicated region
    $region34: #{tpu_custom_call.1} parent=1 // pred_check
      _
    $region35: #{tpu_custom_call.1} parent=1 // pred_check_branch
      %42 = sbr.rel (0) target = $region37
    $region36: #{tpu_custom_call.1} parent=1 // pred_region
      %43 = dma.done [#allocation3], 512
    $region37: #{tpu_custom_call.1} parent=1 // pred_fallthru
      _
    %v44 = vld [vmem:[%s0] sm:$0xff]
    %v45 = vld [vmem:[%s0 + $0x8] sm:$0xff]
    %v46 = vld [vmem:[%s0 + $0x10] sm:$0xff]
    %v47 = vld [vmem:[%s0 + $0x18] sm:$0xff]
    %v48 = vld [vmem:[%s0 + $0x20] sm:$0xff]
    %v49 = vld [vmem:[%s0 + $0x28] sm:$0xff]
    %v50 = vld [vmem:[%s0 + $0x30] sm:$0xff]
    %v51 = vld [vmem:[%s0 + $0x38] sm:$0xff]
    %v52 = vld [vmem:[%s1] sm:$0xff]
    %v53 = vld [vmem:[%s1 + $0x8] sm:$0xff]
    %v54 = vld [vmem:[%s1 + $0x10] sm:$0xff]
    %v55 = vld [vmem:[%s1 + $0x18] sm:$0xff]
    %v56 = vld [vmem:[%s1 + $0x20] sm:$0xff]
    %vm57 = vcmask 326656
    %v59 = vsel %vm57, %v44, 0
    %v62 = vsel %vm57, %v45, 0
    %v65 = vsel %vm57, %v46, 0
    %v68 = vsel %vm57, %v47, 0
    %v71 = vsel %vm57, %v48, 0
    %v74 = vsel %vm57, %v49, 0
    %v77 = vsel %vm57, %v50, 0
    %v80 = vsel %vm57, %v51, 0
    %82 = vmatprep.subr.mxu0 0.0
    %83 = vmatpush1.msra.mxu0 %v52
    %84 = vmatprep.subr.mxu0 0.0
    %85 = vmatpush1.msra.mxu0 %v53
    %86 = vmatprep.subr.mxu0 0.0
    %87 = vmatpush1.msra.mxu0 %v54
    %88 = vmatprep.subr.mxu0 0.0
    %89 = vmatpush1.msra.mxu0 %v55
    %90 = vmatprep.subr.mxu0 0.0
    %91 = vmatpush1.msra.mxu0 %v56
    %92 = vmatprep.subr.mxu0 0.0
    %93 = vmatpush1.msra.mxu0 0.0
    %94 = vmatprep.subr.mxu0 0.0
    %95 = vmatpush1.msra.mxu0 0.0
    %96 = vmatprep.subr.mxu0 0.0
    %97 = vmatpush1.msra.mxu0 0.0
    %98 = vmatprep.subr.mxu0 0.0
    %99 = vmatpush1.msra.mxu0 0.0
    %100 = vmatprep.subr.mxu0 0.0
    %101 = vmatpush1.msra.mxu0 0.0
    %102 = vmatprep.subr.mxu0 0.0
    %103 = vmatpush1.msra.mxu0 0.0
    %104 = vmatprep.subr.mxu0 0.0
    %105 = vmatpush1.msra.mxu0 0.0
    %106 = vmatprep.subr.mxu0 0.0
    %107 = vmatpush1.msra.mxu0 0.0
    %108 = vmatprep.subr.mxu0 0.0
    %109 = vmatpush1.msra.mxu0 0.0
    %110 = vmatprep.subr.mxu0 0.0
    %111 = vmatpush1.msra.mxu0 0.0
    %112 = vmatprep.subr.mxu0 0.0
    %113 = vmatpush1.msra.mxu0 0.0
    %114 = vmatprep.subr.mxu0 0.0
    %115 = vmatpush1.msra.mxu0 0.0
    %116 = vmatprep.subr.mxu0 0.0
    %117 = vmatpush1.msra.mxu0 0.0
    %118 = vmatprep.subr.mxu0 0.0
    %119 = vmatpush1.msra.mxu0 0.0
    %120 = vmatprep.subr.mxu0 0.0
    %121 = vmatpush1.msra.mxu0 0.0
    %122 = vmatprep.subr.mxu0 0.0
    %123 = vmatpush1.msra.mxu0 0.0
    %124 = vmatprep.subr.mxu0 0.0
    %125 = vmatpush1.msra.mxu0 0.0
    %126 = vmatprep.subr.mxu0 0.0
    %127 = vmatpush1.msra.mxu0 0.0
    %128 = vmatprep.subr.mxu0 0.0
    %129 = vmatpush1.msra.mxu0 0.0
    %130 = vmatprep.subr.mxu0 0.0
    %131 = vmatpush1.msra.mxu0 0.0
    %132 = vmatprep.subr.mxu0 0.0
    %133 = vmatpush1.msra.mxu0 0.0
    %134 = vmatprep.subr.mxu0 0.0
    %135 = vmatpush1.msra.mxu0 0.0
    %136 = vmatprep.subr.mxu0 0.0
    %137 = vmatpush1.msra.mxu0 0.0
    %138 = vmatprep.subr.mxu0 0.0
    %139 = vmatpush1.msra.mxu0 0.0
    %140 = vmatprep.subr.mxu0 0.0
    %141 = vmatpush1.msra.mxu0 0.0
    %142 = vmatprep.subr.mxu0 0.0
    %143 = vmatpush1.msra.mxu0 0.0
    %144 = vmatprep.subr.mxu0 0.0
    %145 = vmatpush1.msra.mxu0 0.0
    %146 = vmatprep.mubr.f32.mxu0 0.0
    %147 = vmatmul.mubr.f32.gmra.mrb[0].mxu0 %v59
    %v148 = vpop.f32.mrb[0].mxu0
    %v149 = vadd.f32 0.0, %v148
    %v150 = vpop.f32.mrb[0].mxu0
    %151 = vmatprep.mubr.f32.mxu0 0.0
    %152 = vmatmul.mubr.f32.gmra.mrb[0].mxu0 %v62
    %v153 = vpop.f32.mrb[0].mxu0
    %v154 = vadd.f32 0.0, %v153
    %v155 = vpop.f32.mrb[0].mxu0
    %156 = vmatprep.mubr.f32.mxu0 0.0
    %157 = vmatmul.mubr.f32.gmra.mrb[0].mxu0 %v65
    %v158 = vpop.f32.mrb[0].mxu0
    %v159 = vadd.f32 0.0, %v158
    %v160 = vpop.f32.mrb[0].mxu0
    %161 = vmatprep.mubr.f32.mxu0 0.0
    %162 = vmatmul.mubr.f32.gmra.mrb[0].mxu0 %v68
    %v163 = vpop.f32.mrb[0].mxu0
    %v164 = vadd.f32 0.0, %v163
    %v165 = vpop.f32.mrb[0].mxu0
    %166 = vmatprep.mubr.f32.mxu0 0.0
    %167 = vmatmul.mubr.f32.gmra.mrb[0].mxu0 %v71
    %v168 = vpop.f32.mrb[0].mxu0
    %v169 = vadd.f32 0.0, %v168
    %v170 = vpop.f32.mrb[0].mxu0
    %171 = vmatprep.mubr.f32.mxu0 0.0
    %172 = vmatmul.mubr.f32.gmra.mrb[0].mxu0 %v74
    %v173 = vpop.f32.mrb[0].mxu0
    %v174 = vadd.f32 0.0, %v173
    %v175 = vpop.f32.mrb[0].mxu0
    %176 = vmatprep.mubr.f32.mxu0 0.0
    %177 = vmatmul.mubr.f32.gmra.mrb[0].mxu0 %v77
    %v178 = vpop.f32.mrb[0].mxu0
    %v179 = vadd.f32 0.0, %v178
    %v180 = vpop.f32.mrb[0].mxu0
    %181 = vmatprep.mubr.f32.mxu0 0.0
    %182 = vmatmul.mubr.f32.gmra.mrb[0].mxu0 %v80
    %v183 = vpop.f32.mrb[0].mxu0
    %v184 = vadd.f32 0.0, %v183
    %v185 = vpop.f32.mrb[0].mxu0
    %186 = vdwg.mxu0
    %v187 = vld [vmem:[%s2] sm:$0xff]
    %v188 = vld [vmem:[%s2 + $0x8] sm:$0xff]
    %v189 = vld [vmem:[%s2 + $0x10] sm:$0xff]
    %v190 = vld [vmem:[%s2 + $0x18] sm:$0xff]
    %v191 = vld [vmem:[%s6] sm:$0x1]
    %v192 = vld [vmem:[%s7] sm:$0x1]
    %v193 = vld [vmem:[#allocation2] sm:$0x1]
    %v194 = vld [vmem:[#allocation2 + $0x1] sm:$0x1]
    %v195 = vld [vmem:[#allocation2 + $0x2] sm:$0x1]
    %v196 = vld [vmem:[#allocation2 + $0x3] sm:$0x1]
    %v197 = vld [vmem:[#allocation2 + $0x4] sm:$0x1]
    %v198 = vld [vmem:[#allocation2 + $0x5] sm:$0x1]
    %v199 = vld [vmem:[#allocation2 + $0x6] sm:$0x1]
    %v200 = vld [vmem:[#allocation2 + $0x7] sm:$0x1]
    %v201 = vld [vmem:[#allocation2 + $0x8] sm:$0x1]
    %v202 = vld [vmem:[#allocation2 + $0x9] sm:$0x1]
    %v203 = vld [vmem:[#allocation2 + $0xa] sm:$0x1]
    %v204 = vld [vmem:[#allocation2 + $0xb] sm:$0x1]
    %v205 = vld [vmem:[#allocation2 + $0xc] sm:$0x1]
    %v206 = vld [vmem:[#allocation2 + $0xd] sm:$0x1]
    %v207 = vld [vmem:[#allocation2 + $0xe] sm:$0x1]
    %v208 = vld [vmem:[#allocation2 + $0xf] sm:$0x1]
    %v209 = vld [vmem:[#allocation2 + $0x10] sm:$0x1]
    %v210 = vld [vmem:[#allocation2 + $0x11] sm:$0x1]
    %v211 = vld [vmem:[#allocation2 + $0x12] sm:$0x1]
    %v212 = vld [vmem:[#allocation2 + $0x13] sm:$0x1]
    %v213 = vld [vmem:[#allocation2 + $0x14] sm:$0x1]
    %v214 = vld [vmem:[#allocation2 + $0x15] sm:$0x1]
    %v215 = vld [vmem:[#allocation2 + $0x16] sm:$0x1]
    %v216 = vld [vmem:[#allocation2 + $0x17] sm:$0x1]
    %v217 = vld [vmem:[#allocation2 + $0x18] sm:$0x1]
    %v218 = vld [vmem:[#allocation2 + $0x19] sm:$0x1]
    %v219 = vld [vmem:[#allocation2 + $0x1a] sm:$0x1]
    %v220 = vld [vmem:[#allocation2 + $0x1b] sm:$0x1]
    %v221 = vld [vmem:[#allocation2 + $0x1c] sm:$0x1]
    %v222 = vld [vmem:[#allocation2 + $0x1d] sm:$0x1]
    %v223 = vld [vmem:[#allocation2 + $0x1e] sm:$0x1]
    %vm224 = vcmask 261120
    %v226 = vsel %vm224, 0.0, 0
    %228 = vmatprep.subr.mxu0 0.0
    %229 = vmatpush1.msra.mxu0 %v187
    %230 = vmatprep.subr.mxu0 0.0
    %231 = vmatpush1.msra.mxu0 %v188
    %232 = vmatprep.subr.mxu0 0.0
    %233 = vmatpush1.msra.mxu0 %v189
    %234 = vmatprep.subr.mxu0 0.0
    %235 = vmatpush1.msra.mxu0 %v190
    %236 = vmatprep.subr.mxu0 0.0
    %237 = vmatpush1.msra.mxu0 0.0
    %238 = vmatprep.subr.mxu0 0.0
    %239 = vmatpush1.msra.mxu0 0.0
    %240 = vmatprep.subr.mxu0 0.0
    %241 = vmatpush1.msra.mxu0 0.0
    %242 = vmatprep.subr.mxu0 0.0
    %243 = vmatpush1.msra.mxu0 0.0
    %244 = vmatprep.subr.mxu0 0.0
    %245 = vmatpush1.msra.mxu0 0.0
    %246 = vmatprep.subr.mxu0 0.0
    %247 = vmatpush1.msra.mxu0 0.0
    %248 = vmatprep.subr.mxu0 0.0
    %249 = vmatpush1.msra.mxu0 0.0
    %250 = vmatprep.subr.mxu0 0.0
    %251 = vmatpush1.msra.mxu0 0.0
    %252 = vmatprep.subr.mxu0 0.0
    %253 = vmatpush1.msra.mxu0 0.0
    %254 = vmatprep.subr.mxu0 0.0
    %255 = vmatpush1.msra.mxu0 0.0
    %256 = vmatprep.subr.mxu0 0.0
    %257 = vmatpush1.msra.mxu0 0.0
    %258 = vmatprep.subr.mxu0 0.0
    %259 = vmatpush1.msra.mxu0 0.0
    %260 = vmatprep.subr.mxu0 0.0
    %261 = vmatpush1.msra.mxu0 0.0
    %262 = vmatprep.subr.mxu0 0.0
    %263 = vmatpush1.msra.mxu0 0.0
    %264 = vmatprep.subr.mxu0 0.0
    %265 = vmatpush1.msra.mxu0 0.0
    %266 = vmatprep.subr.mxu0 0.0
    %267 = vmatpush1.msra.mxu0 0.0
    %268 = vmatprep.subr.mxu0 0.0
    %269 = vmatpush1.msra.mxu0 0.0
    %270 = vmatprep.subr.mxu0 0.0
    %271 = vmatpush1.msra.mxu0 0.0
    %272 = vmatprep.subr.mxu0 0.0
    %273 = vmatpush1.msra.mxu0 0.0
    %274 = vmatprep.subr.mxu0 0.0
    %275 = vmatpush1.msra.mxu0 0.0
    %276 = vmatprep.subr.mxu0 0.0
    %277 = vmatpush1.msra.mxu0 0.0
    %278 = vmatprep.subr.mxu0 0.0
    %279 = vmatpush1.msra.mxu0 0.0
    %280 = vmatprep.subr.mxu0 0.0
    %281 = vmatpush1.msra.mxu0 0.0
    %282 = vmatprep.subr.mxu0 0.0
    %283 = vmatpush1.msra.mxu0 0.0
    %284 = vmatprep.subr.mxu0 0.0
    %285 = vmatpush1.msra.mxu0 0.0
    %286 = vmatprep.subr.mxu0 0.0
    %287 = vmatpush1.msra.mxu0 0.0
    %288 = vmatprep.subr.mxu0 0.0
    %289 = vmatpush1.msra.mxu0 0.0
    %290 = vmatprep.subr.mxu0 0.0
    %291 = vmatpush1.msra.mxu0 0.0
    %292 = vmatprep.mubr.f32.mxu0 0.0
    %293 = vmatmul.mubr.f32.gmra.mrb[0].mxu0 %v226
    %v294 = vpop.f32.mrb[0].mxu0
    %v295 = vadd.f32 0.0, %v294
    %v296 = vpop.f32.mrb[0].mxu0
    %297 = vdwg.mxu0
    %v298 = vadd.f32 %v149, %v295
    %v299 = vlaneseq
    %v300 = vshrl.u32 %v299, 7
    %v301 = vsub.s32 0, %v300
    %v302 = vrot.slane %v193, %v301
    %vm303 = vcmp.ge.f32.partialorder %v298, %v302
    %v304 = vsel %vm303, 1, 0
    %v305 = vcvt.s32.f32 %v304
    %v306 = vadd.f32 %v305, 0.0
    %v307 = vlaneseq
    %v308 = vshrl.u32 %v307, 7
    %v309 = vsub.s32 0, %v308
    %v310 = vrot.slane %v194, %v309
    %vm311 = vcmp.ge.f32.partialorder %v298, %v310
    %v312 = vsel %vm311, 1, 0
    %v313 = vcvt.s32.f32 %v312
    %v314 = vadd.f32 %v306, %v313
    %v315 = vlaneseq
    %v316 = vshrl.u32 %v315, 7
    %v317 = vsub.s32 0, %v316
    %v318 = vrot.slane %v195, %v317
    %vm319 = vcmp.ge.f32.partialorder %v298, %v318
    %v320 = vsel %vm319, 1, 0
    %v321 = vcvt.s32.f32 %v320
    %v322 = vadd.f32 %v314, %v321
    %v323 = vlaneseq
    %v324 = vshrl.u32 %v323, 7
    %v325 = vsub.s32 0, %v324
    %v326 = vrot.slane %v196, %v325
    %vm327 = vcmp.ge.f32.partialorder %v298, %v326
    %v328 = vsel %vm327, 1, 0
    %v329 = vcvt.s32.f32 %v328
    %v330 = vadd.f32 %v322, %v329
    %v331 = vlaneseq
    %v332 = vshrl.u32 %v331, 7
    %v333 = vsub.s32 0, %v332
    %v334 = vrot.slane %v197, %v333
    %vm335 = vcmp.ge.f32.partialorder %v298, %v334
    %v336 = vsel %vm335, 1, 0
    %v337 = vcvt.s32.f32 %v336
    %v338 = vadd.f32 %v330, %v337
    %v339 = vlaneseq
    %v340 = vshrl.u32 %v339, 7
    %v341 = vsub.s32 0, %v340
    %v342 = vrot.slane %v198, %v341
    %vm343 = vcmp.ge.f32.partialorder %v298, %v342
    %v344 = vsel %vm343, 1, 0
    %v345 = vcvt.s32.f32 %v344
    %v346 = vadd.f32 %v338, %v345
    %v347 = vlaneseq
    %v348 = vshrl.u32 %v347, 7
    %v349 = vsub.s32 0, %v348
    %v350 = vrot.slane %v199, %v349
    %vm351 = vcmp.ge.f32.partialorder %v298, %v350
    %v352 = vsel %vm351, 1, 0
    %v353 = vcvt.s32.f32 %v352
    %v354 = vadd.f32 %v346, %v353
    %v355 = vlaneseq
    %v356 = vshrl.u32 %v355, 7
    %v357 = vsub.s32 0, %v356
    %v358 = vrot.slane %v200, %v357
    %vm359 = vcmp.ge.f32.partialorder %v298, %v358
    %v360 = vsel %vm359, 1, 0
    %v361 = vcvt.s32.f32 %v360
    %v362 = vadd.f32 %v354, %v361
    %v363 = vlaneseq
    %v364 = vshrl.u32 %v363, 7
    %v365 = vsub.s32 0, %v364
    %v366 = vrot.slane %v201, %v365
    %vm367 = vcmp.ge.f32.partialorder %v298, %v366
    %v368 = vsel %vm367, 1, 0
    %v369 = vcvt.s32.f32 %v368
    %v370 = vadd.f32 %v362, %v369
    %v371 = vlaneseq
    %v372 = vshrl.u32 %v371, 7
    %v373 = vsub.s32 0, %v372
    %v374 = vrot.slane %v202, %v373
    %vm375 = vcmp.ge.f32.partialorder %v298, %v374
    %v376 = vsel %vm375, 1, 0
    %v377 = vcvt.s32.f32 %v376
    %v378 = vadd.f32 %v370, %v377
    %v379 = vlaneseq
    %v380 = vshrl.u32 %v379, 7
    %v381 = vsub.s32 0, %v380
    %v382 = vrot.slane %v203, %v381
    %vm383 = vcmp.ge.f32.partialorder %v298, %v382
    %v384 = vsel %vm383, 1, 0
    %v385 = vcvt.s32.f32 %v384
    %v386 = vadd.f32 %v378, %v385
    %v387 = vlaneseq
    %v388 = vshrl.u32 %v387, 7
    %v389 = vsub.s32 0, %v388
    %v390 = vrot.slane %v204, %v389
    %vm391 = vcmp.ge.f32.partialorder %v298, %v390
    %v392 = vsel %vm391, 1, 0
    %v393 = vcvt.s32.f32 %v392
    %v394 = vadd.f32 %v386, %v393
    %v395 = vlaneseq
    %v396 = vshrl.u32 %v395, 7
    %v397 = vsub.s32 0, %v396
    %v398 = vrot.slane %v205, %v397
    %vm399 = vcmp.ge.f32.partialorder %v298, %v398
    %v400 = vsel %vm399, 1, 0
    %v401 = vcvt.s32.f32 %v400
    %v402 = vadd.f32 %v394, %v401
    %v403 = vlaneseq
    %v404 = vshrl.u32 %v403, 7
    %v405 = vsub.s32 0, %v404
    %v406 = vrot.slane %v206, %v405
    %vm407 = vcmp.ge.f32.partialorder %v298, %v406
    %v408 = vsel %vm407, 1, 0
    %v409 = vcvt.s32.f32 %v408
    %v410 = vadd.f32 %v402, %v409
    %v411 = vlaneseq
    %v412 = vshrl.u32 %v411, 7
    %v413 = vsub.s32 0, %v412
    %v414 = vrot.slane %v207, %v413
    %vm415 = vcmp.ge.f32.partialorder %v298, %v414
    %v416 = vsel %vm415, 1, 0
    %v417 = vcvt.s32.f32 %v416
    %v418 = vadd.f32 %v410, %v417
    %v419 = vlaneseq
    %v420 = vshrl.u32 %v419, 7
    %v421 = vsub.s32 0, %v420
    %v422 = vrot.slane %v208, %v421
    %vm423 = vcmp.ge.f32.partialorder %v298, %v422
    %v424 = vsel %vm423, 1, 0
    %v425 = vcvt.s32.f32 %v424
    %v426 = vadd.f32 %v418, %v425
    %v427 = vlaneseq
    %v428 = vshrl.u32 %v427, 7
    %v429 = vsub.s32 0, %v428
    %v430 = vrot.slane %v209, %v429
    %vm431 = vcmp.ge.f32.partialorder %v298, %v430
    %v432 = vsel %vm431, 1, 0
    %v433 = vcvt.s32.f32 %v432
    %v434 = vadd.f32 %v426, %v433
    %v435 = vlaneseq
    %v436 = vshrl.u32 %v435, 7
    %v437 = vsub.s32 0, %v436
    %v438 = vrot.slane %v210, %v437
    %vm439 = vcmp.ge.f32.partialorder %v298, %v438
    %v440 = vsel %vm439, 1, 0
    %v441 = vcvt.s32.f32 %v440
    %v442 = vadd.f32 %v434, %v441
    %v443 = vlaneseq
    %v444 = vshrl.u32 %v443, 7
    %v445 = vsub.s32 0, %v444
    %v446 = vrot.slane %v211, %v445
    %vm447 = vcmp.ge.f32.partialorder %v298, %v446
    %v448 = vsel %vm447, 1, 0
    %v449 = vcvt.s32.f32 %v448
    %v450 = vadd.f32 %v442, %v449
    %v451 = vlaneseq
    %v452 = vshrl.u32 %v451, 7
    %v453 = vsub.s32 0, %v452
    %v454 = vrot.slane %v212, %v453
    %vm455 = vcmp.ge.f32.partialorder %v298, %v454
    %v456 = vsel %vm455, 1, 0
    %v457 = vcvt.s32.f32 %v456
    %v458 = vadd.f32 %v450, %v457
    %v459 = vlaneseq
    %v460 = vshrl.u32 %v459, 7
    %v461 = vsub.s32 0, %v460
    %v462 = vrot.slane %v213, %v461
    %vm463 = vcmp.ge.f32.partialorder %v298, %v462
    %v464 = vsel %vm463, 1, 0
    %v465 = vcvt.s32.f32 %v464
    %v466 = vadd.f32 %v458, %v465
    %v467 = vlaneseq
    %v468 = vshrl.u32 %v467, 7
    %v469 = vsub.s32 0, %v468
    %v470 = vrot.slane %v214, %v469
    %vm471 = vcmp.ge.f32.partialorder %v298, %v470
    %v472 = vsel %vm471, 1, 0
    %v473 = vcvt.s32.f32 %v472
    %v474 = vadd.f32 %v466, %v473
    %v475 = vlaneseq
    %v476 = vshrl.u32 %v475, 7
    %v477 = vsub.s32 0, %v476
    %v478 = vrot.slane %v215, %v477
    %vm479 = vcmp.ge.f32.partialorder %v298, %v478
    %v480 = vsel %vm479, 1, 0
    %v481 = vcvt.s32.f32 %v480
    %v482 = vadd.f32 %v474, %v481
    %v483 = vlaneseq
    %v484 = vshrl.u32 %v483, 7
    %v485 = vsub.s32 0, %v484
    %v486 = vrot.slane %v216, %v485
    %vm487 = vcmp.ge.f32.partialorder %v298, %v486
    %v488 = vsel %vm487, 1, 0
    %v489 = vcvt.s32.f32 %v488
    %v490 = vadd.f32 %v482, %v489
    %v491 = vlaneseq
    %v492 = vshrl.u32 %v491, 7
    %v493 = vsub.s32 0, %v492
    %v494 = vrot.slane %v217, %v493
    %vm495 = vcmp.ge.f32.partialorder %v298, %v494
    %v496 = vsel %vm495, 1, 0
    %v497 = vcvt.s32.f32 %v496
    %v498 = vadd.f32 %v490, %v497
    %v499 = vlaneseq
    %v500 = vshrl.u32 %v499, 7
    %v501 = vsub.s32 0, %v500
    %v502 = vrot.slane %v218, %v501
    %vm503 = vcmp.ge.f32.partialorder %v298, %v502
    %v504 = vsel %vm503, 1, 0
    %v505 = vcvt.s32.f32 %v504
    %v506 = vadd.f32 %v498, %v505
    %v507 = vlaneseq
    %v508 = vshrl.u32 %v507, 7
    %v509 = vsub.s32 0, %v508
    %v510 = vrot.slane %v219, %v509
    %vm511 = vcmp.ge.f32.partialorder %v298, %v510
    %v512 = vsel %vm511, 1, 0
    %v513 = vcvt.s32.f32 %v512
    %v514 = vadd.f32 %v506, %v513
    %v515 = vlaneseq
    %v516 = vshrl.u32 %v515, 7
    %v517 = vsub.s32 0, %v516
    %v518 = vrot.slane %v220, %v517
    %vm519 = vcmp.ge.f32.partialorder %v298, %v518
    %v520 = vsel %vm519, 1, 0
    %v521 = vcvt.s32.f32 %v520
    %v522 = vadd.f32 %v514, %v521
    %v523 = vlaneseq
    %v524 = vshrl.u32 %v523, 7
    %v525 = vsub.s32 0, %v524
    %v526 = vrot.slane %v221, %v525
    %vm527 = vcmp.ge.f32.partialorder %v298, %v526
    %v528 = vsel %vm527, 1, 0
    %v529 = vcvt.s32.f32 %v528
    %v530 = vadd.f32 %v522, %v529
    %v531 = vlaneseq
    %v532 = vshrl.u32 %v531, 7
    %v533 = vsub.s32 0, %v532
    %v534 = vrot.slane %v222, %v533
    %vm535 = vcmp.ge.f32.partialorder %v298, %v534
    %v536 = vsel %vm535, 1, 0
    %v537 = vcvt.s32.f32 %v536
    %v538 = vadd.f32 %v530, %v537
    %v539 = vlaneseq
    %v540 = vshrl.u32 %v539, 7
    %v541 = vsub.s32 0, %v540
    %v542 = vrot.slane %v223, %v541
    %vm543 = vcmp.ge.f32.partialorder %v298, %v542
    %v544 = vsel %vm543, 1, 0
    %v545 = vcvt.s32.f32 %v544
    %v546 = vadd.f32 %v538, %v545
    %v548 = vlaneseq
    %v549 = vshrl.u32 %v548, 7
    %v550 = vsub.s32 0, %v549
    %v551 = vrot.slane %v191, %v550
    %v553 = vmul.f32 %v546, %v551
    %v555 = vlaneseq
    %v556 = vshrl.u32 %v555, 7
    %v557 = vsub.s32 0, %v556
    %v558 = vrot.slane %v192, %v557
    %v560 = vadd.f32 %v553, %v558
    %v561 = vmul.f32 %v560, 0.0
    %563 = vrot.lane.b32.xlu0 %v560, 64
    %v564 = vpop.permute.xlu0 %563
    %v566 = vmul.f32 %v560, %v564
    %568 = vrot.lane.b32.xlu0 %v566, 32
    %v569 = vpop.permute.xlu0 %568
    %v571 = vadd.f32 %v561, %v569
    %v572 = vtanh.pop %v571
    %574 = vrot.lane.b32.xlu0 %v572, 64
    %v575 = vpop.permute.xlu0 %574
    %v577 = vmul.f32 %v560, %v575
    %579 = vrot.lane.b32.xlu0 %v577, 32
    %v580 = vpop.permute.xlu0 %579
    %v581 = vsel %vm224, %v580, 0
    %583 = vmatprep.subr.mxu0 0.0
    %584 = vmatpush1.msra.mxu0 %v187
    %585 = vmatprep.subr.mxu0 0.0
    %586 = vmatpush1.msra.mxu0 %v188
    %587 = vmatprep.subr.mxu0 0.0
    %588 = vmatpush1.msra.mxu0 %v189
    %589 = vmatprep.subr.mxu0 0.0
    %590 = vmatpush1.msra.mxu0 %v190
    %591 = vmatprep.subr.mxu0 0.0
    %592 = vmatpush1.msra.mxu0 0.0
    %593 = vmatprep.subr.mxu0 0.0
    %594 = vmatpush1.msra.mxu0 0.0
    %595 = vmatprep.subr.mxu0 0.0
    %596 = vmatpush1.msra.mxu0 0.0
    %597 = vmatprep.subr.mxu0 0.0
    %598 = vmatpush1.msra.mxu0 0.0
    %599 = vmatprep.subr.mxu0 0.0
    %600 = vmatpush1.msra.mxu0 0.0
    %601 = vmatprep.subr.mxu0 0.0
    %602 = vmatpush1.msra.mxu0 0.0
    %603 = vmatprep.subr.mxu0 0.0
    %604 = vmatpush1.msra.mxu0 0.0
    %605 = vmatprep.subr.mxu0 0.0
    %606 = vmatpush1.msra.mxu0 0.0
    %607 = vmatprep.subr.mxu0 0.0
    %608 = vmatpush1.msra.mxu0 0.0
    %609 = vmatprep.subr.mxu0 0.0
    %610 = vmatpush1.msra.mxu0 0.0
    %611 = vmatprep.subr.mxu0 0.0
    %612 = vmatpush1.msra.mxu0 0.0
    %613 = vmatprep.subr.mxu0 0.0
    %614 = vmatpush1.msra.mxu0 0.0
    %615 = vmatprep.subr.mxu0 0.0
    %616 = vmatpush1.msra.mxu0 0.0
    %617 = vmatprep.subr.mxu0 0.0
    %618 = vmatpush1.msra.mxu0 0.0
    %619 = vmatprep.subr.mxu0 0.0
    %620 = vmatpush1.msra.mxu0 0.0
    %621 = vmatprep.subr.mxu0 0.0
    %622 = vmatpush1.msra.mxu0 0.0
    %623 = vmatprep.subr.mxu0 0.0
    %624 = vmatpush1.msra.mxu0 0.0
    %625 = vmatprep.subr.mxu0 0.0
    %626 = vmatpush1.msra.mxu0 0.0
    %627 = vmatprep.subr.mxu0 0.0
    %628 = vmatpush1.msra.mxu0 0.0
    %629 = vmatprep.subr.mxu0 0.0
    %630 = vmatpush1.msra.mxu0 0.0
    %631 = vmatprep.subr.mxu0 0.0
    %632 = vmatpush1.msra.mxu0 0.0
    %633 = vmatprep.subr.mxu0 0.0
    %634 = vmatpush1.msra.mxu0 0.0
    %635 = vmatprep.subr.mxu0 0.0
    %636 = vmatpush1.msra.mxu0 0.0
    %637 = vmatprep.subr.mxu0 0.0
    %638 = vmatpush1.msra.mxu0 0.0
    %639 = vmatprep.subr.mxu0 0.0
    %640 = vmatpush1.msra.mxu0 0.0
    %641 = vmatprep.subr.mxu0 0.0
    %642 = vmatpush1.msra.mxu0 0.0
    %643 = vmatprep.subr.mxu0 0.0
    %644 = vmatpush1.msra.mxu0 0.0
    %645 = vmatprep.subr.mxu0 0.0
    %646 = vmatpush1.msra.mxu0 0.0
    %647 = vmatprep.mubr.f32.mxu0 0.0
    %648 = vmatmul.mubr.f32.gmra.mrb[0].mxu0 %v581
    %v649 = vpop.f32.mrb[0].mxu0
    %v650 = vadd.f32 0.0, %v649
    %v651 = vpop.f32.mrb[0].mxu0
    %652 = vdwg.mxu0
    %v653 = vadd.f32 %v154, %v650
    %vm654 = vcmp.ge.f32.partialorder %v653, %v302
    %v655 = vsel %vm654, 1, 0
    %v656 = vcvt.s32.f32 %v655
    %v657 = vadd.f32 %v656, 0.0
    %vm658 = vcmp.ge.f32.partialorder %v653, %v310
    %v659 = vsel %vm658, 1, 0
    %v660 = vcvt.s32.f32 %v659
    %v661 = vadd.f32 %v657, %v660
    %vm662 = vcmp.ge.f32.partialorder %v653, %v318
    %v663 = vsel %vm662, 1, 0
    %v664 = vcvt.s32.f32 %v663
    %v665 = vadd.f32 %v661, %v664
    %vm666 = vcmp.ge.f32.partialorder %v653, %v326
    %v667 = vsel %vm666, 1, 0
    %v668 = vcvt.s32.f32 %v667
    %v669 = vadd.f32 %v665, %v668
    %vm670 = vcmp.ge.f32.partialorder %v653, %v334
    %v671 = vsel %vm670, 1, 0
    %v672 = vcvt.s32.f32 %v671
    %v673 = vadd.f32 %v669, %v672
    %vm674 = vcmp.ge.f32.partialorder %v653, %v342
    %v675 = vsel %vm674, 1, 0
    %v676 = vcvt.s32.f32 %v675
    %v677 = vadd.f32 %v673, %v676
    %vm678 = vcmp.ge.f32.partialorder %v653, %v350
    %v679 = vsel %vm678, 1, 0
    %v680 = vcvt.s32.f32 %v679
    %v681 = vadd.f32 %v677, %v680
    %vm682 = vcmp.ge.f32.partialorder %v653, %v358
    %v683 = vsel %vm682, 1, 0
    %v684 = vcvt.s32.f32 %v683
    %v685 = vadd.f32 %v681, %v684
    %vm686 = vcmp.ge.f32.partialorder %v653, %v366
    %v687 = vsel %vm686, 1, 0
    %v688 = vcvt.s32.f32 %v687
    %v689 = vadd.f32 %v685, %v688
    %vm690 = vcmp.ge.f32.partialorder %v653, %v374
    %v691 = vsel %vm690, 1, 0
    %v692 = vcvt.s32.f32 %v691
    %v693 = vadd.f32 %v689, %v692
    %vm694 = vcmp.ge.f32.partialorder %v653, %v382
    %v695 = vsel %vm694, 1, 0
    %v696 = vcvt.s32.f32 %v695
    %v697 = vadd.f32 %v693, %v696
    %vm698 = vcmp.ge.f32.partialorder %v653, %v390
    %v699 = vsel %vm698, 1, 0
    %v700 = vcvt.s32.f32 %v699
    %v701 = vadd.f32 %v697, %v700
    %vm702 = vcmp.ge.f32.partialorder %v653, %v398
    %v703 = vsel %vm702, 1, 0
    %v704 = vcvt.s32.f32 %v703
    %v705 = vadd.f32 %v701, %v704
    %vm706 = vcmp.ge.f32.partialorder %v653, %v406
    %v707 = vsel %vm706, 1, 0
    %v708 = vcvt.s32.f32 %v707
    %v709 = vadd.f32 %v705, %v708
    %vm710 = vcmp.ge.f32.partialorder %v653, %v414
    %v711 = vsel %vm710, 1, 0
    %v712 = vcvt.s32.f32 %v711
    %v713 = vadd.f32 %v709, %v712
    %vm714 = vcmp.ge.f32.partialorder %v653, %v422
    %v715 = vsel %vm714, 1, 0
    %v716 = vcvt.s32.f32 %v715
    %v717 = vadd.f32 %v713, %v716
    %vm718 = vcmp.ge.f32.partialorder %v653, %v430
    %v719 = vsel %vm718, 1, 0
    %v720 = vcvt.s32.f32 %v719
    %v721 = vadd.f32 %v717, %v720
    %vm722 = vcmp.ge.f32.partialorder %v653, %v438
    %v723 = vsel %vm722, 1, 0
    %v724 = vcvt.s32.f32 %v723
    %v725 = vadd.f32 %v721, %v724
    %vm726 = vcmp.ge.f32.partialorder %v653, %v446
    %v727 = vsel %vm726, 1, 0
    %v728 = vcvt.s32.f32 %v727
    %v729 = vadd.f32 %v725, %v728
    %vm730 = vcmp.ge.f32.partialorder %v653, %v454
    %v731 = vsel %vm730, 1, 0
    %v732 = vcvt.s32.f32 %v731
    %v733 = vadd.f32 %v729, %v732
    %vm734 = vcmp.ge.f32.partialorder %v653, %v462
    %v735 = vsel %vm734, 1, 0
    %v736 = vcvt.s32.f32 %v735
    %v737 = vadd.f32 %v733, %v736
    %vm738 = vcmp.ge.f32.partialorder %v653, %v470
    %v739 = vsel %vm738, 1, 0
    %v740 = vcvt.s32.f32 %v739
    %v741 = vadd.f32 %v737, %v740
    %vm742 = vcmp.ge.f32.partialorder %v653, %v478
    %v743 = vsel %vm742, 1, 0
    %v744 = vcvt.s32.f32 %v743
    %v745 = vadd.f32 %v741, %v744
    %vm746 = vcmp.ge.f32.partialorder %v653, %v486
    %v747 = vsel %vm746, 1, 0
    %v748 = vcvt.s32.f32 %v747
    %v749 = vadd.f32 %v745, %v748
    %vm750 = vcmp.ge.f32.partialorder %v653, %v494
    %v751 = vsel %vm750, 1, 0
    %v752 = vcvt.s32.f32 %v751
    %v753 = vadd.f32 %v749, %v752
    %vm754 = vcmp.ge.f32.partialorder %v653, %v502
    %v755 = vsel %vm754, 1, 0
    %v756 = vcvt.s32.f32 %v755
    %v757 = vadd.f32 %v753, %v756
    %vm758 = vcmp.ge.f32.partialorder %v653, %v510
    %v759 = vsel %vm758, 1, 0
    %v760 = vcvt.s32.f32 %v759
    %v761 = vadd.f32 %v757, %v760
    %vm762 = vcmp.ge.f32.partialorder %v653, %v518
    %v763 = vsel %vm762, 1, 0
    %v764 = vcvt.s32.f32 %v763
    %v765 = vadd.f32 %v761, %v764
    %vm766 = vcmp.ge.f32.partialorder %v653, %v526
    %v767 = vsel %vm766, 1, 0
    %v768 = vcvt.s32.f32 %v767
    %v769 = vadd.f32 %v765, %v768
    %vm770 = vcmp.ge.f32.partialorder %v653, %v534
    %v771 = vsel %vm770, 1, 0
    %v772 = vcvt.s32.f32 %v771
    %v773 = vadd.f32 %v769, %v772
    %vm774 = vcmp.ge.f32.partialorder %v653, %v542
    %v775 = vsel %vm774, 1, 0
    %v776 = vcvt.s32.f32 %v775
    %v777 = vadd.f32 %v773, %v776
    %v778 = vmul.f32 %v777, %v551
    %v779 = vadd.f32 %v778, %v558
    %v780 = vmul.f32 %v779, %v571
    %782 = vrot.lane.b32.xlu0 %v779, 64
    %v783 = vpop.permute.xlu0 %782
    %v785 = vmul.f32 %v779, %v783
    %787 = vrot.lane.b32.xlu0 %v785, 32
    %v788 = vpop.permute.xlu0 %787
    %v790 = vadd.f32 %v780, %v788
    %v791 = vtanh.pop %v790
    %793 = vrot.lane.b32.xlu0 %v791, 64
    %v794 = vpop.permute.xlu0 %793
    %v796 = vmul.f32 %v779, %v794
    %798 = vrot.lane.b32.xlu0 %v796, 32
    %v799 = vpop.permute.xlu0 %798
    %v800 = vsel %vm224, %v799, 0
    %802 = vmatprep.subr.mxu0 0.0
    %803 = vmatpush1.msra.mxu0 %v187
    %804 = vmatprep.subr.mxu0 0.0
    %805 = vmatpush1.msra.mxu0 %v188
    %806 = vmatprep.subr.mxu0 0.0
    %807 = vmatpush1.msra.mxu0 %v189
    %808 = vmatprep.subr.mxu0 0.0
    %809 = vmatpush1.msra.mxu0 %v190
    %810 = vmatprep.subr.mxu0 0.0
    %811 = vmatpush1.msra.mxu0 0.0
    %812 = vmatprep.subr.mxu0 0.0
    %813 = vmatpush1.msra.mxu0 0.0
    %814 = vmatprep.subr.mxu0 0.0
    %815 = vmatpush1.msra.mxu0 0.0
    %816 = vmatprep.subr.mxu0 0.0
    %817 = vmatpush1.msra.mxu0 0.0
    %818 = vmatprep.subr.mxu0 0.0
    %819 = vmatpush1.msra.mxu0 0.0
    %820 = vmatprep.subr.mxu0 0.0
    %821 = vmatpush1.msra.mxu0 0.0
    %822 = vmatprep.subr.mxu0 0.0
    %823 = vmatpush1.msra.mxu0 0.0
    %824 = vmatprep.subr.mxu0 0.0
    %825 = vmatpush1.msra.mxu0 0.0
    %826 = vmatprep.subr.mxu0 0.0
    %827 = vmatpush1.msra.mxu0 0.0
    %828 = vmatprep.subr.mxu0 0.0
    %829 = vmatpush1.msra.mxu0 0.0
    %830 = vmatprep.subr.mxu0 0.0
    %831 = vmatpush1.msra.mxu0 0.0
    %832 = vmatprep.subr.mxu0 0.0
    %833 = vmatpush1.msra.mxu0 0.0
    %834 = vmatprep.subr.mxu0 0.0
    %835 = vmatpush1.msra.mxu0 0.0
    %836 = vmatprep.subr.mxu0 0.0
    %837 = vmatpush1.msra.mxu0 0.0
    %838 = vmatprep.subr.mxu0 0.0
    %839 = vmatpush1.msra.mxu0 0.0
    %840 = vmatprep.subr.mxu0 0.0
    %841 = vmatpush1.msra.mxu0 0.0
    %842 = vmatprep.subr.mxu0 0.0
    %843 = vmatpush1.msra.mxu0 0.0
    %844 = vmatprep.subr.mxu0 0.0
    %845 = vmatpush1.msra.mxu0 0.0
    %846 = vmatprep.subr.mxu0 0.0
    %847 = vmatpush1.msra.mxu0 0.0
    %848 = vmatprep.subr.mxu0 0.0
    %849 = vmatpush1.msra.mxu0 0.0
    %850 = vmatprep.subr.mxu0 0.0
    %851 = vmatpush1.msra.mxu0 0.0
    %852 = vmatprep.subr.mxu0 0.0
    %853 = vmatpush1.msra.mxu0 0.0
    %854 = vmatprep.subr.mxu0 0.0
    %855 = vmatpush1.msra.mxu0 0.0
    %856 = vmatprep.subr.mxu0 0.0
    %857 = vmatpush1.msra.mxu0 0.0
    %858 = vmatprep.subr.mxu0 0.0
    %859 = vmatpush1.msra.mxu0 0.0
    %860 = vmatprep.subr.mxu0 0.0
    %861 = vmatpush1.msra.mxu0 0.0
    %862 = vmatprep.subr.mxu0 0.0
    %863 = vmatpush1.msra.mxu0 0.0
    %864 = vmatprep.subr.mxu0 0.0
    %865 = vmatpush1.msra.mxu0 0.0
    %866 = vmatprep.mubr.f32.mxu0 0.0
    %867 = vmatmul.mubr.f32.gmra.mrb[0].mxu0 %v800
    %v868 = vpop.f32.mrb[0].mxu0
    %v869 = vadd.f32 0.0, %v868
    %v870 = vpop.f32.mrb[0].mxu0
    %871 = vdwg.mxu0
    %v872 = vadd.f32 %v159, %v869
    %vm873 = vcmp.ge.f32.partialorder %v872, %v302
    %v874 = vsel %vm873, 1, 0
    %v875 = vcvt.s32.f32 %v874
    %v876 = vadd.f32 %v875, 0.0
    %vm877 = vcmp.ge.f32.partialorder %v872, %v310
    %v878 = vsel %vm877, 1, 0
    %v879 = vcvt.s32.f32 %v878
    %v880 = vadd.f32 %v876, %v879
    %vm881 = vcmp.ge.f32.partialorder %v872, %v318
    %v882 = vsel %vm881, 1, 0
    %v883 = vcvt.s32.f32 %v882
    %v884 = vadd.f32 %v880, %v883
    %vm885 = vcmp.ge.f32.partialorder %v872, %v326
    %v886 = vsel %vm885, 1, 0
    %v887 = vcvt.s32.f32 %v886
    %v888 = vadd.f32 %v884, %v887
    %vm889 = vcmp.ge.f32.partialorder %v872, %v334
    %v890 = vsel %vm889, 1, 0
    %v891 = vcvt.s32.f32 %v890
    %v892 = vadd.f32 %v888, %v891
    %vm893 = vcmp.ge.f32.partialorder %v872, %v342
    %v894 = vsel %vm893, 1, 0
    %v895 = vcvt.s32.f32 %v894
    %v896 = vadd.f32 %v892, %v895
    %vm897 = vcmp.ge.f32.partialorder %v872, %v350
    %v898 = vsel %vm897, 1, 0
    %v899 = vcvt.s32.f32 %v898
    %v900 = vadd.f32 %v896, %v899
    %vm901 = vcmp.ge.f32.partialorder %v872, %v358
    %v902 = vsel %vm901, 1, 0
    %v903 = vcvt.s32.f32 %v902
    %v904 = vadd.f32 %v900, %v903
    %vm905 = vcmp.ge.f32.partialorder %v872, %v366
    %v906 = vsel %vm905, 1, 0
    %v907 = vcvt.s32.f32 %v906
    %v908 = vadd.f32 %v904, %v907
    %vm909 = vcmp.ge.f32.partialorder %v872, %v374
    %v910 = vsel %vm909, 1, 0
    %v911 = vcvt.s32.f32 %v910
    %v912 = vadd.f32 %v908, %v911
    %vm913 = vcmp.ge.f32.partialorder %v872, %v382
    %v914 = vsel %vm913, 1, 0
    %v915 = vcvt.s32.f32 %v914
    %v916 = vadd.f32 %v912, %v915
    %vm917 = vcmp.ge.f32.partialorder %v872, %v390
    %v918 = vsel %vm917, 1, 0
    %v919 = vcvt.s32.f32 %v918
    %v920 = vadd.f32 %v916, %v919
    %vm921 = vcmp.ge.f32.partialorder %v872, %v398
    %v922 = vsel %vm921, 1, 0
    %v923 = vcvt.s32.f32 %v922
    %v924 = vadd.f32 %v920, %v923
    %vm925 = vcmp.ge.f32.partialorder %v872, %v406
    %v926 = vsel %vm925, 1, 0
    %v927 = vcvt.s32.f32 %v926
    %v928 = vadd.f32 %v924, %v927
    %vm929 = vcmp.ge.f32.partialorder %v872, %v414
    %v930 = vsel %vm929, 1, 0
    %v931 = vcvt.s32.f32 %v930
    %v932 = vadd.f32 %v928, %v931
    %vm933 = vcmp.ge.f32.partialorder %v872, %v422
    %v934 = vsel %vm933, 1, 0
    %v935 = vcvt.s32.f32 %v934
    %v936 = vadd.f32 %v932, %v935
    %vm937 = vcmp.ge.f32.partialorder %v872, %v430
    %v938 = vsel %vm937, 1, 0
    %v939 = vcvt.s32.f32 %v938
    %v940 = vadd.f32 %v936, %v939
    %vm941 = vcmp.ge.f32.partialorder %v872, %v438
    %v942 = vsel %vm941, 1, 0
    %v943 = vcvt.s32.f32 %v942
    %v944 = vadd.f32 %v940, %v943
    %vm945 = vcmp.ge.f32.partialorder %v872, %v446
    %v946 = vsel %vm945, 1, 0
    %v947 = vcvt.s32.f32 %v946
    %v948 = vadd.f32 %v944, %v947
    %vm949 = vcmp.ge.f32.partialorder %v872, %v454
    %v950 = vsel %vm949, 1, 0
    %v951 = vcvt.s32.f32 %v950
    %v952 = vadd.f32 %v948, %v951
    %vm953 = vcmp.ge.f32.partialorder %v872, %v462
    %v954 = vsel %vm953, 1, 0
    %v955 = vcvt.s32.f32 %v954
    %v956 = vadd.f32 %v952, %v955
    %vm957 = vcmp.ge.f32.partialorder %v872, %v470
    %v958 = vsel %vm957, 1, 0
    %v959 = vcvt.s32.f32 %v958
    %v960 = vadd.f32 %v956, %v959
    %vm961 = vcmp.ge.f32.partialorder %v872, %v478
    %v962 = vsel %vm961, 1, 0
    %v963 = vcvt.s32.f32 %v962
    %v964 = vadd.f32 %v960, %v963
    %vm965 = vcmp.ge.f32.partialorder %v872, %v486
    %v966 = vsel %vm965, 1, 0
    %v967 = vcvt.s32.f32 %v966
    %v968 = vadd.f32 %v964, %v967
    %vm969 = vcmp.ge.f32.partialorder %v872, %v494
    %v970 = vsel %vm969, 1, 0
    %v971 = vcvt.s32.f32 %v970
    %v972 = vadd.f32 %v968, %v971
    %vm973 = vcmp.ge.f32.partialorder %v872, %v502
    %v974 = vsel %vm973, 1, 0
    %v975 = vcvt.s32.f32 %v974
    %v976 = vadd.f32 %v972, %v975
    %vm977 = vcmp.ge.f32.partialorder %v872, %v510
    %v978 = vsel %vm977, 1, 0
    %v979 = vcvt.s32.f32 %v978
    %v980 = vadd.f32 %v976, %v979
    %vm981 = vcmp.ge.f32.partialorder %v872, %v518
    %v982 = vsel %vm981, 1, 0
    %v983 = vcvt.s32.f32 %v982
    %v984 = vadd.f32 %v980, %v983
    %vm985 = vcmp.ge.f32.partialorder %v872, %v526
    %v986 = vsel %vm985, 1, 0
    %v987 = vcvt.s32.f32 %v986
    %v988 = vadd.f32 %v984, %v987
    %vm989 = vcmp.ge.f32.partialorder %v872, %v534
    %v990 = vsel %vm989, 1, 0
    %v991 = vcvt.s32.f32 %v990
    %v992 = vadd.f32 %v988, %v991
    %vm993 = vcmp.ge.f32.partialorder %v872, %v542
    %v994 = vsel %vm993, 1, 0
    %v995 = vcvt.s32.f32 %v994
    %v996 = vadd.f32 %v992, %v995
    %v997 = vmul.f32 %v996, %v551
    %v998 = vadd.f32 %v997, %v558
    %v999 = vmul.f32 %v998, %v790
    %1001 = vrot.lane.b32.xlu0 %v998, 64
    %v1002 = vpop.permute.xlu0 %1001
    %v1004 = vmul.f32 %v998, %v1002
    %1006 = vrot.lane.b32.xlu0 %v1004, 32
    %v1007 = vpop.permute.xlu0 %1006
    %v1009 = vadd.f32 %v999, %v1007
    %v1010 = vtanh.pop %v1009
    %1012 = vrot.lane.b32.xlu0 %v1010, 64
    %v1013 = vpop.permute.xlu0 %1012
    %v1015 = vmul.f32 %v998, %v1013
    %1017 = vrot.lane.b32.xlu0 %v1015, 32
    %v1018 = vpop.permute.xlu0 %1017
    %v1019 = vsel %vm224, %v1018, 0
    %1021 = vmatprep.subr.mxu0 0.0
    %1022 = vmatpush1.msra.mxu0 %v187
    %1023 = vmatprep.subr.mxu0 0.0
    %1024 = vmatpush1.msra.mxu0 %v188
    %1025 = vmatprep.subr.mxu0 0.0
    %1026 = vmatpush1.msra.mxu0 %v189
    %1027 = vmatprep.subr.mxu0 0.0
    %1028 = vmatpush1.msra.mxu0 %v190
    %1029 = vmatprep.subr.mxu0 0.0
    %1030 = vmatpush1.msra.mxu0 0.0
    %1031 = vmatprep.subr.mxu0 0.0
    %1032 = vmatpush1.msra.mxu0 0.0
    %1033 = vmatprep.subr.mxu0 0.0
    %1034 = vmatpush1.msra.mxu0 0.0
    %1035 = vmatprep.subr.mxu0 0.0
    %1036 = vmatpush1.msra.mxu0 0.0
    %1037 = vmatprep.subr.mxu0 0.0
    %1038 = vmatpush1.msra.mxu0 0.0
    %1039 = vmatprep.subr.mxu0 0.0
    %1040 = vmatpush1.msra.mxu0 0.0
    %1041 = vmatprep.subr.mxu0 0.0
    %1042 = vmatpush1.msra.mxu0 0.0
    %1043 = vmatprep.subr.mxu0 0.0
    %1044 = vmatpush1.msra.mxu0 0.0
    %1045 = vmatprep.subr.mxu0 0.0
    %1046 = vmatpush1.msra.mxu0 0.0
    %1047 = vmatprep.subr.mxu0 0.0
    %1048 = vmatpush1.msra.mxu0 0.0
    %1049 = vmatprep.subr.mxu0 0.0
    %1050 = vmatpush1.msra.mxu0 0.0
    %1051 = vmatprep.subr.mxu0 0.0
    %1052 = vmatpush1.msra.mxu0 0.0
    %1053 = vmatprep.subr.mxu0 0.0
    %1054 = vmatpush1.msra.mxu0 0.0
    %1055 = vmatprep.subr.mxu0 0.0
    %1056 = vmatpush1.msra.mxu0 0.0
    %1057 = vmatprep.subr.mxu0 0.0
    %1058 = vmatpush1.msra.mxu0 0.0
    %1059 = vmatprep.subr.mxu0 0.0
    %1060 = vmatpush1.msra.mxu0 0.0
    %1061 = vmatprep.subr.mxu0 0.0
    %1062 = vmatpush1.msra.mxu0 0.0
    %1063 = vmatprep.subr.mxu0 0.0
    %1064 = vmatpush1.msra.mxu0 0.0
    %1065 = vmatprep.subr.mxu0 0.0
    %1066 = vmatpush1.msra.mxu0 0.0
    %1067 = vmatprep.subr.mxu0 0.0
    %1068 = vmatpush1.msra.mxu0 0.0
    %1069 = vmatprep.subr.mxu0 0.0
    %1070 = vmatpush1.msra.mxu0 0.0
    %1071 = vmatprep.subr.mxu0 0.0
    %1072 = vmatpush1.msra.mxu0 0.0
    %1073 = vmatprep.subr.mxu0 0.0
    %1074 = vmatpush1.msra.mxu0 0.0
    %1075 = vmatprep.subr.mxu0 0.0
    %1076 = vmatpush1.msra.mxu0 0.0
    %1077 = vmatprep.subr.mxu0 0.0
    %1078 = vmatpush1.msra.mxu0 0.0
    %1079 = vmatprep.subr.mxu0 0.0
    %1080 = vmatpush1.msra.mxu0 0.0
    %1081 = vmatprep.subr.mxu0 0.0
    %1082 = vmatpush1.msra.mxu0 0.0
    %1083 = vmatprep.subr.mxu0 0.0
    %1084 = vmatpush1.msra.mxu0 0.0
    %1085 = vmatprep.mubr.f32.mxu0 0.0
    %1086 = vmatmul.mubr.f32.gmra.mrb[0].mxu0 %v1019
    %v1087 = vpop.f32.mrb[0].mxu0
    %v1088 = vadd.f32 0.0, %v1087
    %v1089 = vpop.f32.mrb[0].mxu0
    %1090 = vdwg.mxu0
    %v1091 = vadd.f32 %v164, %v1088
    %vm1092 = vcmp.ge.f32.partialorder %v1091, %v302
    %v1093 = vsel %vm1092, 1, 0
    %v1094 = vcvt.s32.f32 %v1093
    %v1095 = vadd.f32 %v1094, 0.0
    %vm1096 = vcmp.ge.f32.partialorder %v1091, %v310
    %v1097 = vsel %vm1096, 1, 0
    %v1098 = vcvt.s32.f32 %v1097
    %v1099 = vadd.f32 %v1095, %v1098
    %vm1100 = vcmp.ge.f32.partialorder %v1091, %v318
    %v1101 = vsel %vm1100, 1, 0
    %v1102 = vcvt.s32.f32 %v1101
    %v1103 = vadd.f32 %v1099, %v1102
    %vm1104 = vcmp.ge.f32.partialorder %v1091, %v326
    %v1105 = vsel %vm1104, 1, 0
    %v1106 = vcvt.s32.f32 %v1105
    %v1107 = vadd.f32 %v1103, %v1106
    %vm1108 = vcmp.ge.f32.partialorder %v1091, %v334
    %v1109 = vsel %vm1108, 1, 0
    %v1110 = vcvt.s32.f32 %v1109
    %v1111 = vadd.f32 %v1107, %v1110
    %vm1112 = vcmp.ge.f32.partialorder %v1091, %v342
    %v1113 = vsel %vm1112, 1, 0
    %v1114 = vcvt.s32.f32 %v1113
    %v1115 = vadd.f32 %v1111, %v1114
    %vm1116 = vcmp.ge.f32.partialorder %v1091, %v350
    %v1117 = vsel %vm1116, 1, 0
    %v1118 = vcvt.s32.f32 %v1117
    %v1119 = vadd.f32 %v1115, %v1118
    %vm1120 = vcmp.ge.f32.partialorder %v1091, %v358
    %v1121 = vsel %vm1120, 1, 0
    %v1122 = vcvt.s32.f32 %v1121
    %v1123 = vadd.f32 %v1119, %v1122
    %vm1124 = vcmp.ge.f32.partialorder %v1091, %v366
    %v1125 = vsel %vm1124, 1, 0
    %v1126 = vcvt.s32.f32 %v1125
    %v1127 = vadd.f32 %v1123, %v1126
    %vm1128 = vcmp.ge.f32.partialorder %v1091, %v374
    %v1129 = vsel %vm1128, 1, 0
    %v1130 = vcvt.s32.f32 %v1129
    %v1131 = vadd.f32 %v1127, %v1130
    %vm1132 = vcmp.ge.f32.partialorder %v1091, %v382
    %v1133 = vsel %vm1132, 1, 0
    %v1134 = vcvt.s32.f32 %v1133
    %v1135 = vadd.f32 %v1131, %v1134
    %vm1136 = vcmp.ge.f32.partialorder %v1091, %v390
    %v1137 = vsel %vm1136, 1, 0
    %v1138 = vcvt.s32.f32 %v1137
    %v1139 = vadd.f32 %v1135, %v1138
    %vm1140 = vcmp.ge.f32.partialorder %v1091, %v398
    %v1141 = vsel %vm1140, 1, 0
    %v1142 = vcvt.s32.f32 %v1141
    %v1143 = vadd.f32 %v1139, %v1142
    %vm1144 = vcmp.ge.f32.partialorder %v1091, %v406
    %v1145 = vsel %vm1144, 1, 0
    %v1146 = vcvt.s32.f32 %v1145
    %v1147 = vadd.f32 %v1143, %v1146
    %vm1148 = vcmp.ge.f32.partialorder %v1091, %v414
    %v1149 = vsel %vm1148, 1, 0
    %v1150 = vcvt.s32.f32 %v1149
    %v1151 = vadd.f32 %v1147, %v1150
    %vm1152 = vcmp.ge.f32.partialorder %v1091, %v422
    %v1153 = vsel %vm1152, 1, 0
    %v1154 = vcvt.s32.f32 %v1153
    %v1155 = vadd.f32 %v1151, %v1154
    %vm1156 = vcmp.ge.f32.partialorder %v1091, %v430
    %v1157 = vsel %vm1156, 1, 0
    %v1158 = vcvt.s32.f32 %v1157
    %v1159 = vadd.f32 %v1155, %v1158
    %vm1160 = vcmp.ge.f32.partialorder %v1091, %v438
    %v1161 = vsel %vm1160, 1, 0
    %v1162 = vcvt.s32.f32 %v1161
    %v1163 = vadd.f32 %v1159, %v1162
    %vm1164 = vcmp.ge.f32.partialorder %v1091, %v446
    %v1165 = vsel %vm1164, 1, 0
    %v1166 = vcvt.s32.f32 %v1165
    %v1167 = vadd.f32 %v1163, %v1166
    %vm1168 = vcmp.ge.f32.partialorder %v1091, %v454
    %v1169 = vsel %vm1168, 1, 0
    %v1170 = vcvt.s32.f32 %v1169
    %v1171 = vadd.f32 %v1167, %v1170
    %vm1172 = vcmp.ge.f32.partialorder %v1091, %v462
    %v1173 = vsel %vm1172, 1, 0
    %v1174 = vcvt.s32.f32 %v1173
    %v1175 = vadd.f32 %v1171, %v1174
    %vm1176 = vcmp.ge.f32.partialorder %v1091, %v470
    %v1177 = vsel %vm1176, 1, 0
    %v1178 = vcvt.s32.f32 %v1177
    %v1179 = vadd.f32 %v1175, %v1178
    %vm1180 = vcmp.ge.f32.partialorder %v1091, %v478
    %v1181 = vsel %vm1180, 1, 0
    %v1182 = vcvt.s32.f32 %v1181
    %v1183 = vadd.f32 %v1179, %v1182
    %vm1184 = vcmp.ge.f32.partialorder %v1091, %v486
    %v1185 = vsel %vm1184, 1, 0
    %v1186 = vcvt.s32.f32 %v1185
    %v1187 = vadd.f32 %v1183, %v1186
    %vm1188 = vcmp.ge.f32.partialorder %v1091, %v494
    %v1189 = vsel %vm1188, 1, 0
    %v1190 = vcvt.s32.f32 %v1189
    %v1191 = vadd.f32 %v1187, %v1190
    %vm1192 = vcmp.ge.f32.partialorder %v1091, %v502
    %v1193 = vsel %vm1192, 1, 0
    %v1194 = vcvt.s32.f32 %v1193
    %v1195 = vadd.f32 %v1191, %v1194
    %vm1196 = vcmp.ge.f32.partialorder %v1091, %v510
    %v1197 = vsel %vm1196, 1, 0
    %v1198 = vcvt.s32.f32 %v1197
    %v1199 = vadd.f32 %v1195, %v1198
    %vm1200 = vcmp.ge.f32.partialorder %v1091, %v518
    %v1201 = vsel %vm1200, 1, 0
    %v1202 = vcvt.s32.f32 %v1201
    %v1203 = vadd.f32 %v1199, %v1202
    %vm1204 = vcmp.ge.f32.partialorder %v1091, %v526
    %v1205 = vsel %vm1204, 1, 0
    %v1206 = vcvt.s32.f32 %v1205
    %v1207 = vadd.f32 %v1203, %v1206
    %vm1208 = vcmp.ge.f32.partialorder %v1091, %v534
    %v1209 = vsel %vm1208, 1, 0
    %v1210 = vcvt.s32.f32 %v1209
    %v1211 = vadd.f32 %v1207, %v1210
    %vm1212 = vcmp.ge.f32.partialorder %v1091, %v542
    %v1213 = vsel %vm1212, 1, 0
    %v1214 = vcvt.s32.f32 %v1213
    %v1215 = vadd.f32 %v1211, %v1214
    %v1216 = vmul.f32 %v1215, %v551
    %v1217 = vadd.f32 %v1216, %v558
    %v1218 = vmul.f32 %v1217, %v1009
    %1220 = vrot.lane.b32.xlu0 %v1217, 64
    %v1221 = vpop.permute.xlu0 %1220
    %v1223 = vmul.f32 %v1217, %v1221
    %1225 = vrot.lane.b32.xlu0 %v1223, 32
    %v1226 = vpop.permute.xlu0 %1225
    %v1228 = vadd.f32 %v1218, %v1226
    %v1229 = vtanh.pop %v1228
    %1231 = vrot.lane.b32.xlu0 %v1229, 64
    %v1232 = vpop.permute.xlu0 %1231
    %v1234 = vmul.f32 %v1217, %v1232
    %1236 = vrot.lane.b32.xlu0 %v1234, 32
    %v1237 = vpop.permute.xlu0 %1236
    %v1238 = vsel %vm224, %v1237, 0
    %1240 = vmatprep.subr.mxu0 0.0
    %1241 = vmatpush1.msra.mxu0 %v187
    %1242 = vmatprep.subr.mxu0 0.0
    %1243 = vmatpush1.msra.mxu0 %v188
    %1244 = vmatprep.subr.mxu0 0.0
    %1245 = vmatpush1.msra.mxu0 %v189
    %1246 = vmatprep.subr.mxu0 0.0
    %1247 = vmatpush1.msra.mxu0 %v190
    %1248 = vmatprep.subr.mxu0 0.0
    %1249 = vmatpush1.msra.mxu0 0.0
    %1250 = vmatprep.subr.mxu0 0.0
    %1251 = vmatpush1.msra.mxu0 0.0
    %1252 = vmatprep.subr.mxu0 0.0
    %1253 = vmatpush1.msra.mxu0 0.0
    %1254 = vmatprep.subr.mxu0 0.0
    %1255 = vmatpush1.msra.mxu0 0.0
    %1256 = vmatprep.subr.mxu0 0.0
    %1257 = vmatpush1.msra.mxu0 0.0
    %1258 = vmatprep.subr.mxu0 0.0
    %1259 = vmatpush1.msra.mxu0 0.0
    %1260 = vmatprep.subr.mxu0 0.0
    %1261 = vmatpush1.msra.mxu0 0.0
    %1262 = vmatprep.subr.mxu0 0.0
    %1263 = vmatpush1.msra.mxu0 0.0
    %1264 = vmatprep.subr.mxu0 0.0
    %1265 = vmatpush1.msra.mxu0 0.0
    %1266 = vmatprep.subr.mxu0 0.0
    %1267 = vmatpush1.msra.mxu0 0.0
    %1268 = vmatprep.subr.mxu0 0.0
    %1269 = vmatpush1.msra.mxu0 0.0
    %1270 = vmatprep.subr.mxu0 0.0
    %1271 = vmatpush1.msra.mxu0 0.0
    %1272 = vmatprep.subr.mxu0 0.0
    %1273 = vmatpush1.msra.mxu0 0.0
    %1274 = vmatprep.subr.mxu0 0.0
    %1275 = vmatpush1.msra.mxu0 0.0
    %1276 = vmatprep.subr.mxu0 0.0
    %1277 = vmatpush1.msra.mxu0 0.0
    %1278 = vmatprep.subr.mxu0 0.0
    %1279 = vmatpush1.msra.mxu0 0.0
    %1280 = vmatprep.subr.mxu0 0.0
    %1281 = vmatpush1.msra.mxu0 0.0
    %1282 = vmatprep.subr.mxu0 0.0
    %1283 = vmatpush1.msra.mxu0 0.0
    %1284 = vmatprep.subr.mxu0 0.0
    %1285 = vmatpush1.msra.mxu0 0.0
    %1286 = vmatprep.subr.mxu0 0.0
    %1287 = vmatpush1.msra.mxu0 0.0
    %1288 = vmatprep.subr.mxu0 0.0
    %1289 = vmatpush1.msra.mxu0 0.0
    %1290 = vmatprep.subr.mxu0 0.0
    %1291 = vmatpush1.msra.mxu0 0.0
    %1292 = vmatprep.subr.mxu0 0.0
    %1293 = vmatpush1.msra.mxu0 0.0
    %1294 = vmatprep.subr.mxu0 0.0
    %1295 = vmatpush1.msra.mxu0 0.0
    %1296 = vmatprep.subr.mxu0 0.0
    %1297 = vmatpush1.msra.mxu0 0.0
    %1298 = vmatprep.subr.mxu0 0.0
    %1299 = vmatpush1.msra.mxu0 0.0
    %1300 = vmatprep.subr.mxu0 0.0
    %1301 = vmatpush1.msra.mxu0 0.0
    %1302 = vmatprep.subr.mxu0 0.0
    %1303 = vmatpush1.msra.mxu0 0.0
    %1304 = vmatprep.mubr.f32.mxu0 0.0
    %1305 = vmatmul.mubr.f32.gmra.mrb[0].mxu0 %v1238
    %v1306 = vpop.f32.mrb[0].mxu0
    %v1307 = vadd.f32 0.0, %v1306
    %v1308 = vpop.f32.mrb[0].mxu0
    %1309 = vdwg.mxu0
    %v1310 = vadd.f32 %v169, %v1307
    %vm1311 = vcmp.ge.f32.partialorder %v1310, %v302
    %v1312 = vsel %vm1311, 1, 0
    %v1313 = vcvt.s32.f32 %v1312
    %v1314 = vadd.f32 %v1313, 0.0
    %vm1315 = vcmp.ge.f32.partialorder %v1310, %v310
    %v1316 = vsel %vm1315, 1, 0
    %v1317 = vcvt.s32.f32 %v1316
    %v1318 = vadd.f32 %v1314, %v1317
    %vm1319 = vcmp.ge.f32.partialorder %v1310, %v318
    %v1320 = vsel %vm1319, 1, 0
    %v1321 = vcvt.s32.f32 %v1320
    %v1322 = vadd.f32 %v1318, %v1321
    %vm1323 = vcmp.ge.f32.partialorder %v1310, %v326
    %v1324 = vsel %vm1323, 1, 0
    %v1325 = vcvt.s32.f32 %v1324
    %v1326 = vadd.f32 %v1322, %v1325
    %vm1327 = vcmp.ge.f32.partialorder %v1310, %v334
    %v1328 = vsel %vm1327, 1, 0
    %v1329 = vcvt.s32.f32 %v1328
    %v1330 = vadd.f32 %v1326, %v1329
    %vm1331 = vcmp.ge.f32.partialorder %v1310, %v342
    %v1332 = vsel %vm1331, 1, 0
    %v1333 = vcvt.s32.f32 %v1332
    %v1334 = vadd.f32 %v1330, %v1333
    %vm1335 = vcmp.ge.f32.partialorder %v1310, %v350
    %v1336 = vsel %vm1335, 1, 0
    %v1337 = vcvt.s32.f32 %v1336
    %v1338 = vadd.f32 %v1334, %v1337
    %vm1339 = vcmp.ge.f32.partialorder %v1310, %v358
    %v1340 = vsel %vm1339, 1, 0
    %v1341 = vcvt.s32.f32 %v1340
    %v1342 = vadd.f32 %v1338, %v1341
    %vm1343 = vcmp.ge.f32.partialorder %v1310, %v366
    %v1344 = vsel %vm1343, 1, 0
    %v1345 = vcvt.s32.f32 %v1344
    %v1346 = vadd.f32 %v1342, %v1345
    %vm1347 = vcmp.ge.f32.partialorder %v1310, %v374
    %v1348 = vsel %vm1347, 1, 0
    %v1349 = vcvt.s32.f32 %v1348
    %v1350 = vadd.f32 %v1346, %v1349
    %vm1351 = vcmp.ge.f32.partialorder %v1310, %v382
    %v1352 = vsel %vm1351, 1, 0
    %v1353 = vcvt.s32.f32 %v1352
    %v1354 = vadd.f32 %v1350, %v1353
    %vm1355 = vcmp.ge.f32.partialorder %v1310, %v390
    %v1356 = vsel %vm1355, 1, 0
    %v1357 = vcvt.s32.f32 %v1356
    %v1358 = vadd.f32 %v1354, %v1357
    %vm1359 = vcmp.ge.f32.partialorder %v1310, %v398
    %v1360 = vsel %vm1359, 1, 0
    %v1361 = vcvt.s32.f32 %v1360
    %v1362 = vadd.f32 %v1358, %v1361
    %vm1363 = vcmp.ge.f32.partialorder %v1310, %v406
    %v1364 = vsel %vm1363, 1, 0
    %v1365 = vcvt.s32.f32 %v1364
    %v1366 = vadd.f32 %v1362, %v1365
    %vm1367 = vcmp.ge.f32.partialorder %v1310, %v414
    %v1368 = vsel %vm1367, 1, 0
    %v1369 = vcvt.s32.f32 %v1368
    %v1370 = vadd.f32 %v1366, %v1369
    %vm1371 = vcmp.ge.f32.partialorder %v1310, %v422
    %v1372 = vsel %vm1371, 1, 0
    %v1373 = vcvt.s32.f32 %v1372
    %v1374 = vadd.f32 %v1370, %v1373
    %vm1375 = vcmp.ge.f32.partialorder %v1310, %v430
    %v1376 = vsel %vm1375, 1, 0
    %v1377 = vcvt.s32.f32 %v1376
    %v1378 = vadd.f32 %v1374, %v1377
    %vm1379 = vcmp.ge.f32.partialorder %v1310, %v438
    %v1380 = vsel %vm1379, 1, 0
    %v1381 = vcvt.s32.f32 %v1380
    %v1382 = vadd.f32 %v1378, %v1381
    %vm1383 = vcmp.ge.f32.partialorder %v1310, %v446
    %v1384 = vsel %vm1383, 1, 0
    %v1385 = vcvt.s32.f32 %v1384
    %v1386 = vadd.f32 %v1382, %v1385
    %vm1387 = vcmp.ge.f32.partialorder %v1310, %v454
    %v1388 = vsel %vm1387, 1, 0
    %v1389 = vcvt.s32.f32 %v1388
    %v1390 = vadd.f32 %v1386, %v1389
    %vm1391 = vcmp.ge.f32.partialorder %v1310, %v462
    %v1392 = vsel %vm1391, 1, 0
    %v1393 = vcvt.s32.f32 %v1392
    %v1394 = vadd.f32 %v1390, %v1393
    %vm1395 = vcmp.ge.f32.partialorder %v1310, %v470
    %v1396 = vsel %vm1395, 1, 0
    %v1397 = vcvt.s32.f32 %v1396
    %v1398 = vadd.f32 %v1394, %v1397
    %vm1399 = vcmp.ge.f32.partialorder %v1310, %v478
    %v1400 = vsel %vm1399, 1, 0
    %v1401 = vcvt.s32.f32 %v1400
    %v1402 = vadd.f32 %v1398, %v1401
    %vm1403 = vcmp.ge.f32.partialorder %v1310, %v486
    %v1404 = vsel %vm1403, 1, 0
    %v1405 = vcvt.s32.f32 %v1404
    %v1406 = vadd.f32 %v1402, %v1405
    %vm1407 = vcmp.ge.f32.partialorder %v1310, %v494
    %v1408 = vsel %vm1407, 1, 0
    %v1409 = vcvt.s32.f32 %v1408
    %v1410 = vadd.f32 %v1406, %v1409
    %vm1411 = vcmp.ge.f32.partialorder %v1310, %v502
    %v1412 = vsel %vm1411, 1, 0
    %v1413 = vcvt.s32.f32 %v1412
    %v1414 = vadd.f32 %v1410, %v1413
    %vm1415 = vcmp.ge.f32.partialorder %v1310, %v510
    %v1416 = vsel %vm1415, 1, 0
    %v1417 = vcvt.s32.f32 %v1416
    %v1418 = vadd.f32 %v1414, %v1417
    %vm1419 = vcmp.ge.f32.partialorder %v1310, %v518
    %v1420 = vsel %vm1419, 1, 0
    %v1421 = vcvt.s32.f32 %v1420
    %v1422 = vadd.f32 %v1418, %v1421
    %vm1423 = vcmp.ge.f32.partialorder %v1310, %v526
    %v1424 = vsel %vm1423, 1, 0
    %v1425 = vcvt.s32.f32 %v1424
    %v1426 = vadd.f32 %v1422, %v1425
    %vm1427 = vcmp.ge.f32.partialorder %v1310, %v534
    %v1428 = vsel %vm1427, 1, 0
    %v1429 = vcvt.s32.f32 %v1428
    %v1430 = vadd.f32 %v1426, %v1429
    %vm1431 = vcmp.ge.f32.partialorder %v1310, %v542
    %v1432 = vsel %vm1431, 1, 0
    %v1433 = vcvt.s32.f32 %v1432
    %v1434 = vadd.f32 %v1430, %v1433
    %v1435 = vmul.f32 %v1434, %v551
    %v1436 = vadd.f32 %v1435, %v558
    %v1437 = vmul.f32 %v1436, %v1228
    %1439 = vrot.lane.b32.xlu0 %v1436, 64
    %v1440 = vpop.permute.xlu0 %1439
    %v1442 = vmul.f32 %v1436, %v1440
    %1444 = vrot.lane.b32.xlu0 %v1442, 32
    %v1445 = vpop.permute.xlu0 %1444
    %v1447 = vadd.f32 %v1437, %v1445
    %v1448 = vtanh.pop %v1447
    %1450 = vrot.lane.b32.xlu0 %v1448, 64
    %v1451 = vpop.permute.xlu0 %1450
    %v1453 = vmul.f32 %v1436, %v1451
    %1455 = vrot.lane.b32.xlu0 %v1453, 32
    %v1456 = vpop.permute.xlu0 %1455
    %v1457 = vsel %vm224, %v1456, 0
    %1459 = vmatprep.subr.mxu0 0.0
    %1460 = vmatpush1.msra.mxu0 %v187
    %1461 = vmatprep.subr.mxu0 0.0
    %1462 = vmatpush1.msra.mxu0 %v188
    %1463 = vmatprep.subr.mxu0 0.0
    %1464 = vmatpush1.msra.mxu0 %v189
    %1465 = vmatprep.subr.mxu0 0.0
    %1466 = vmatpush1.msra.mxu0 %v190
    %1467 = vmatprep.subr.mxu0 0.0
    %1468 = vmatpush1.msra.mxu0 0.0
    %1469 = vmatprep.subr.mxu0 0.0
    %1470 = vmatpush1.msra.mxu0 0.0
    %1471 = vmatprep.subr.mxu0 0.0
    %1472 = vmatpush1.msra.mxu0 0.0
    %1473 = vmatprep.subr.mxu0 0.0
    %1474 = vmatpush1.msra.mxu0 0.0
    %1475 = vmatprep.subr.mxu0 0.0
    %1476 = vmatpush1.msra.mxu0 0.0
    %1477 = vmatprep.subr.mxu0 0.0
    %1478 = vmatpush1.msra.mxu0 0.0
    %1479 = vmatprep.subr.mxu0 0.0
    %1480 = vmatpush1.msra.mxu0 0.0
    %1481 = vmatprep.subr.mxu0 0.0
    %1482 = vmatpush1.msra.mxu0 0.0
    %1483 = vmatprep.subr.mxu0 0.0
    %1484 = vmatpush1.msra.mxu0 0.0
    %1485 = vmatprep.subr.mxu0 0.0
    %1486 = vmatpush1.msra.mxu0 0.0
    %1487 = vmatprep.subr.mxu0 0.0
    %1488 = vmatpush1.msra.mxu0 0.0
    %1489 = vmatprep.subr.mxu0 0.0
    %1490 = vmatpush1.msra.mxu0 0.0
    %1491 = vmatprep.subr.mxu0 0.0
    %1492 = vmatpush1.msra.mxu0 0.0
    %1493 = vmatprep.subr.mxu0 0.0
    %1494 = vmatpush1.msra.mxu0 0.0
    %1495 = vmatprep.subr.mxu0 0.0
    %1496 = vmatpush1.msra.mxu0 0.0
    %1497 = vmatprep.subr.mxu0 0.0
    %1498 = vmatpush1.msra.mxu0 0.0
    %1499 = vmatprep.subr.mxu0 0.0
    %1500 = vmatpush1.msra.mxu0 0.0
    %1501 = vmatprep.subr.mxu0 0.0
    %1502 = vmatpush1.msra.mxu0 0.0
    %1503 = vmatprep.subr.mxu0 0.0
    %1504 = vmatpush1.msra.mxu0 0.0
    %1505 = vmatprep.subr.mxu0 0.0
    %1506 = vmatpush1.msra.mxu0 0.0
    %1507 = vmatprep.subr.mxu0 0.0
    %1508 = vmatpush1.msra.mxu0 0.0
    %1509 = vmatprep.subr.mxu0 0.0
    %1510 = vmatpush1.msra.mxu0 0.0
    %1511 = vmatprep.subr.mxu0 0.0
    %1512 = vmatpush1.msra.mxu0 0.0
    %1513 = vmatprep.subr.mxu0 0.0
    %1514 = vmatpush1.msra.mxu0 0.0
    %1515 = vmatprep.subr.mxu0 0.0
    %1516 = vmatpush1.msra.mxu0 0.0
    %1517 = vmatprep.subr.mxu0 0.0
    %1518 = vmatpush1.msra.mxu0 0.0
    %1519 = vmatprep.subr.mxu0 0.0
    %1520 = vmatpush1.msra.mxu0 0.0
    %1521 = vmatprep.subr.mxu0 0.0
    %1522 = vmatpush1.msra.mxu0 0.0
    %1523 = vmatprep.mubr.f32.mxu0 0.0
    %1524 = vmatmul.mubr.f32.gmra.mrb[0].mxu0 %v1457
    %v1525 = vpop.f32.mrb[0].mxu0
    %v1526 = vadd.f32 0.0, %v1525
    %v1527 = vpop.f32.mrb[0].mxu0
    %1528 = vdwg.mxu0
    %v1529 = vadd.f32 %v174, %v1526
    %vm1530 = vcmp.ge.f32.partialorder %v1529, %v302
    %v1531 = vsel %vm1530, 1, 0
    %v1532 = vcvt.s32.f32 %v1531
    %v1533 = vadd.f32 %v1532, 0.0
    %vm1534 = vcmp.ge.f32.partialorder %v1529, %v310
    %v1535 = vsel %vm1534, 1, 0
    %v1536 = vcvt.s32.f32 %v1535
    %v1537 = vadd.f32 %v1533, %v1536
    %vm1538 = vcmp.ge.f32.partialorder %v1529, %v318
    %v1539 = vsel %vm1538, 1, 0
    %v1540 = vcvt.s32.f32 %v1539
    %v1541 = vadd.f32 %v1537, %v1540
    %vm1542 = vcmp.ge.f32.partialorder %v1529, %v326
    %v1543 = vsel %vm1542, 1, 0
    %v1544 = vcvt.s32.f32 %v1543
    %v1545 = vadd.f32 %v1541, %v1544
    %vm1546 = vcmp.ge.f32.partialorder %v1529, %v334
    %v1547 = vsel %vm1546, 1, 0
    %v1548 = vcvt.s32.f32 %v1547
    %v1549 = vadd.f32 %v1545, %v1548
    %vm1550 = vcmp.ge.f32.partialorder %v1529, %v342
    %v1551 = vsel %vm1550, 1, 0
    %v1552 = vcvt.s32.f32 %v1551
    %v1553 = vadd.f32 %v1549, %v1552
    %vm1554 = vcmp.ge.f32.partialorder %v1529, %v350
    %v1555 = vsel %vm1554, 1, 0
    %v1556 = vcvt.s32.f32 %v1555
    %v1557 = vadd.f32 %v1553, %v1556
    %vm1558 = vcmp.ge.f32.partialorder %v1529, %v358
    %v1559 = vsel %vm1558, 1, 0
    %v1560 = vcvt.s32.f32 %v1559
    %v1561 = vadd.f32 %v1557, %v1560
    %vm1562 = vcmp.ge.f32.partialorder %v1529, %v366
    %v1563 = vsel %vm1562, 1, 0
    %v1564 = vcvt.s32.f32 %v1563
    %v1565 = vadd.f32 %v1561, %v1564
    %vm1566 = vcmp.ge.f32.partialorder %v1529, %v374
    %v1567 = vsel %vm1566, 1, 0
    %v1568 = vcvt.s32.f32 %v1567
    %v1569 = vadd.f32 %v1565, %v1568
    %vm1570 = vcmp.ge.f32.partialorder %v1529, %v382
    %v1571 = vsel %vm1570, 1, 0
    %v1572 = vcvt.s32.f32 %v1571
    %v1573 = vadd.f32 %v1569, %v1572
    %vm1574 = vcmp.ge.f32.partialorder %v1529, %v390
    %v1575 = vsel %vm1574, 1, 0
    %v1576 = vcvt.s32.f32 %v1575
    %v1577 = vadd.f32 %v1573, %v1576
    %vm1578 = vcmp.ge.f32.partialorder %v1529, %v398
    %v1579 = vsel %vm1578, 1, 0
    %v1580 = vcvt.s32.f32 %v1579
    %v1581 = vadd.f32 %v1577, %v1580
    %vm1582 = vcmp.ge.f32.partialorder %v1529, %v406
    %v1583 = vsel %vm1582, 1, 0
    %v1584 = vcvt.s32.f32 %v1583
    %v1585 = vadd.f32 %v1581, %v1584
    %vm1586 = vcmp.ge.f32.partialorder %v1529, %v414
    %v1587 = vsel %vm1586, 1, 0
    %v1588 = vcvt.s32.f32 %v1587
    %v1589 = vadd.f32 %v1585, %v1588
    %vm1590 = vcmp.ge.f32.partialorder %v1529, %v422
    %v1591 = vsel %vm1590, 1, 0
    %v1592 = vcvt.s32.f32 %v1591
    %v1593 = vadd.f32 %v1589, %v1592
    %vm1594 = vcmp.ge.f32.partialorder %v1529, %v430
    %v1595 = vsel %vm1594, 1, 0
    %v1596 = vcvt.s32.f32 %v1595
    %v1597 = vadd.f32 %v1593, %v1596
    %vm1598 = vcmp.ge.f32.partialorder %v1529, %v438
    %v1599 = vsel %vm1598, 1, 0
    %v1600 = vcvt.s32.f32 %v1599
    %v1601 = vadd.f32 %v1597, %v1600
    %vm1602 = vcmp.ge.f32.partialorder %v1529, %v446
    %v1603 = vsel %vm1602, 1, 0
    %v1604 = vcvt.s32.f32 %v1603
    %v1605 = vadd.f32 %v1601, %v1604
    %vm1606 = vcmp.ge.f32.partialorder %v1529, %v454
    %v1607 = vsel %vm1606, 1, 0
    %v1608 = vcvt.s32.f32 %v1607
    %v1609 = vadd.f32 %v1605, %v1608
    %vm1610 = vcmp.ge.f32.partialorder %v1529, %v462
    %v1611 = vsel %vm1610, 1, 0
    %v1612 = vcvt.s32.f32 %v1611
    %v1613 = vadd.f32 %v1609, %v1612
    %vm1614 = vcmp.ge.f32.partialorder %v1529, %v470
    %v1615 = vsel %vm1614, 1, 0
    %v1616 = vcvt.s32.f32 %v1615
    %v1617 = vadd.f32 %v1613, %v1616
    %vm1618 = vcmp.ge.f32.partialorder %v1529, %v478
    %v1619 = vsel %vm1618, 1, 0
    %v1620 = vcvt.s32.f32 %v1619
    %v1621 = vadd.f32 %v1617, %v1620
    %vm1622 = vcmp.ge.f32.partialorder %v1529, %v486
    %v1623 = vsel %vm1622, 1, 0
    %v1624 = vcvt.s32.f32 %v1623
    %v1625 = vadd.f32 %v1621, %v1624
    %vm1626 = vcmp.ge.f32.partialorder %v1529, %v494
    %v1627 = vsel %vm1626, 1, 0
    %v1628 = vcvt.s32.f32 %v1627
    %v1629 = vadd.f32 %v1625, %v1628
    %vm1630 = vcmp.ge.f32.partialorder %v1529, %v502
    %v1631 = vsel %vm1630, 1, 0
    %v1632 = vcvt.s32.f32 %v1631
    %v1633 = vadd.f32 %v1629, %v1632
    %vm1634 = vcmp.ge.f32.partialorder %v1529, %v510
    %v1635 = vsel %vm1634, 1, 0
    %v1636 = vcvt.s32.f32 %v1635
    %v1637 = vadd.f32 %v1633, %v1636
    %vm1638 = vcmp.ge.f32.partialorder %v1529, %v518
    %v1639 = vsel %vm1638, 1, 0
    %v1640 = vcvt.s32.f32 %v1639
    %v1641 = vadd.f32 %v1637, %v1640
    %vm1642 = vcmp.ge.f32.partialorder %v1529, %v526
    %v1643 = vsel %vm1642, 1, 0
    %v1644 = vcvt.s32.f32 %v1643
    %v1645 = vadd.f32 %v1641, %v1644
    %vm1646 = vcmp.ge.f32.partialorder %v1529, %v534
    %v1647 = vsel %vm1646, 1, 0
    %v1648 = vcvt.s32.f32 %v1647
    %v1649 = vadd.f32 %v1645, %v1648
    %vm1650 = vcmp.ge.f32.partialorder %v1529, %v542
    %v1651 = vsel %vm1650, 1, 0
    %v1652 = vcvt.s32.f32 %v1651
    %v1653 = vadd.f32 %v1649, %v1652
    %v1654 = vmul.f32 %v1653, %v551
    %v1655 = vadd.f32 %v1654, %v558
    %v1656 = vmul.f32 %v1655, %v1447
    %1658 = vrot.lane.b32.xlu0 %v1655, 64
    %v1659 = vpop.permute.xlu0 %1658
    %v1661 = vmul.f32 %v1655, %v1659
    %1663 = vrot.lane.b32.xlu0 %v1661, 32
    %v1664 = vpop.permute.xlu0 %1663
    %v1666 = vadd.f32 %v1656, %v1664
    %v1667 = vtanh.pop %v1666
    %1669 = vrot.lane.b32.xlu0 %v1667, 64
    %v1670 = vpop.permute.xlu0 %1669
    %v1672 = vmul.f32 %v1655, %v1670
    %1674 = vrot.lane.b32.xlu0 %v1672, 32
    %v1675 = vpop.permute.xlu0 %1674
    %v1676 = vsel %vm224, %v1675, 0
    %1678 = vmatprep.subr.mxu0 0.0
    %1679 = vmatpush1.msra.mxu0 %v187
    %1680 = vmatprep.subr.mxu0 0.0
    %1681 = vmatpush1.msra.mxu0 %v188
    %1682 = vmatprep.subr.mxu0 0.0
    %1683 = vmatpush1.msra.mxu0 %v189
    %1684 = vmatprep.subr.mxu0 0.0
    %1685 = vmatpush1.msra.mxu0 %v190
    %1686 = vmatprep.subr.mxu0 0.0
    %1687 = vmatpush1.msra.mxu0 0.0
    %1688 = vmatprep.subr.mxu0 0.0
    %1689 = vmatpush1.msra.mxu0 0.0
    %1690 = vmatprep.subr.mxu0 0.0
    %1691 = vmatpush1.msra.mxu0 0.0
    %1692 = vmatprep.subr.mxu0 0.0
    %1693 = vmatpush1.msra.mxu0 0.0
    %1694 = vmatprep.subr.mxu0 0.0
    %1695 = vmatpush1.msra.mxu0 0.0
    %1696 = vmatprep.subr.mxu0 0.0
    %1697 = vmatpush1.msra.mxu0 0.0
    %1698 = vmatprep.subr.mxu0 0.0
    %1699 = vmatpush1.msra.mxu0 0.0
    %1700 = vmatprep.subr.mxu0 0.0
    %1701 = vmatpush1.msra.mxu0 0.0
    %1702 = vmatprep.subr.mxu0 0.0
    %1703 = vmatpush1.msra.mxu0 0.0
    %1704 = vmatprep.subr.mxu0 0.0
    %1705 = vmatpush1.msra.mxu0 0.0
    %1706 = vmatprep.subr.mxu0 0.0
    %1707 = vmatpush1.msra.mxu0 0.0
    %1708 = vmatprep.subr.mxu0 0.0
    %1709 = vmatpush1.msra.mxu0 0.0
    %1710 = vmatprep.subr.mxu0 0.0
    %1711 = vmatpush1.msra.mxu0 0.0
    %1712 = vmatprep.subr.mxu0 0.0
    %1713 = vmatpush1.msra.mxu0 0.0
    %1714 = vmatprep.subr.mxu0 0.0
    %1715 = vmatpush1.msra.mxu0 0.0
    %1716 = vmatprep.subr.mxu0 0.0
    %1717 = vmatpush1.msra.mxu0 0.0
    %1718 = vmatprep.subr.mxu0 0.0
    %1719 = vmatpush1.msra.mxu0 0.0
    %1720 = vmatprep.subr.mxu0 0.0
    %1721 = vmatpush1.msra.mxu0 0.0
    %1722 = vmatprep.subr.mxu0 0.0
    %1723 = vmatpush1.msra.mxu0 0.0
    %1724 = vmatprep.subr.mxu0 0.0
    %1725 = vmatpush1.msra.mxu0 0.0
    %1726 = vmatprep.subr.mxu0 0.0
    %1727 = vmatpush1.msra.mxu0 0.0
    %1728 = vmatprep.subr.mxu0 0.0
    %1729 = vmatpush1.msra.mxu0 0.0
    %1730 = vmatprep.subr.mxu0 0.0
    %1731 = vmatpush1.msra.mxu0 0.0
    %1732 = vmatprep.subr.mxu0 0.0
    %1733 = vmatpush1.msra.mxu0 0.0
    %1734 = vmatprep.subr.mxu0 0.0
    %1735 = vmatpush1.msra.mxu0 0.0
    %1736 = vmatprep.subr.mxu0 0.0
    %1737 = vmatpush1.msra.mxu0 0.0
    %1738 = vmatprep.subr.mxu0 0.0
    %1739 = vmatpush1.msra.mxu0 0.0
    %1740 = vmatprep.subr.mxu0 0.0
    %1741 = vmatpush1.msra.mxu0 0.0
    %1742 = vmatprep.mubr.f32.mxu0 0.0
    %1743 = vmatmul.mubr.f32.gmra.mrb[0].mxu0 %v1676
    %v1744 = vpop.f32.mrb[0].mxu0
    %v1745 = vadd.f32 0.0, %v1744
    %v1746 = vpop.f32.mrb[0].mxu0
    %1747 = vdwg.mxu0
    %v1748 = vadd.f32 %v179, %v1745
    %vm1749 = vcmp.ge.f32.partialorder %v1748, %v302
    %v1750 = vsel %vm1749, 1, 0
    %v1751 = vcvt.s32.f32 %v1750
    %v1752 = vadd.f32 %v1751, 0.0
    %vm1753 = vcmp.ge.f32.partialorder %v1748, %v310
    %v1754 = vsel %vm1753, 1, 0
    %v1755 = vcvt.s32.f32 %v1754
    %v1756 = vadd.f32 %v1752, %v1755
    %vm1757 = vcmp.ge.f32.partialorder %v1748, %v318
    %v1758 = vsel %vm1757, 1, 0
    %v1759 = vcvt.s32.f32 %v1758
    %v1760 = vadd.f32 %v1756, %v1759
    %vm1761 = vcmp.ge.f32.partialorder %v1748, %v326
    %v1762 = vsel %vm1761, 1, 0
    %v1763 = vcvt.s32.f32 %v1762
    %v1764 = vadd.f32 %v1760, %v1763
    %vm1765 = vcmp.ge.f32.partialorder %v1748, %v334
    %v1766 = vsel %vm1765, 1, 0
    %v1767 = vcvt.s32.f32 %v1766
    %v1768 = vadd.f32 %v1764, %v1767
    %vm1769 = vcmp.ge.f32.partialorder %v1748, %v342
    %v1770 = vsel %vm1769, 1, 0
    %v1771 = vcvt.s32.f32 %v1770
    %v1772 = vadd.f32 %v1768, %v1771
    %vm1773 = vcmp.ge.f32.partialorder %v1748, %v350
    %v1774 = vsel %vm1773, 1, 0
    %v1775 = vcvt.s32.f32 %v1774
    %v1776 = vadd.f32 %v1772, %v1775
    %vm1777 = vcmp.ge.f32.partialorder %v1748, %v358
    %v1778 = vsel %vm1777, 1, 0
    %v1779 = vcvt.s32.f32 %v1778
    %v1780 = vadd.f32 %v1776, %v1779
    %vm1781 = vcmp.ge.f32.partialorder %v1748, %v366
    %v1782 = vsel %vm1781, 1, 0
    %v1783 = vcvt.s32.f32 %v1782
    %v1784 = vadd.f32 %v1780, %v1783
    %vm1785 = vcmp.ge.f32.partialorder %v1748, %v374
    %v1786 = vsel %vm1785, 1, 0
    %v1787 = vcvt.s32.f32 %v1786
    %v1788 = vadd.f32 %v1784, %v1787
    %vm1789 = vcmp.ge.f32.partialorder %v1748, %v382
    %v1790 = vsel %vm1789, 1, 0
    %v1791 = vcvt.s32.f32 %v1790
    %v1792 = vadd.f32 %v1788, %v1791
    %vm1793 = vcmp.ge.f32.partialorder %v1748, %v390
    %v1794 = vsel %vm1793, 1, 0
    %v1795 = vcvt.s32.f32 %v1794
    %v1796 = vadd.f32 %v1792, %v1795
    %vm1797 = vcmp.ge.f32.partialorder %v1748, %v398
    %v1798 = vsel %vm1797, 1, 0
    %v1799 = vcvt.s32.f32 %v1798
    %v1800 = vadd.f32 %v1796, %v1799
    %vm1801 = vcmp.ge.f32.partialorder %v1748, %v406
    %v1802 = vsel %vm1801, 1, 0
    %v1803 = vcvt.s32.f32 %v1802
    %v1804 = vadd.f32 %v1800, %v1803
    %vm1805 = vcmp.ge.f32.partialorder %v1748, %v414
    %v1806 = vsel %vm1805, 1, 0
    %v1807 = vcvt.s32.f32 %v1806
    %v1808 = vadd.f32 %v1804, %v1807
    %vm1809 = vcmp.ge.f32.partialorder %v1748, %v422
    %v1810 = vsel %vm1809, 1, 0
    %v1811 = vcvt.s32.f32 %v1810
    %v1812 = vadd.f32 %v1808, %v1811
    %vm1813 = vcmp.ge.f32.partialorder %v1748, %v430
    %v1814 = vsel %vm1813, 1, 0
    %v1815 = vcvt.s32.f32 %v1814
    %v1816 = vadd.f32 %v1812, %v1815
    %vm1817 = vcmp.ge.f32.partialorder %v1748, %v438
    %v1818 = vsel %vm1817, 1, 0
    %v1819 = vcvt.s32.f32 %v1818
    %v1820 = vadd.f32 %v1816, %v1819
    %vm1821 = vcmp.ge.f32.partialorder %v1748, %v446
    %v1822 = vsel %vm1821, 1, 0
    %v1823 = vcvt.s32.f32 %v1822
    %v1824 = vadd.f32 %v1820, %v1823
    %vm1825 = vcmp.ge.f32.partialorder %v1748, %v454
    %v1826 = vsel %vm1825, 1, 0
    %v1827 = vcvt.s32.f32 %v1826
    %v1828 = vadd.f32 %v1824, %v1827
    %vm1829 = vcmp.ge.f32.partialorder %v1748, %v462
    %v1830 = vsel %vm1829, 1, 0
    %v1831 = vcvt.s32.f32 %v1830
    %v1832 = vadd.f32 %v1828, %v1831
    %vm1833 = vcmp.ge.f32.partialorder %v1748, %v470
    %v1834 = vsel %vm1833, 1, 0
    %v1835 = vcvt.s32.f32 %v1834
    %v1836 = vadd.f32 %v1832, %v1835
    %vm1837 = vcmp.ge.f32.partialorder %v1748, %v478
    %v1838 = vsel %vm1837, 1, 0
    %v1839 = vcvt.s32.f32 %v1838
    %v1840 = vadd.f32 %v1836, %v1839
    %vm1841 = vcmp.ge.f32.partialorder %v1748, %v486
    %v1842 = vsel %vm1841, 1, 0
    %v1843 = vcvt.s32.f32 %v1842
    %v1844 = vadd.f32 %v1840, %v1843
    %vm1845 = vcmp.ge.f32.partialorder %v1748, %v494
    %v1846 = vsel %vm1845, 1, 0
    %v1847 = vcvt.s32.f32 %v1846
    %v1848 = vadd.f32 %v1844, %v1847
    %vm1849 = vcmp.ge.f32.partialorder %v1748, %v502
    %v1850 = vsel %vm1849, 1, 0
    %v1851 = vcvt.s32.f32 %v1850
    %v1852 = vadd.f32 %v1848, %v1851
    %vm1853 = vcmp.ge.f32.partialorder %v1748, %v510
    %v1854 = vsel %vm1853, 1, 0
    %v1855 = vcvt.s32.f32 %v1854
    %v1856 = vadd.f32 %v1852, %v1855
    %vm1857 = vcmp.ge.f32.partialorder %v1748, %v518
    %v1858 = vsel %vm1857, 1, 0
    %v1859 = vcvt.s32.f32 %v1858
    %v1860 = vadd.f32 %v1856, %v1859
    %vm1861 = vcmp.ge.f32.partialorder %v1748, %v526
    %v1862 = vsel %vm1861, 1, 0
    %v1863 = vcvt.s32.f32 %v1862
    %v1864 = vadd.f32 %v1860, %v1863
    %vm1865 = vcmp.ge.f32.partialorder %v1748, %v534
    %v1866 = vsel %vm1865, 1, 0
    %v1867 = vcvt.s32.f32 %v1866
    %v1868 = vadd.f32 %v1864, %v1867
    %vm1869 = vcmp.ge.f32.partialorder %v1748, %v542
    %v1870 = vsel %vm1869, 1, 0
    %v1871 = vcvt.s32.f32 %v1870
    %v1872 = vadd.f32 %v1868, %v1871
    %v1873 = vmul.f32 %v1872, %v551
    %v1874 = vadd.f32 %v1873, %v558
    %v1875 = vmul.f32 %v1874, %v1666
    %1877 = vrot.lane.b32.xlu0 %v1874, 64
    %v1878 = vpop.permute.xlu0 %1877
    %v1880 = vmul.f32 %v1874, %v1878
    %1882 = vrot.lane.b32.xlu0 %v1880, 32
    %v1883 = vpop.permute.xlu0 %1882
    %v1885 = vadd.f32 %v1875, %v1883
    %v1886 = vtanh.pop %v1885
    %1888 = vrot.lane.b32.xlu0 %v1886, 64
    %v1889 = vpop.permute.xlu0 %1888
    %v1891 = vmul.f32 %v1874, %v1889
    %1893 = vrot.lane.b32.xlu0 %v1891, 32
    %v1894 = vpop.permute.xlu0 %1893
    %v1895 = vsel %vm224, %v1894, 0
    %1897 = vmatprep.subr.mxu0 0.0
    %1898 = vmatpush1.msra.mxu0 %v187
    %1899 = vmatprep.subr.mxu0 0.0
    %1900 = vmatpush1.msra.mxu0 %v188
    %1901 = vmatprep.subr.mxu0 0.0
    %1902 = vmatpush1.msra.mxu0 %v189
    %1903 = vmatprep.subr.mxu0 0.0
    %1904 = vmatpush1.msra.mxu0 %v190
    %1905 = vmatprep.subr.mxu0 0.0
    %1906 = vmatpush1.msra.mxu0 0.0
    %1907 = vmatprep.subr.mxu0 0.0
    %1908 = vmatpush1.msra.mxu0 0.0
    %1909 = vmatprep.subr.mxu0 0.0
    %1910 = vmatpush1.msra.mxu0 0.0
    %1911 = vmatprep.subr.mxu0 0.0
    %1912 = vmatpush1.msra.mxu0 0.0
    %1913 = vmatprep.subr.mxu0 0.0
    %1914 = vmatpush1.msra.mxu0 0.0
    %1915 = vmatprep.subr.mxu0 0.0
    %1916 = vmatpush1.msra.mxu0 0.0
    %1917 = vmatprep.subr.mxu0 0.0
    %1918 = vmatpush1.msra.mxu0 0.0
    %1919 = vmatprep.subr.mxu0 0.0
    %1920 = vmatpush1.msra.mxu0 0.0
    %1921 = vmatprep.subr.mxu0 0.0
    %1922 = vmatpush1.msra.mxu0 0.0
    %1923 = vmatprep.subr.mxu0 0.0
    %1924 = vmatpush1.msra.mxu0 0.0
    %1925 = vmatprep.subr.mxu0 0.0
    %1926 = vmatpush1.msra.mxu0 0.0
    %1927 = vmatprep.subr.mxu0 0.0
    %1928 = vmatpush1.msra.mxu0 0.0
    %1929 = vmatprep.subr.mxu0 0.0
    %1930 = vmatpush1.msra.mxu0 0.0
    %1931 = vmatprep.subr.mxu0 0.0
    %1932 = vmatpush1.msra.mxu0 0.0
    %1933 = vmatprep.subr.mxu0 0.0
    %1934 = vmatpush1.msra.mxu0 0.0
    %1935 = vmatprep.subr.mxu0 0.0
    %1936 = vmatpush1.msra.mxu0 0.0
    %1937 = vmatprep.subr.mxu0 0.0
    %1938 = vmatpush1.msra.mxu0 0.0
    %1939 = vmatprep.subr.mxu0 0.0
    %1940 = vmatpush1.msra.mxu0 0.0
    %1941 = vmatprep.subr.mxu0 0.0
    %1942 = vmatpush1.msra.mxu0 0.0
    %1943 = vmatprep.subr.mxu0 0.0
    %1944 = vmatpush1.msra.mxu0 0.0
    %1945 = vmatprep.subr.mxu0 0.0
    %1946 = vmatpush1.msra.mxu0 0.0
    %1947 = vmatprep.subr.mxu0 0.0
    %1948 = vmatpush1.msra.mxu0 0.0
    %1949 = vmatprep.subr.mxu0 0.0
    %1950 = vmatpush1.msra.mxu0 0.0
    %1951 = vmatprep.subr.mxu0 0.0
    %1952 = vmatpush1.msra.mxu0 0.0
    %1953 = vmatprep.subr.mxu0 0.0
    %1954 = vmatpush1.msra.mxu0 0.0
    %1955 = vmatprep.subr.mxu0 0.0
    %1956 = vmatpush1.msra.mxu0 0.0
    %1957 = vmatprep.subr.mxu0 0.0
    %1958 = vmatpush1.msra.mxu0 0.0
    %1959 = vmatprep.subr.mxu0 0.0
    %1960 = vmatpush1.msra.mxu0 0.0
    %1961 = vmatprep.mubr.f32.mxu0 0.0
    %1962 = vmatmul.mubr.f32.gmra.mrb[0].mxu0 %v1895
    %v1963 = vpop.f32.mrb[0].mxu0
    %v1964 = vadd.f32 0.0, %v1963
    %v1965 = vpop.f32.mrb[0].mxu0
    %1966 = vdwg.mxu0
    %v1967 = vadd.f32 %v184, %v1964
    %vm1968 = vcmp.ge.f32.partialorder %v1967, %v302
    %v1969 = vsel %vm1968, 1, 0
    %v1970 = vcvt.s32.f32 %v1969
    %v1971 = vadd.f32 %v1970, 0.0
    %vm1972 = vcmp.ge.f32.partialorder %v1967, %v310
    %v1973 = vsel %vm1972, 1, 0
    %v1974 = vcvt.s32.f32 %v1973
    %v1975 = vadd.f32 %v1971, %v1974
    %vm1976 = vcmp.ge.f32.partialorder %v1967, %v318
    %v1977 = vsel %vm1976, 1, 0
    %v1978 = vcvt.s32.f32 %v1977
    %v1979 = vadd.f32 %v1975, %v1978
    %vm1980 = vcmp.ge.f32.partialorder %v1967, %v326
    %v1981 = vsel %vm1980, 1, 0
    %v1982 = vcvt.s32.f32 %v1981
    %v1983 = vadd.f32 %v1979, %v1982
    %vm1984 = vcmp.ge.f32.partialorder %v1967, %v334
    %v1985 = vsel %vm1984, 1, 0
    %v1986 = vcvt.s32.f32 %v1985
    %v1987 = vadd.f32 %v1983, %v1986
    %vm1988 = vcmp.ge.f32.partialorder %v1967, %v342
    %v1989 = vsel %vm1988, 1, 0
    %v1990 = vcvt.s32.f32 %v1989
    %v1991 = vadd.f32 %v1987, %v1990
    %vm1992 = vcmp.ge.f32.partialorder %v1967, %v350
    %v1993 = vsel %vm1992, 1, 0
    %v1994 = vcvt.s32.f32 %v1993
    %v1995 = vadd.f32 %v1991, %v1994
    %vm1996 = vcmp.ge.f32.partialorder %v1967, %v358
    %v1997 = vsel %vm1996, 1, 0
    %v1998 = vcvt.s32.f32 %v1997
    %v1999 = vadd.f32 %v1995, %v1998
    %vm2000 = vcmp.ge.f32.partialorder %v1967, %v366
    %v2001 = vsel %vm2000, 1, 0
    %v2002 = vcvt.s32.f32 %v2001
    %v2003 = vadd.f32 %v1999, %v2002
    %vm2004 = vcmp.ge.f32.partialorder %v1967, %v374
    %v2005 = vsel %vm2004, 1, 0
    %v2006 = vcvt.s32.f32 %v2005
    %v2007 = vadd.f32 %v2003, %v2006
    %vm2008 = vcmp.ge.f32.partialorder %v1967, %v382
    %v2009 = vsel %vm2008, 1, 0
    %v2010 = vcvt.s32.f32 %v2009
    %v2011 = vadd.f32 %v2007, %v2010
    %vm2012 = vcmp.ge.f32.partialorder %v1967, %v390
    %v2013 = vsel %vm2012, 1, 0
    %v2014 = vcvt.s32.f32 %v2013
    %v2015 = vadd.f32 %v2011, %v2014
    %vm2016 = vcmp.ge.f32.partialorder %v1967, %v398
    %v2017 = vsel %vm2016, 1, 0
    %v2018 = vcvt.s32.f32 %v2017
    %v2019 = vadd.f32 %v2015, %v2018
    %vm2020 = vcmp.ge.f32.partialorder %v1967, %v406
    %v2021 = vsel %vm2020, 1, 0
    %v2022 = vcvt.s32.f32 %v2021
    %v2023 = vadd.f32 %v2019, %v2022
    %vm2024 = vcmp.ge.f32.partialorder %v1967, %v414
    %v2025 = vsel %vm2024, 1, 0
    %v2026 = vcvt.s32.f32 %v2025
    %v2027 = vadd.f32 %v2023, %v2026
    %vm2028 = vcmp.ge.f32.partialorder %v1967, %v422
    %v2029 = vsel %vm2028, 1, 0
    %v2030 = vcvt.s32.f32 %v2029
    %v2031 = vadd.f32 %v2027, %v2030
    %vm2032 = vcmp.ge.f32.partialorder %v1967, %v430
    %v2033 = vsel %vm2032, 1, 0
    %v2034 = vcvt.s32.f32 %v2033
    %v2035 = vadd.f32 %v2031, %v2034
    %vm2036 = vcmp.ge.f32.partialorder %v1967, %v438
    %v2037 = vsel %vm2036, 1, 0
    %v2038 = vcvt.s32.f32 %v2037
    %v2039 = vadd.f32 %v2035, %v2038
    %vm2040 = vcmp.ge.f32.partialorder %v1967, %v446
    %v2041 = vsel %vm2040, 1, 0
    %v2042 = vcvt.s32.f32 %v2041
    %v2043 = vadd.f32 %v2039, %v2042
    %vm2044 = vcmp.ge.f32.partialorder %v1967, %v454
    %v2045 = vsel %vm2044, 1, 0
    %v2046 = vcvt.s32.f32 %v2045
    %v2047 = vadd.f32 %v2043, %v2046
    %vm2048 = vcmp.ge.f32.partialorder %v1967, %v462
    %v2049 = vsel %vm2048, 1, 0
    %v2050 = vcvt.s32.f32 %v2049
    %v2051 = vadd.f32 %v2047, %v2050
    %vm2052 = vcmp.ge.f32.partialorder %v1967, %v470
    %v2053 = vsel %vm2052, 1, 0
    %v2054 = vcvt.s32.f32 %v2053
    %v2055 = vadd.f32 %v2051, %v2054
    %vm2056 = vcmp.ge.f32.partialorder %v1967, %v478
    %v2057 = vsel %vm2056, 1, 0
    %v2058 = vcvt.s32.f32 %v2057
    %v2059 = vadd.f32 %v2055, %v2058
    %vm2060 = vcmp.ge.f32.partialorder %v1967, %v486
    %v2061 = vsel %vm2060, 1, 0
    %v2062 = vcvt.s32.f32 %v2061
    %v2063 = vadd.f32 %v2059, %v2062
    %vm2064 = vcmp.ge.f32.partialorder %v1967, %v494
    %v2065 = vsel %vm2064, 1, 0
    %v2066 = vcvt.s32.f32 %v2065
    %v2067 = vadd.f32 %v2063, %v2066
    %vm2068 = vcmp.ge.f32.partialorder %v1967, %v502
    %v2069 = vsel %vm2068, 1, 0
    %v2070 = vcvt.s32.f32 %v2069
    %v2071 = vadd.f32 %v2067, %v2070
    %vm2072 = vcmp.ge.f32.partialorder %v1967, %v510
    %v2073 = vsel %vm2072, 1, 0
    %v2074 = vcvt.s32.f32 %v2073
    %v2075 = vadd.f32 %v2071, %v2074
    %vm2076 = vcmp.ge.f32.partialorder %v1967, %v518
    %v2077 = vsel %vm2076, 1, 0
    %v2078 = vcvt.s32.f32 %v2077
    %v2079 = vadd.f32 %v2075, %v2078
    %vm2080 = vcmp.ge.f32.partialorder %v1967, %v526
    %v2081 = vsel %vm2080, 1, 0
    %v2082 = vcvt.s32.f32 %v2081
    %v2083 = vadd.f32 %v2079, %v2082
    %vm2084 = vcmp.ge.f32.partialorder %v1967, %v534
    %v2085 = vsel %vm2084, 1, 0
    %v2086 = vcvt.s32.f32 %v2085
    %v2087 = vadd.f32 %v2083, %v2086
    %vm2088 = vcmp.ge.f32.partialorder %v1967, %v542
    %v2089 = vsel %vm2088, 1, 0
    %v2090 = vcvt.s32.f32 %v2089
    %v2091 = vadd.f32 %v2087, %v2090
    %v2092 = vmul.f32 %v2091, %v551
    %v2093 = vadd.f32 %v2092, %v558
    %v2094 = vmul.f32 %v2093, %v1885
    %2096 = vrot.lane.b32.xlu0 %v2093, 64
    %v2097 = vpop.permute.xlu0 %2096
    %v2099 = vmul.f32 %v2093, %v2097
    %2101 = vrot.lane.b32.xlu0 %v2099, 32
    %v2102 = vpop.permute.xlu0 %2101
    %v2104 = vadd.f32 %v2094, %v2102
    %v2105 = vtanh.pop %v2104
    %2107 = vrot.lane.b32.xlu0 %v2105, 64
    %v2108 = vpop.permute.xlu0 %2107
    %v2110 = vmul.f32 %v2093, %v2108
    %v2111 = vld [vmem:[%s3] sm:$0xff]
    %v2112 = vld [vmem:[%s3 + $0x8] sm:$0xff]
    %v2113 = vld [vmem:[%s3 + $0x10] sm:$0xff]
    %v2114 = vld [vmem:[%s3 + $0x18] sm:$0xff]
    %v2115 = vld [vmem:[%s4] sm:$0x1]
    %v2117 = vlaneseq
    %v2118 = vshrl.u32 %v2117, 7
    %v2119 = vsub.s32 0, %v2118
    %v2120 = vrot.slane %v2115, %v2119
    %2123 = vrot.lane.b32.xlu0 %v2110, 32
    %v2124 = vpop.permute.xlu0 %2123
    %v2125 = vsel %vm224, %v2124, 0
    %2127 = vmatprep.subr.mxu0 0.0
    %2128 = vmatpush1.msra.mxu0 %v2111
    %2129 = vmatprep.subr.mxu0 0.0
    %2130 = vmatpush1.msra.mxu0 %v2112
    %2131 = vmatprep.subr.mxu0 0.0
    %2132 = vmatpush1.msra.mxu0 %v2113
    %2133 = vmatprep.subr.mxu0 0.0
    %2134 = vmatpush1.msra.mxu0 %v2114
    %2135 = vmatprep.subr.mxu0 0.0
    %2136 = vmatpush1.msra.mxu0 0.0
    %2137 = vmatprep.subr.mxu0 0.0
    %2138 = vmatpush1.msra.mxu0 0.0
    %2139 = vmatprep.subr.mxu0 0.0
    %2140 = vmatpush1.msra.mxu0 0.0
    %2141 = vmatprep.subr.mxu0 0.0
    %2142 = vmatpush1.msra.mxu0 0.0
    %2143 = vmatprep.subr.mxu0 0.0
    %2144 = vmatpush1.msra.mxu0 0.0
    %2145 = vmatprep.subr.mxu0 0.0
    %2146 = vmatpush1.msra.mxu0 0.0
    %2147 = vmatprep.subr.mxu0 0.0
    %2148 = vmatpush1.msra.mxu0 0.0
    %2149 = vmatprep.subr.mxu0 0.0
    %2150 = vmatpush1.msra.mxu0 0.0
    %2151 = vmatprep.subr.mxu0 0.0
    %2152 = vmatpush1.msra.mxu0 0.0
    %2153 = vmatprep.subr.mxu0 0.0
    %2154 = vmatpush1.msra.mxu0 0.0
    %2155 = vmatprep.subr.mxu0 0.0
    %2156 = vmatpush1.msra.mxu0 0.0
    %2157 = vmatprep.subr.mxu0 0.0
    %2158 = vmatpush1.msra.mxu0 0.0
    %2159 = vmatprep.subr.mxu0 0.0
    %2160 = vmatpush1.msra.mxu0 0.0
    %2161 = vmatprep.subr.mxu0 0.0
    %2162 = vmatpush1.msra.mxu0 0.0
    %2163 = vmatprep.subr.mxu0 0.0
    %2164 = vmatpush1.msra.mxu0 0.0
    %2165 = vmatprep.subr.mxu0 0.0
    %2166 = vmatpush1.msra.mxu0 0.0
    %2167 = vmatprep.subr.mxu0 0.0
    %2168 = vmatpush1.msra.mxu0 0.0
    %2169 = vmatprep.subr.mxu0 0.0
    %2170 = vmatpush1.msra.mxu0 0.0
    %2171 = vmatprep.subr.mxu0 0.0
    %2172 = vmatpush1.msra.mxu0 0.0
    %2173 = vmatprep.subr.mxu0 0.0
    %2174 = vmatpush1.msra.mxu0 0.0
    %2175 = vmatprep.subr.mxu0 0.0
    %2176 = vmatpush1.msra.mxu0 0.0
    %2177 = vmatprep.subr.mxu0 0.0
    %2178 = vmatpush1.msra.mxu0 0.0
    %2179 = vmatprep.subr.mxu0 0.0
    %2180 = vmatpush1.msra.mxu0 0.0
    %2181 = vmatprep.subr.mxu0 0.0
    %2182 = vmatpush1.msra.mxu0 0.0
    %2183 = vmatprep.subr.mxu0 0.0
    %2184 = vmatpush1.msra.mxu0 0.0
    %2185 = vmatprep.subr.mxu0 0.0
    %2186 = vmatpush1.msra.mxu0 0.0
    %2187 = vmatprep.subr.mxu0 0.0
    %2188 = vmatpush1.msra.mxu0 0.0
    %2189 = vmatprep.subr.mxu0 0.0
    %2190 = vmatpush1.msra.mxu0 0.0
    %2191 = vmatprep.mubr.f32.mxu0 0.0
    %2192 = vmatmul.mubr.f32.gmra.mrb[0].mxu0 %v2125
    %v2193 = vpop.f32.mrb[0].mxu0
    %v2194 = vadd.f32 %v2120, %v2193
    %v2195 = vpop.f32.mrb[0].mxu0
    %2196 = vdwg.mxu0
    %2197 = vst [vmem:[#allocation5] sm:$0xff] %v2194
    // Predicated region
    $region38: #{tpu_custom_call.1} parent=1 // pred_check
      _
    $region39: #{tpu_custom_call.1} parent=1 // pred_check_branch
      %2199 = sbr.rel (0) target = $region41
    $region40: #{tpu_custom_call.1} parent=1 // pred_region
      %s2201 = ssub.s32 128, 128
      %2202 = vsyncadd [#allocation4], %s2201
      %s2204 = sshll.u32 [#allocation5], 4
      %s2205 = int_to_ptr.vmem [resolvable:$true] %s2204
      %2207 = dma.vmem_to_hbm [thread:$0]  %s2205, 128, %s8, [#allocation4]
    $region41: #{tpu_custom_call.1} parent=1 // pred_fallthru
      _
    // Predicated region
    $region42: #{tpu_custom_call.1} parent=1 // pred_check
      _
    $region43: #{tpu_custom_call.1} parent=1 // pred_check_branch
      %2209 = sbr.rel (0) target = $region45
    $region44: #{tpu_custom_call.1} parent=1 // pred_region
      %2210 = dma.done [#allocation4], 128
    $region45: #{tpu_custom_call.1} parent=1 // pred_fallthru
      _
    %2211 = vsyncpa [#allocation3], 1
    %2212 = vsyncpa [#allocation4], 1

</llo_original>
